<compile_context>
chip_gen: v6e
topology: v6e:2x2x1
jax: 0.10.0
libtpu: 0.0.40
codegen_flags: <defaults>
</compile_context>

<pallas_src>
import functools

import jax
import jax.numpy as jnp
from jax.experimental import pallas as pl
from jax.experimental.pallas import tpu as pltpu


def _gcn_kernel(a_ref, h_ref, w_ref, b_ref, out_ref, *, tb, n_nodes):
    """One grid step = TB graph pairs (2*TB graphs), fully fused forward."""
    K = 2 * tb
    N = n_nodes

    a = a_ref[0]            # (K, N, N)  f32 per-graph normalized adjacencies
    x0 = h_ref[0]           # (K, N, FW) f32 node features (lane zero-padded)

    def propagate(x3):
        # y[k, n, :] = sum_m a[k, n, m] * x3[k, m, :]
        # Pure-VPU accumulation over the (static, small) N node columns: only
        # the useful K*N^2*FW MACs, no block-diagonal operand needed.
        acc = a[:, :, 0:1] * x3[:, 0:1, :]
        for m in range(1, N):
            acc = acc + a[:, :, m:m + 1] * x3[:, m:m + 1, :]
        return acc

    def dense(x2, w_idx, b_idx, relu=True):
        # bf16 MXU operands, f32 accumulate / bias / ReLU.
        y = jnp.dot(x2.astype(jnp.bfloat16), w_ref[w_idx],
                    preferred_element_type=jnp.float32)
        y = y + b_ref[b_idx:b_idx + 1, :]
        return jnp.maximum(y, 0.0) if relu else y

    # conv1 (reassociated to (A @ X) @ W1) then conv2; shared weights across
    # both graphs of every pair -- the packed slab runs them all at once.
    x = dense(propagate(x0).reshape(K * N, -1), 0, 0)                    # (M, FW)
    x = dense(propagate(x.reshape(K, N, -1)).reshape(K * N, -1), 1, 1)   # (M, FW)

    # dgl.mean_nodes: mean over the N node rows of each graph block.
    pooled = x.reshape(K, N, -1).sum(axis=1) * (1.0 / N)                 # (K, FW)
    hg1 = pooled[:tb]        # graph-1 embeddings of the TB pairs
    hg2 = pooled[tb:]        # graph-2 embeddings

    # classify1 on cat((hg1, hg2), dim=1): split-weight form (no lane concat).
    o = (jnp.dot(hg1.astype(jnp.bfloat16), w_ref[2],
                 preferred_element_type=jnp.float32)
         + jnp.dot(hg2.astype(jnp.bfloat16), w_ref[3],
                   preferred_element_type=jnp.float32)
         + b_ref[2:3, :])
    o = jnp.maximum(o, 0.0)
    o = dense(o, 4, 3)               # classify2
    o = dense(o, 5, 4)               # classify3
    o = dense(o, 6, 5, relu=False)   # classify4 (lanes >= n_classes stay 0)
    out_ref[...] = o.astype(out_ref.dtype)     # (TB, FW) lane/sublane-dense


def _pack_pairs(a1, h1, a2, h2, tb, fw):
    """Pad the batch to a multiple of TB and pack TB pairs per grid step:
    adjacencies as (G, 2*TB, N, N) raw blocks (no block-diagonal) and node
    features as (G, 2*TB, N, FW) zero lane-padded slabs."""
    B, N, _ = a1.shape
    in_dim = h1.shape[-1]
    G = -(-B // tb)
    b_pad = G * tb
    pad = b_pad - B
    if pad:
        a1 = jnp.pad(a1, ((0, pad), (0, 0), (0, 0)))
        a2 = jnp.pad(a2, ((0, pad), (0, 0), (0, 0)))
        h1 = jnp.pad(h1, ((0, pad), (0, 0), (0, 0)))
        h2 = jnp.pad(h2, ((0, pad), (0, 0), (0, 0)))
    # Per group: first TB blocks = graph 1 of each pair, next TB = graph 2.
    a_grp = jnp.concatenate(
        [a1.reshape(G, tb, N, N), a2.reshape(G, tb, N, N)], axis=1)
    h_grp = jnp.concatenate(
        [h1.reshape(G, tb, N, in_dim), h2.reshape(G, tb, N, in_dim)], axis=1)
    h_grp = jnp.pad(h_grp, ((0, 0), (0, 0), (0, 0), (0, fw - in_dim)))
    return a_grp.astype(jnp.float32), h_grp.astype(jnp.float32), G, b_pad


def gcnreg_binary_forward(a1, h1, a2, h2, params, *, tb=None):
    """Pallas forward for GCNReg_binary.

    a1, a2 : [B, N, N] normalized adjacencies (D^-1/2 (A+I) D^-1/2) of the pair.
    h1, h2 : [B, N, in_dim] node features.
    Returns [B, n_classes].
    """
    B, N, _ = a1.shape
    in_dim = h1.shape[-1]
    hidden = params["w1"].shape[1]
    n_classes = params["wc4"].shape[1]

    # Lane-padded feature width: every activation / weight lives in a dense
    # multiple-of-128-lane space (padded with exact zeros), so all stores are
    # unmasked and all weights fit one packed ref.
    fw = ((max(in_dim, 2 * hidden, n_classes) + 127) // 128) * 128

    if tb is None:
        # >= ~256 packed node rows per step (fills the v6e/v7x 256-wide MXU
        # tiles, amortizes the ~0.35us fixed step cost), multiple of 8,
        # capped at the rounded-up batch.
        tb = min(((B + 7) // 8) * 8,
                 max(8, ((pl.cdiv(256, 2 * N) + 7) // 8) * 8))

    a_grp, h_grp, G, b_pad = _pack_pairs(a1, h1, a2, h2, tb, fw)
    K = 2 * tb

    def pad_w(w):
        return jnp.zeros((fw, fw), jnp.float32).at[:w.shape[0], :w.shape[1]].set(w)

    def pad_b(b):
        return jnp.zeros((1, fw), jnp.float32).at[:, :b.shape[1]].set(b)

    # One packed bf16 weight ref:
    #   [w1, w2, wc1(hg1 half), wc1(hg2 half), wc2, wc3, wc4]
    wpack = jnp.stack([
        pad_w(params["w1"]), pad_w(params["w2"]),
        pad_w(params["wc1"][:hidden, :]), pad_w(params["wc1"][hidden:, :]),
        pad_w(params["wc2"]), pad_w(params["wc3"]), pad_w(params["wc4"]),
    ]).astype(jnp.bfloat16)

    # One packed f32 bias ref (8 rows for sublane alignment; last 2 unused).
    bpack = jnp.concatenate(
        [pad_b(params[k]) for k in ("b1", "b2", "bc1", "bc2", "bc3", "bc4")]
        + [jnp.zeros((2, fw), jnp.float32)], axis=0)

    kernel = functools.partial(_gcn_kernel, tb=tb, n_nodes=N)

    out = pl.pallas_call(
        kernel,
        out_shape=jax.ShapeDtypeStruct((b_pad, fw), jnp.float32),
        grid_spec=pltpu.PrefetchScalarGridSpec(
            num_scalar_prefetch=0,
            grid=(G,),
            in_specs=[
                pl.BlockSpec((1, K, N, N), lambda g: (g, 0, 0, 0)),   # adjacencies
                pl.BlockSpec((1, K, N, fw), lambda g: (g, 0, 0, 0)),  # features
                pl.BlockSpec((7, fw, fw), lambda g: (0, 0, 0)),       # packed weights
                pl.BlockSpec((8, fw), lambda g: (0, 0)),              # packed biases
            ],
            out_specs=pl.BlockSpec((tb, fw), lambda g: (g, 0)),
        ),
        compiler_params=pltpu.CompilerParams(
            dimension_semantics=("parallel",)),   # v7x dual-TC split over G
    )(a_grp, h_grp, wpack, bpack)

    return out[:B, :n_classes]


def reference_forward(a1, h1, a2, h2, params):
    """Pure-JAX f32 reference of the same math for a sanity check."""
    def gconv(a, h, w, b):
        return jax.nn.relu(jnp.einsum("bnm,bmf->bnf", a, h @ w) + b)

    g1 = gconv(a1, h1, params["w1"], params["b1"])
    g1 = gconv(a1, g1, params["w2"], params["b2"])
    g2 = gconv(a2, h2, params["w1"], params["b1"])
    g2 = gconv(a2, g2, params["w2"], params["b2"])
    hg = jnp.concatenate([g1.mean(axis=1), g2.mean(axis=1)], axis=1)
    o = jax.nn.relu(hg @ params["wc1"] + params["bc1"])
    o = jax.nn.relu(o @ params["wc2"] + params["bc2"])
    o = jax.nn.relu(o @ params["wc3"] + params["bc3"])
    return o @ params["wc4"] + params["bc4"]


def make_norm_adjacency(key, B, N):
    """Dense D^{-1/2} (A + I) D^{-1/2} from a random symmetric adjacency."""
    raw = jax.random.uniform(key, (B, N, N))
    adj = (raw + jnp.swapaxes(raw, 1, 2)) > 1.0
    adj = adj.astype(jnp.float32) + jnp.eye(N, dtype=jnp.float32)[None]
    deg = adj.sum(axis=-1)
    dinv = 1.0 / jnp.sqrt(deg)
    return adj * dinv[:, :, None] * dinv[:, None, :]


if __name__ == "__main__":
    B = 20         # pairs of graphs (padded to a multiple of TB in the wrapper)
    N = 8          # nodes per graph
    in_dim = 16
    hidden = 32
    n_classes = 2  # binary classifier head

    key = jax.random.PRNGKey(0)
    ks = jax.random.split(key, 20)

    h1 = jax.random.normal(ks[0], (B, N, in_dim), jnp.float32)
    h2 = jax.random.normal(ks[1], (B, N, in_dim), jnp.float32)
    a1 = make_norm_adjacency(ks[2], B, N)
    a2 = make_norm_adjacency(ks[3], B, N)

    def init_w(k, shape, fan_in):
        return jax.random.normal(k, shape, jnp.float32) / jnp.sqrt(fan_in)

    params = {
        # GraphConv weights (in_feats, out_feats) and bias
        "w1": init_w(ks[4], (in_dim, hidden), in_dim),
        "b1": init_w(ks[5], (1, hidden), hidden),
        "w2": init_w(ks[6], (hidden, hidden), hidden),
        "b2": init_w(ks[7], (1, hidden), hidden),
        # Linear heads stored as (in, out) so forward is x @ W + b
        "wc1": init_w(ks[8], (2 * hidden, 2 * hidden), 2 * hidden),
        "bc1": init_w(ks[9], (1, 2 * hidden), 2 * hidden),
        "wc2": init_w(ks[10], (2 * hidden, hidden), 2 * hidden),
        "bc2": init_w(ks[11], (1, hidden), hidden),
        "wc3": init_w(ks[12], (hidden, hidden), hidden),
        "bc3": init_w(ks[13], (1, hidden), hidden),
        "wc4": init_w(ks[14], (hidden, n_classes), hidden),
        "bc4": init_w(ks[15], (1, n_classes), n_classes),
    }

    out = gcnreg_binary_forward(a1, h1, a2, h2, params)
    out = jax.block_until_ready(out)

    ref = reference_forward(a1, h1, a2, h2, params)
    assert out.shape == (B, n_classes)
    # Tolerance widened for bf16 MXU operands + (A@X)@W reassociation.
    assert jnp.allclose(out, ref, atol=5e-2, rtol=5e-2), (
        float(jnp.max(jnp.abs(out - ref))), out, ref)

    # TODO(synk): saliency=True branch (gradient of output w.r.t. node features)
    # is a backward pass, not part of the forward kernel.
    print("KERNEL_OK")
</pallas_src>

<mosaic_0001>
module attributes {stable_mosaic.version = 11 : i64} {
  func.func @_gcn_kernel(%arg0: i32, %arg1: memref<1x32x8x8xf32, #tpu.memory_space<vmem>>, %arg2: memref<1x32x8x128xf32, #tpu.memory_space<vmem>>, %arg3: memref<7x128x128xbf16, #tpu.memory_space<vmem>>, %arg4: memref<8x128xf32, #tpu.memory_space<vmem>>, %arg5: memref<16x128xf32, #tpu.memory_space<vmem>>) attributes {dimension_semantics = [#tpu.dimension_semantics<parallel>], iteration_bounds = array<i64: 2>, scalar_prefetch = 0 : i64, scratch_operands = 0 : i64, tpu.core_type = #tpu.core_type<tc>, window_params = [{transform_indices = @transform_0, window_bounds = array<i64: 1, 32, 8, 8>}, {transform_indices = @transform_1, window_bounds = array<i64: 1, 32, 8, 128>}, {pipeline_mode = #tpu.pipeline_mode<synchronous>, transform_indices = @transform_2, window_bounds = array<i64: 7, 128, 128>}, {pipeline_mode = #tpu.pipeline_mode<synchronous>, transform_indices = @transform_3, window_bounds = array<i64: 8, 128>}, {transform_indices = @transform_4, window_bounds = array<i64: 16, 128>}]} {
    %c0 = arith.constant 0 : index
    %c0_0 = arith.constant 0 : index
    %c0_1 = arith.constant 0 : index
    %c0_2 = arith.constant 0 : index
    %0 = vector.load %arg1[%c0, %c0_0, %c0_1, %c0_2] : memref<1x32x8x8xf32, #tpu.memory_space<vmem>>, vector<1x32x8x8xf32>
    %1 = vector.shape_cast %0 : vector<1x32x8x8xf32> to vector<32x8x8xf32>
    %c0_3 = arith.constant 0 : index
    %c0_4 = arith.constant 0 : index
    %c0_5 = arith.constant 0 : index
    %c0_6 = arith.constant 0 : index
    %2 = vector.load %arg2[%c0_3, %c0_4, %c0_5, %c0_6] : memref<1x32x8x128xf32, #tpu.memory_space<vmem>>, vector<1x32x8x128xf32>
    %3 = vector.shape_cast %2 : vector<1x32x8x128xf32> to vector<32x8x128xf32>
    %4 = vector.extract_strided_slice %1 {offsets = [0, 0, 0], sizes = [32, 8, 1], strides = [1, 1, 1]} : vector<32x8x8xf32> to vector<32x8x1xf32>
    %5 = vector.extract_strided_slice %3 {offsets = [0, 0, 0], sizes = [32, 1, 128], strides = [1, 1, 1]} : vector<32x8x128xf32> to vector<32x1x128xf32>
    %6 = vector.broadcast %4 : vector<32x8x1xf32> to vector<32x8x128xf32>
    %7 = vector.broadcast %5 : vector<32x1x128xf32> to vector<32x8x128xf32>
    %8 = arith.mulf %6, %7 : vector<32x8x128xf32>
    %9 = vector.extract_strided_slice %1 {offsets = [0, 0, 1], sizes = [32, 8, 1], strides = [1, 1, 1]} : vector<32x8x8xf32> to vector<32x8x1xf32>
    %10 = vector.extract_strided_slice %3 {offsets = [0, 1, 0], sizes = [32, 1, 128], strides = [1, 1, 1]} : vector<32x8x128xf32> to vector<32x1x128xf32>
    %11 = vector.broadcast %9 : vector<32x8x1xf32> to vector<32x8x128xf32>
    %12 = vector.broadcast %10 : vector<32x1x128xf32> to vector<32x8x128xf32>
    %13 = arith.mulf %11, %12 : vector<32x8x128xf32>
    %14 = arith.addf %8, %13 : vector<32x8x128xf32>
    %15 = vector.extract_strided_slice %1 {offsets = [0, 0, 2], sizes = [32, 8, 1], strides = [1, 1, 1]} : vector<32x8x8xf32> to vector<32x8x1xf32>
    %16 = vector.extract_strided_slice %3 {offsets = [0, 2, 0], sizes = [32, 1, 128], strides = [1, 1, 1]} : vector<32x8x128xf32> to vector<32x1x128xf32>
    %17 = vector.broadcast %15 : vector<32x8x1xf32> to vector<32x8x128xf32>
    %18 = vector.broadcast %16 : vector<32x1x128xf32> to vector<32x8x128xf32>
    %19 = arith.mulf %17, %18 : vector<32x8x128xf32>
    %20 = arith.addf %14, %19 : vector<32x8x128xf32>
    %21 = vector.extract_strided_slice %1 {offsets = [0, 0, 3], sizes = [32, 8, 1], strides = [1, 1, 1]} : vector<32x8x8xf32> to vector<32x8x1xf32>
    %22 = vector.extract_strided_slice %3 {offsets = [0, 3, 0], sizes = [32, 1, 128], strides = [1, 1, 1]} : vector<32x8x128xf32> to vector<32x1x128xf32>
    %23 = vector.broadcast %21 : vector<32x8x1xf32> to vector<32x8x128xf32>
    %24 = vector.broadcast %22 : vector<32x1x128xf32> to vector<32x8x128xf32>
    %25 = arith.mulf %23, %24 : vector<32x8x128xf32>
    %26 = arith.addf %20, %25 : vector<32x8x128xf32>
    %27 = vector.extract_strided_slice %1 {offsets = [0, 0, 4], sizes = [32, 8, 1], strides = [1, 1, 1]} : vector<32x8x8xf32> to vector<32x8x1xf32>
    %28 = vector.extract_strided_slice %3 {offsets = [0, 4, 0], sizes = [32, 1, 128], strides = [1, 1, 1]} : vector<32x8x128xf32> to vector<32x1x128xf32>
    %29 = vector.broadcast %27 : vector<32x8x1xf32> to vector<32x8x128xf32>
    %30 = vector.broadcast %28 : vector<32x1x128xf32> to vector<32x8x128xf32>
    %31 = arith.mulf %29, %30 : vector<32x8x128xf32>
    %32 = arith.addf %26, %31 : vector<32x8x128xf32>
    %33 = vector.extract_strided_slice %1 {offsets = [0, 0, 5], sizes = [32, 8, 1], strides = [1, 1, 1]} : vector<32x8x8xf32> to vector<32x8x1xf32>
    %34 = vector.extract_strided_slice %3 {offsets = [0, 5, 0], sizes = [32, 1, 128], strides = [1, 1, 1]} : vector<32x8x128xf32> to vector<32x1x128xf32>
    %35 = vector.broadcast %33 : vector<32x8x1xf32> to vector<32x8x128xf32>
    %36 = vector.broadcast %34 : vector<32x1x128xf32> to vector<32x8x128xf32>
    %37 = arith.mulf %35, %36 : vector<32x8x128xf32>
    %38 = arith.addf %32, %37 : vector<32x8x128xf32>
    %39 = vector.extract_strided_slice %1 {offsets = [0, 0, 6], sizes = [32, 8, 1], strides = [1, 1, 1]} : vector<32x8x8xf32> to vector<32x8x1xf32>
    %40 = vector.extract_strided_slice %3 {offsets = [0, 6, 0], sizes = [32, 1, 128], strides = [1, 1, 1]} : vector<32x8x128xf32> to vector<32x1x128xf32>
    %41 = vector.broadcast %39 : vector<32x8x1xf32> to vector<32x8x128xf32>
    %42 = vector.broadcast %40 : vector<32x1x128xf32> to vector<32x8x128xf32>
    %43 = arith.mulf %41, %42 : vector<32x8x128xf32>
    %44 = arith.addf %38, %43 : vector<32x8x128xf32>
    %45 = vector.extract_strided_slice %1 {offsets = [0, 0, 7], sizes = [32, 8, 1], strides = [1, 1, 1]} : vector<32x8x8xf32> to vector<32x8x1xf32>
    %46 = vector.extract_strided_slice %3 {offsets = [0, 7, 0], sizes = [32, 1, 128], strides = [1, 1, 1]} : vector<32x8x128xf32> to vector<32x1x128xf32>
    %47 = vector.broadcast %45 : vector<32x8x1xf32> to vector<32x8x128xf32>
    %48 = vector.broadcast %46 : vector<32x1x128xf32> to vector<32x8x128xf32>
    %49 = arith.mulf %47, %48 : vector<32x8x128xf32>
    %50 = arith.addf %44, %49 : vector<32x8x128xf32>
    %51 = vector.shape_cast %50 : vector<32x8x128xf32> to vector<256x128xf32>
    %52 = arith.truncf %51 : vector<256x128xf32> to vector<256x128xbf16>
    %c0_7 = arith.constant 0 : index
    %c0_8 = arith.constant 0 : index
    %c0_9 = arith.constant 0 : index
    %53 = vector.load %arg3[%c0_7, %c0_8, %c0_9] : memref<7x128x128xbf16, #tpu.memory_space<vmem>>, vector<1x128x128xbf16>
    %54 = vector.shape_cast %53 : vector<1x128x128xbf16> to vector<128x128xbf16>
    %cst = arith.constant dense<0.000000e+00> : vector<256x128xf32>
    %55 = tpu.matmul %52, %54, %cst {dimension_numbers = #tpu.dot_dimension_numbers<[1], [0], [0], [1], [0, 0, 1, 1], [], []>} : vector<256x128xbf16>, vector<128x128xbf16>, vector<256x128xf32> -> vector<256x128xf32>
    %c0_10 = arith.constant 0 : index
    %c0_11 = arith.constant 0 : index
    %56 = vector.load %arg4[%c0_10, %c0_11] : memref<8x128xf32, #tpu.memory_space<vmem>>, vector<1x128xf32>
    %57 = vector.broadcast %56 : vector<1x128xf32> to vector<256x128xf32>
    %58 = arith.addf %55, %57 : vector<256x128xf32>
    %cst_12 = arith.constant 0.000000e+00 : f32
    %59 = vector.broadcast %cst_12 : f32 to vector<256x128xf32>
    %60 = arith.maximumf %58, %59 : vector<256x128xf32>
    %61 = vector.shape_cast %60 : vector<256x128xf32> to vector<32x8x128xf32>
    %62 = vector.extract_strided_slice %1 {offsets = [0, 0, 0], sizes = [32, 8, 1], strides = [1, 1, 1]} : vector<32x8x8xf32> to vector<32x8x1xf32>
    %63 = vector.extract_strided_slice %61 {offsets = [0, 0, 0], sizes = [32, 1, 128], strides = [1, 1, 1]} : vector<32x8x128xf32> to vector<32x1x128xf32>
    %64 = vector.broadcast %62 : vector<32x8x1xf32> to vector<32x8x128xf32>
    %65 = vector.broadcast %63 : vector<32x1x128xf32> to vector<32x8x128xf32>
    %66 = arith.mulf %64, %65 : vector<32x8x128xf32>
    %67 = vector.extract_strided_slice %1 {offsets = [0, 0, 1], sizes = [32, 8, 1], strides = [1, 1, 1]} : vector<32x8x8xf32> to vector<32x8x1xf32>
    %68 = vector.extract_strided_slice %61 {offsets = [0, 1, 0], sizes = [32, 1, 128], strides = [1, 1, 1]} : vector<32x8x128xf32> to vector<32x1x128xf32>
    %69 = vector.broadcast %67 : vector<32x8x1xf32> to vector<32x8x128xf32>
    %70 = vector.broadcast %68 : vector<32x1x128xf32> to vector<32x8x128xf32>
    %71 = arith.mulf %69, %70 : vector<32x8x128xf32>
    %72 = arith.addf %66, %71 : vector<32x8x128xf32>
    %73 = vector.extract_strided_slice %1 {offsets = [0, 0, 2], sizes = [32, 8, 1], strides = [1, 1, 1]} : vector<32x8x8xf32> to vector<32x8x1xf32>
    %74 = vector.extract_strided_slice %61 {offsets = [0, 2, 0], sizes = [32, 1, 128], strides = [1, 1, 1]} : vector<32x8x128xf32> to vector<32x1x128xf32>
    %75 = vector.broadcast %73 : vector<32x8x1xf32> to vector<32x8x128xf32>
    %76 = vector.broadcast %74 : vector<32x1x128xf32> to vector<32x8x128xf32>
    %77 = arith.mulf %75, %76 : vector<32x8x128xf32>
    %78 = arith.addf %72, %77 : vector<32x8x128xf32>
    %79 = vector.extract_strided_slice %1 {offsets = [0, 0, 3], sizes = [32, 8, 1], strides = [1, 1, 1]} : vector<32x8x8xf32> to vector<32x8x1xf32>
    %80 = vector.extract_strided_slice %61 {offsets = [0, 3, 0], sizes = [32, 1, 128], strides = [1, 1, 1]} : vector<32x8x128xf32> to vector<32x1x128xf32>
    %81 = vector.broadcast %79 : vector<32x8x1xf32> to vector<32x8x128xf32>
    %82 = vector.broadcast %80 : vector<32x1x128xf32> to vector<32x8x128xf32>
    %83 = arith.mulf %81, %82 : vector<32x8x128xf32>
    %84 = arith.addf %78, %83 : vector<32x8x128xf32>
    %85 = vector.extract_strided_slice %1 {offsets = [0, 0, 4], sizes = [32, 8, 1], strides = [1, 1, 1]} : vector<32x8x8xf32> to vector<32x8x1xf32>
    %86 = vector.extract_strided_slice %61 {offsets = [0, 4, 0], sizes = [32, 1, 128], strides = [1, 1, 1]} : vector<32x8x128xf32> to vector<32x1x128xf32>
    %87 = vector.broadcast %85 : vector<32x8x1xf32> to vector<32x8x128xf32>
    %88 = vector.broadcast %86 : vector<32x1x128xf32> to vector<32x8x128xf32>
    %89 = arith.mulf %87, %88 : vector<32x8x128xf32>
    %90 = arith.addf %84, %89 : vector<32x8x128xf32>
    %91 = vector.extract_strided_slice %1 {offsets = [0, 0, 5], sizes = [32, 8, 1], strides = [1, 1, 1]} : vector<32x8x8xf32> to vector<32x8x1xf32>
    %92 = vector.extract_strided_slice %61 {offsets = [0, 5, 0], sizes = [32, 1, 128], strides = [1, 1, 1]} : vector<32x8x128xf32> to vector<32x1x128xf32>
    %93 = vector.broadcast %91 : vector<32x8x1xf32> to vector<32x8x128xf32>
    %94 = vector.broadcast %92 : vector<32x1x128xf32> to vector<32x8x128xf32>
    %95 = arith.mulf %93, %94 : vector<32x8x128xf32>
    %96 = arith.addf %90, %95 : vector<32x8x128xf32>
    %97 = vector.extract_strided_slice %1 {offsets = [0, 0, 6], sizes = [32, 8, 1], strides = [1, 1, 1]} : vector<32x8x8xf32> to vector<32x8x1xf32>
    %98 = vector.extract_strided_slice %61 {offsets = [0, 6, 0], sizes = [32, 1, 128], strides = [1, 1, 1]} : vector<32x8x128xf32> to vector<32x1x128xf32>
    %99 = vector.broadcast %97 : vector<32x8x1xf32> to vector<32x8x128xf32>
    %100 = vector.broadcast %98 : vector<32x1x128xf32> to vector<32x8x128xf32>
    %101 = arith.mulf %99, %100 : vector<32x8x128xf32>
    %102 = arith.addf %96, %101 : vector<32x8x128xf32>
    %103 = vector.extract_strided_slice %1 {offsets = [0, 0, 7], sizes = [32, 8, 1], strides = [1, 1, 1]} : vector<32x8x8xf32> to vector<32x8x1xf32>
    %104 = vector.extract_strided_slice %61 {offsets = [0, 7, 0], sizes = [32, 1, 128], strides = [1, 1, 1]} : vector<32x8x128xf32> to vector<32x1x128xf32>
    %105 = vector.broadcast %103 : vector<32x8x1xf32> to vector<32x8x128xf32>
    %106 = vector.broadcast %104 : vector<32x1x128xf32> to vector<32x8x128xf32>
    %107 = arith.mulf %105, %106 : vector<32x8x128xf32>
    %108 = arith.addf %102, %107 : vector<32x8x128xf32>
    %109 = vector.shape_cast %108 : vector<32x8x128xf32> to vector<256x128xf32>
    %110 = arith.truncf %109 : vector<256x128xf32> to vector<256x128xbf16>
    %c1 = arith.constant 1 : index
    %c0_13 = arith.constant 0 : index
    %c0_14 = arith.constant 0 : index
    %111 = vector.load %arg3[%c1, %c0_13, %c0_14] : memref<7x128x128xbf16, #tpu.memory_space<vmem>>, vector<1x128x128xbf16>
    %112 = vector.shape_cast %111 : vector<1x128x128xbf16> to vector<128x128xbf16>
    %cst_15 = arith.constant dense<0.000000e+00> : vector<256x128xf32>
    %113 = tpu.matmul %110, %112, %cst_15 {dimension_numbers = #tpu.dot_dimension_numbers<[1], [0], [0], [1], [0, 0, 1, 1], [], []>} : vector<256x128xbf16>, vector<128x128xbf16>, vector<256x128xf32> -> vector<256x128xf32>
    %c1_16 = arith.constant 1 : index
    %c0_17 = arith.constant 0 : index
    %114 = vector.load %arg4[%c1_16, %c0_17] : memref<8x128xf32, #tpu.memory_space<vmem>>, vector<1x128xf32>
    %115 = vector.broadcast %114 : vector<1x128xf32> to vector<256x128xf32>
    %116 = arith.addf %113, %115 : vector<256x128xf32>
    %cst_18 = arith.constant 0.000000e+00 : f32
    %117 = vector.broadcast %cst_18 : f32 to vector<256x128xf32>
    %118 = arith.maximumf %116, %117 : vector<256x128xf32>
    %119 = vector.shape_cast %118 : vector<256x128xf32> to vector<32x8x128xf32>
    %cst_19 = arith.constant dense<0.000000e+00> : vector<32x128xf32>
    %120 = vector.multi_reduction <add>, %119, %cst_19 [1] : vector<32x8x128xf32> to vector<32x128xf32>
    %cst_20 = arith.constant 1.250000e-01 : f32
    %121 = vector.broadcast %cst_20 : f32 to vector<32x128xf32>
    %122 = arith.mulf %120, %121 : vector<32x128xf32>
    %123 = vector.extract_strided_slice %122 {offsets = [0, 0], sizes = [16, 128], strides = [1, 1]} : vector<32x128xf32> to vector<16x128xf32>
    %124 = vector.extract_strided_slice %122 {offsets = [16, 0], sizes = [16, 128], strides = [1, 1]} : vector<32x128xf32> to vector<16x128xf32>
    %125 = arith.truncf %123 : vector<16x128xf32> to vector<16x128xbf16>
    %c2 = arith.constant 2 : index
    %c0_21 = arith.constant 0 : index
    %c0_22 = arith.constant 0 : index
    %126 = vector.load %arg3[%c2, %c0_21, %c0_22] : memref<7x128x128xbf16, #tpu.memory_space<vmem>>, vector<1x128x128xbf16>
    %127 = vector.shape_cast %126 : vector<1x128x128xbf16> to vector<128x128xbf16>
    %cst_23 = arith.constant dense<0.000000e+00> : vector<16x128xf32>
    %128 = tpu.matmul %125, %127, %cst_23 {dimension_numbers = #tpu.dot_dimension_numbers<[1], [0], [0], [1], [0, 0, 1, 1], [], []>} : vector<16x128xbf16>, vector<128x128xbf16>, vector<16x128xf32> -> vector<16x128xf32>
    %129 = arith.truncf %124 : vector<16x128xf32> to vector<16x128xbf16>
    %c3 = arith.constant 3 : index
    %c0_24 = arith.constant 0 : index
    %c0_25 = arith.constant 0 : index
    %130 = vector.load %arg3[%c3, %c0_24, %c0_25] : memref<7x128x128xbf16, #tpu.memory_space<vmem>>, vector<1x128x128xbf16>
    %131 = vector.shape_cast %130 : vector<1x128x128xbf16> to vector<128x128xbf16>
    %cst_26 = arith.constant dense<0.000000e+00> : vector<16x128xf32>
    %132 = tpu.matmul %129, %131, %cst_26 {dimension_numbers = #tpu.dot_dimension_numbers<[1], [0], [0], [1], [0, 0, 1, 1], [], []>} : vector<16x128xbf16>, vector<128x128xbf16>, vector<16x128xf32> -> vector<16x128xf32>
    %133 = arith.addf %128, %132 : vector<16x128xf32>
    %c2_27 = arith.constant 2 : index
    %c0_28 = arith.constant 0 : index
    %134 = vector.load %arg4[%c2_27, %c0_28] : memref<8x128xf32, #tpu.memory_space<vmem>>, vector<1x128xf32>
    %135 = vector.broadcast %134 : vector<1x128xf32> to vector<16x128xf32>
    %136 = arith.addf %133, %135 : vector<16x128xf32>
    %cst_29 = arith.constant 0.000000e+00 : f32
    %137 = vector.broadcast %cst_29 : f32 to vector<16x128xf32>
    %138 = arith.maximumf %136, %137 : vector<16x128xf32>
    %139 = arith.truncf %138 : vector<16x128xf32> to vector<16x128xbf16>
    %c4 = arith.constant 4 : index
    %c0_30 = arith.constant 0 : index
    %c0_31 = arith.constant 0 : index
    %140 = vector.load %arg3[%c4, %c0_30, %c0_31] : memref<7x128x128xbf16, #tpu.memory_space<vmem>>, vector<1x128x128xbf16>
    %141 = vector.shape_cast %140 : vector<1x128x128xbf16> to vector<128x128xbf16>
    %cst_32 = arith.constant dense<0.000000e+00> : vector<16x128xf32>
    %142 = tpu.matmul %139, %141, %cst_32 {dimension_numbers = #tpu.dot_dimension_numbers<[1], [0], [0], [1], [0, 0, 1, 1], [], []>} : vector<16x128xbf16>, vector<128x128xbf16>, vector<16x128xf32> -> vector<16x128xf32>
    %c3_33 = arith.constant 3 : index
    %c0_34 = arith.constant 0 : index
    %143 = vector.load %arg4[%c3_33, %c0_34] : memref<8x128xf32, #tpu.memory_space<vmem>>, vector<1x128xf32>
    %144 = vector.broadcast %143 : vector<1x128xf32> to vector<16x128xf32>
    %145 = arith.addf %142, %144 : vector<16x128xf32>
    %cst_35 = arith.constant 0.000000e+00 : f32
    %146 = vector.broadcast %cst_35 : f32 to vector<16x128xf32>
    %147 = arith.maximumf %145, %146 : vector<16x128xf32>
    %148 = arith.truncf %147 : vector<16x128xf32> to vector<16x128xbf16>
    %c5 = arith.constant 5 : index
    %c0_36 = arith.constant 0 : index
    %c0_37 = arith.constant 0 : index
    %149 = vector.load %arg3[%c5, %c0_36, %c0_37] : memref<7x128x128xbf16, #tpu.memory_space<vmem>>, vector<1x128x128xbf16>
    %150 = vector.shape_cast %149 : vector<1x128x128xbf16> to vector<128x128xbf16>
    %cst_38 = arith.constant dense<0.000000e+00> : vector<16x128xf32>
    %151 = tpu.matmul %148, %150, %cst_38 {dimension_numbers = #tpu.dot_dimension_numbers<[1], [0], [0], [1], [0, 0, 1, 1], [], []>} : vector<16x128xbf16>, vector<128x128xbf16>, vector<16x128xf32> -> vector<16x128xf32>
    %c4_39 = arith.constant 4 : index
    %c0_40 = arith.constant 0 : index
    %152 = vector.load %arg4[%c4_39, %c0_40] : memref<8x128xf32, #tpu.memory_space<vmem>>, vector<1x128xf32>
    %153 = vector.broadcast %152 : vector<1x128xf32> to vector<16x128xf32>
    %154 = arith.addf %151, %153 : vector<16x128xf32>
    %cst_41 = arith.constant 0.000000e+00 : f32
    %155 = vector.broadcast %cst_41 : f32 to vector<16x128xf32>
    %156 = arith.maximumf %154, %155 : vector<16x128xf32>
    %157 = arith.truncf %156 : vector<16x128xf32> to vector<16x128xbf16>
    %c6 = arith.constant 6 : index
    %c0_42 = arith.constant 0 : index
    %c0_43 = arith.constant 0 : index
    %158 = vector.load %arg3[%c6, %c0_42, %c0_43] : memref<7x128x128xbf16, #tpu.memory_space<vmem>>, vector<1x128x128xbf16>
    %159 = vector.shape_cast %158 : vector<1x128x128xbf16> to vector<128x128xbf16>
    %cst_44 = arith.constant dense<0.000000e+00> : vector<16x128xf32>
    %160 = tpu.matmul %157, %159, %cst_44 {dimension_numbers = #tpu.dot_dimension_numbers<[1], [0], [0], [1], [0, 0, 1, 1], [], []>} : vector<16x128xbf16>, vector<128x128xbf16>, vector<16x128xf32> -> vector<16x128xf32>
    %c5_45 = arith.constant 5 : index
    %c0_46 = arith.constant 0 : index
    %161 = vector.load %arg4[%c5_45, %c0_46] : memref<8x128xf32, #tpu.memory_space<vmem>>, vector<1x128xf32>
    %162 = vector.broadcast %161 : vector<1x128xf32> to vector<16x128xf32>
    %163 = arith.addf %160, %162 : vector<16x128xf32>
    %c0_47 = arith.constant 0 : index
    %c0_48 = arith.constant 0 : index
    %164 = vector.load %arg5[%c0_47, %c0_48] : memref<16x128xf32, #tpu.memory_space<vmem>>, vector<16x128xf32>
    tpu.vector_store %arg5[%c0_47, %c0_48], %163 {strides = array<i32>} : memref<16x128xf32, #tpu.memory_space<vmem>>, vector<16x128xf32>,
    return
  }
  func.func @transform_0(%arg0: i32) -> (i32, i32, i32, i32) {
    %c0_i32 = arith.constant 0 : i32
    %c0_i32_0 = arith.constant 0 : i32
    %c0_i32_1 = arith.constant 0 : i32
    %c0_i32_2 = arith.constant 0 : i32
    return %arg0, %c0_i32, %c0_i32_0, %c0_i32_1 : i32, i32, i32, i32
  }
  func.func @transform_1(%arg0: i32) -> (i32, i32, i32, i32) {
    %c0_i32 = arith.constant 0 : i32
    %c0_i32_0 = arith.constant 0 : i32
    %c0_i32_1 = arith.constant 0 : i32
    %c0_i32_2 = arith.constant 0 : i32
    return %arg0, %c0_i32, %c0_i32_0, %c0_i32_1 : i32, i32, i32, i32
  }
  func.func @transform_2(%arg0: i32) -> (i32, i32, i32) {
    %c0_i32 = arith.constant 0 : i32
    %c0_i32_0 = arith.constant 0 : i32
    %c0_i32_1 = arith.constant 0 : i32
    %c0_i32_2 = arith.constant 0 : i32
    return %c0_i32, %c0_i32_0, %c0_i32_1 : i32, i32, i32
  }
  func.func @transform_3(%arg0: i32) -> (i32, i32) {
    %c0_i32 = arith.constant 0 : i32
    %c0_i32_0 = arith.constant 0 : i32
    %c0_i32_1 = arith.constant 0 : i32
    return %c0_i32, %c0_i32_0 : i32, i32
  }
  func.func @transform_4(%arg0: i32) -> (i32, i32) {
    %c0_i32 = arith.constant 0 : i32
    %c0_i32_0 = arith.constant 0 : i32
    return %arg0, %c0_i32 : i32, i32
  }
}

</mosaic_0001>

<llo_original>
// kernel: tpu_custom_call.1
$region0: #{tpu_custom_call.1}
  #allocation0 [shape = 'u32[]', space=smem, size = 0x4, offset = 0x4, fixed_abs, tag = 'smem constant byte address 0x4 - core index']
  #allocation1 [shape = 'u32[144,128]{1,0:T(1,128)}', space=vmem, size = 0x12000, scoped, tag = 'internal scratch']
  %s0 = inlined_call_operand.vmem [shape: f32[2,32,8,8], index: 0, kind: input, shape index: {}]
  %s1 = inlined_call_operand.vmem [shape: f32[2,32,8,128], index: 1, kind: input, shape index: {}]
  %s2 = inlined_call_operand.hbm [shape: bf16[7,128,128], index: 2, kind: input, shape index: {}]
  %s3 = inlined_call_operand.vmem [shape: f32[8,128], index: 3, kind: input, shape index: {}]
  %s4 = inlined_call_operand.hbm [shape: f32[32,128], index: 4, kind: output, shape index: {}]
  %s5 = sld [smem:[#allocation0]]
  $region53: #{tpu_custom_call.1} parent=0
    _
  %s7 = ssub.s32 1, %s5
  %s8 = scalar_select 0, %s7, %s5
  $region1: #{tpu_custom_call.1} parent=0
    #allocation2 [shape = 'u8[229376]{0}', space=vmem, size = 0x38000, scoped, tag = 'input window, operand 2, single buffered']
    #allocation3 [shape = 's32[2]{0}', space=sflag, size = 0x8, scoped, tag = 'scoped memory for tpu_custom_call.1']
    #allocation4 [shape = 's32[2]{0}', space=sflag, size = 0x8, scoped, tag = 'scoped memory for tpu_custom_call.1']
    #allocation5 [shape = 'u8[16384]{0}', space=vmem, size = 0x4000, scoped, tag = 'output window, operand 0']
    %9 = vsyncpa [#allocation3], 0
    %10 = vsyncpa [#allocation4], 0
    %s11 = scalar_lea.sflag [#allocation4], 1
    %12 = vsyncpa %s11, 0
    loop: start=0, step=1, limit=4
    $region2: #{tpu_custom_call.1} parent=1 // loop_pre_header
      _
    $region3: #{tpu_custom_call.1} parent=1 // loop_header
      %s14 = sphi 0, %s18
      %p15 = scmp.ge.s32.totalorder %s14, 4
      %s24 = sphi 0, %s26
      %s27 = sphi 0, %s24
      %s28 = sphi 0, %s27
      %s44 = sphi 0, %s28
      %s50 = sphi 0, %s52
      %s53 = sphi 0, %s50
      %s54 = sphi 0, %s53
      %s70 = sphi 0, %s54
      %s74 = sphi 0, %s74
      %s76 = sphi 0, %s74
      %s77 = sphi 0, %s76
      %s91 = sphi 0, %s77
      %s95 = sphi 0, %s95
      %s97 = sphi 0, %s95
      %s98 = sphi 0, %s97
      %s112 = sphi 0, %s98
      %s118 = sphi 0, %s120
      %s121 = sphi 0, %s118
      %s122 = sphi 0, %s121
      %s138 = sphi 0, %s122
    $region4: #{tpu_custom_call.1} parent=1 // loop_header_branch
      %17 = sbr.rel (%p15) target = $region8
    $region5: #{tpu_custom_call.1} parent=1 // loop_body
      %s19 = ssub.s32 %s14, 1
      %s20 = ssub.s32 %s14, 2
      %s21 = sadd.s32 %s14, 1
      %s22 = ssub.s32 %s14, %s21
      %p23 = scmp.eq.s32.totalorder %s22, 0
      %s25 = sadd.s32 %s24, 1
      %s26 = scalar_select %p23, %s24, %s25
      %p29 = pneg %p23
      %p30 = scmp.eq.s32.totalorder %s14, 1
      %p31 = por %p29, %p30
      %p32 = scmp.ne.s32.totalorder %s24, %s27
      %p33 = scmp.eq.s32.totalorder %s14, 0
      %p34 = por %p32, %p33
      %p35 = scmp.ne.s32.totalorder %s24, %s27
      %p36 = scmp.eq.s32.totalorder %s19, 1
      %p37 = por %p35, %p36
      %p38 = scmp.ne.s32.totalorder %s27, %s28
      %p39 = scmp.eq.s32.totalorder %s19, 0
      %p40 = por %p38, %p39
      %p41 = scmp.ne.s32.totalorder %s27, %s28
      %p42 = scmp.eq.s32.totalorder %s20, 1
      %p43 = por %p41, %p42
      %p45 = scmp.ne.s32.totalorder %s28, %s44
      %p46 = scmp.eq.s32.totalorder %s20, 0
      %p47 = por %p45, %p46
      %s48 = ssub.s32 %s14, %s21
      %p49 = scmp.eq.s32.totalorder %s48, 0
      %s51 = sadd.s32 %s50, 1
      %s52 = scalar_select %p49, %s50, %s51
      %p55 = pneg %p49
      %p56 = scmp.eq.s32.totalorder %s14, 1
      %p57 = por %p55, %p56
      %p58 = scmp.ne.s32.totalorder %s50, %s53
      %p59 = scmp.eq.s32.totalorder %s14, 0
      %p60 = por %p58, %p59
      %p61 = scmp.ne.s32.totalorder %s50, %s53
      %p62 = scmp.eq.s32.totalorder %s19, 1
      %p63 = por %p61, %p62
      %p64 = scmp.ne.s32.totalorder %s53, %s54
      %p65 = scmp.eq.s32.totalorder %s19, 0
      %p66 = por %p64, %p65
      %p67 = scmp.ne.s32.totalorder %s53, %s54
      %p68 = scmp.eq.s32.totalorder %s20, 1
      %p69 = por %p67, %p68
      %p71 = scmp.ne.s32.totalorder %s54, %s70
      %p72 = scmp.eq.s32.totalorder %s20, 0
      %p73 = por %p71, %p72
      %s75 = sadd.s32 %s74, 1
      %p78 = scmp.eq.s32.totalorder %s14, 1
      %p79 = scmp.ne.s32.totalorder %s74, %s76
      %p80 = scmp.eq.s32.totalorder %s14, 0
      %p81 = por %p79, %p80
      %p82 = scmp.ne.s32.totalorder %s74, %s76
      %p83 = scmp.eq.s32.totalorder %s19, 1
      %p84 = por %p82, %p83
      %p85 = scmp.ne.s32.totalorder %s76, %s77
      %p86 = scmp.eq.s32.totalorder %s19, 0
      %p87 = por %p85, %p86
      %p88 = scmp.ne.s32.totalorder %s76, %s77
      %p89 = scmp.eq.s32.totalorder %s20, 1
      %p90 = por %p88, %p89
      %p92 = scmp.ne.s32.totalorder %s77, %s91
      %p93 = scmp.eq.s32.totalorder %s20, 0
      %p94 = por %p92, %p93
      %s96 = sadd.s32 %s95, 1
      %p99 = scmp.eq.s32.totalorder %s14, 1
      %p100 = scmp.ne.s32.totalorder %s95, %s97
      %p101 = scmp.eq.s32.totalorder %s14, 0
      %p102 = por %p100, %p101
      %p103 = scmp.ne.s32.totalorder %s95, %s97
      %p104 = scmp.eq.s32.totalorder %s19, 1
      %p105 = por %p103, %p104
      %p106 = scmp.ne.s32.totalorder %s97, %s98
      %p107 = scmp.eq.s32.totalorder %s19, 0
      %p108 = por %p106, %p107
      %p109 = scmp.ne.s32.totalorder %s97, %s98
      %p110 = scmp.eq.s32.totalorder %s20, 1
      %p111 = por %p109, %p110
      %p113 = scmp.ne.s32.totalorder %s98, %s112
      %p114 = scmp.eq.s32.totalorder %s20, 0
      %p115 = por %p113, %p114
      %s116 = ssub.s32 %s14, %s21
      %p117 = scmp.eq.s32.totalorder %s116, 0
      %s119 = sadd.s32 %s118, 1
      %s120 = scalar_select %p117, %s118, %s119
      %p123 = pneg %p117
      %p124 = scmp.eq.s32.totalorder %s14, 1
      %p125 = por %p123, %p124
      %p126 = scmp.ne.s32.totalorder %s118, %s121
      %p127 = scmp.eq.s32.totalorder %s14, 0
      %p128 = por %p126, %p127
      %p129 = scmp.ne.s32.totalorder %s118, %s121
      %p130 = scmp.eq.s32.totalorder %s19, 1
      %p131 = por %p129, %p130
      %p132 = scmp.ne.s32.totalorder %s121, %s122
      %p133 = scmp.eq.s32.totalorder %s19, 0
      %p134 = por %p132, %p133
      %p135 = scmp.ne.s32.totalorder %s121, %s122
      %p136 = scmp.eq.s32.totalorder %s20, 1
      %p137 = por %p135, %p136
      %p139 = scmp.ne.s32.totalorder %s122, %s138
      %p140 = scmp.eq.s32.totalorder %s20, 0
      %p141 = por %p139, %p140
      %p142 = scmp.le.s32.totalorder 1, %s14
      %p143 = scmp.lt.s32.totalorder %s14, 3
      %p144 = pnand %p142, %p143
      %p145 = pneg %p144
      // Predicated region
      $region9: #{tpu_custom_call.1} parent=5 // pred_check
        _
      $region10: #{tpu_custom_call.1} parent=5 // pred_check_branch
        %147 = sbr.rel (%p144) target = $region12
      $region11: #{tpu_custom_call.1} parent=5 // pred_region
        %s148 = ssub.s32 %s14, 1
        // Predicated region
        $region13: #{tpu_custom_call.1} parent=11 // pred_check
          %p149 = pneg %p87
        $region14: #{tpu_custom_call.1} parent=11 // pred_check_branch
          %151 = sbr.rel (%p149) target = $region16
        $region15: #{tpu_custom_call.1} parent=11 // pred_region
          %s153 = ssub.s32 7168, 7168
          %154 = vsyncadd [#allocation3], %s153
          %s155 = sshll.u32 [#allocation2], 4
          %s156 = int_to_ptr.vmem [resolvable:$true] %s155
          %161 = dma.hbm_to_vmem [thread:$0]  %s2, 7168, %s156, [#allocation3], 64, 64, 4
        $region16: #{tpu_custom_call.1} parent=11 // pred_fallthru
          _
        // Predicated region
        $region17: #{tpu_custom_call.1} parent=11 // pred_check
          %p162 = pneg %p108
        $region18: #{tpu_custom_call.1} parent=11 // pred_check_branch
          %164 = sbr.rel (%p162) target = $region20
        $region19: #{tpu_custom_call.1} parent=11 // pred_region
          _
        $region20: #{tpu_custom_call.1} parent=11 // pred_fallthru
          _
      $region12: #{tpu_custom_call.1} parent=5 // pred_fallthru
        _
      %p165 = scmp.lt.s32.totalorder %s14, 2
      // Predicated region
      $region21: #{tpu_custom_call.1} parent=5 // pred_check
        %p166 = pneg %p165
      $region22: #{tpu_custom_call.1} parent=5 // pred_check_branch
        %168 = sbr.rel (%p166) target = $region24
      $region23: #{tpu_custom_call.1} parent=5 // pred_region
        // Predicated region
        $region25: #{tpu_custom_call.1} parent=23 // pred_check
          %p169 = pneg %p34
        $region26: #{tpu_custom_call.1} parent=23 // pred_check_branch
          %171 = sbr.rel (%p169) target = $region28
        $region27: #{tpu_custom_call.1} parent=23 // pred_region
          %p172 = scmp.lt.s32.totalorder %s14, 1
          %s173 = scalar_select %p172, %s14, 1
          %s174 = smul.addr %s173, 32
          %s175 = smul.addr %s174, 8
          %s176 = scalar_lea.vmem %s0, %s175
        $region28: #{tpu_custom_call.1} parent=23 // pred_fallthru
          _
        // Predicated region
        $region29: #{tpu_custom_call.1} parent=23 // pred_check
          %p177 = pneg %p60
        $region30: #{tpu_custom_call.1} parent=23 // pred_check_branch
          %179 = sbr.rel (%p177) target = $region32
        $region31: #{tpu_custom_call.1} parent=23 // pred_region
          %p180 = scmp.lt.s32.totalorder %s14, 1
          %s181 = scalar_select %p180, %s14, 1
          %s182 = smul.addr %s181, 32
          %s183 = smul.addr %s182, 8
          %s184 = scalar_lea.vmem %s1, %s183
        $region32: #{tpu_custom_call.1} parent=23 // pred_fallthru
          _
      $region24: #{tpu_custom_call.1} parent=5 // pred_fallthru
        _
      %p185 = scmp.le.s32.totalorder 1, %s14
      %p186 = scmp.lt.s32.totalorder %s14, 3
      %p187 = pnand %p185, %p186
      %p188 = pneg %p187
      // Predicated region
      $region33: #{tpu_custom_call.1} parent=5 // pred_check
        _
      $region34: #{tpu_custom_call.1} parent=5 // pred_check_branch
        %190 = sbr.rel (%p187) target = $region36
      $region35: #{tpu_custom_call.1} parent=5 // pred_region
        %s191 = ssub.s32 %s14, 1
        // Predicated region
        $region37: #{tpu_custom_call.1} parent=35 // pred_check
          %p192 = pneg %p87
        $region38: #{tpu_custom_call.1} parent=35 // pred_check_branch
          %194 = sbr.rel (%p192) target = $region40
        $region39: #{tpu_custom_call.1} parent=35 // pred_region
          %195 = dma.done [#allocation3], 7168
        $region40: #{tpu_custom_call.1} parent=35 // pred_fallthru
          _
        %p196 = scmp.lt.s32.totalorder %s19, 1
        %s197 = scalar_select %p196, %s19, 1
        %s198 = smul.addr %s197, 32
        %s199 = smul.addr %s198, 8
        %s200 = scalar_lea.vmem %s0, %s199
        %p201 = pneg %p40
        %p202 = pneg %p37
        %p203 = scmp.lt.s32.totalorder %s19, 1
        %s204 = scalar_select %p203, %s19, 1
        %s205 = smul.addr %s204, 32
        %s206 = smul.addr %s205, 8
        %s207 = scalar_lea.vmem %s1, %s206
        %p208 = pneg %p66
        %p209 = pneg %p63
        %p210 = pneg %p87
        %p211 = pneg %p84
        %p212 = pneg %p108
        %p213 = pneg %p105
        %p214 = pneg %p134
        %p215 = pneg %p131
        %s216 = sand.u32 %s121, 1
        %s217 = scalar_lea.sflag [#allocation4], %s216
        %s218 = sand.u32 %s121, 1
        %s219 = smul.addr %s218, 16
        %s220 = scalar_lea.vmem [#allocation5], %s219
        %p221 = scmp.lt.s32.totalorder %s19, 1
        %s222 = scalar_select %p221, %s19, 1
        %s223 = smul.addr %s222, 32
        %s224 = smul.addr %s223, 8
        %s225 = scalar_lea.vmem %s0, %s224
        %p226 = scmp.lt.s32.totalorder %s19, 1
        %s227 = scalar_select %p226, %s19, 1
        %s228 = smul.addr %s227, 32
        %s229 = smul.addr %s228, 8
        %s230 = scalar_lea.vmem %s1, %s229
        %s231 = smul.u32 2, %s19
        %v233 = vld [vmem:[%s225] sm:$0xff]
        %v234 = vld [vmem:[%s225 + $0x8] sm:$0xff]
        %v235 = vld [vmem:[%s225 + $0x10] sm:$0xff]
        %v236 = vld [vmem:[%s225 + $0x18] sm:$0xff]
        %v237 = vld [vmem:[%s225 + $0x20] sm:$0xff]
        %v238 = vld [vmem:[%s225 + $0x28] sm:$0xff]
        %v239 = vld [vmem:[%s225 + $0x30] sm:$0xff]
        %v240 = vld [vmem:[%s225 + $0x38] sm:$0xff]
        %v241 = vld [vmem:[%s225 + $0x40] sm:$0xff]
        %v242 = vld [vmem:[%s225 + $0x48] sm:$0xff]
        %v243 = vld [vmem:[%s225 + $0x50] sm:$0xff]
        %v244 = vld [vmem:[%s225 + $0x58] sm:$0xff]
        %v245 = vld [vmem:[%s225 + $0x60] sm:$0xff]
        %v246 = vld [vmem:[%s225 + $0x68] sm:$0xff]
        %v247 = vld [vmem:[%s225 + $0x70] sm:$0xff]
        %v248 = vld [vmem:[%s225 + $0x78] sm:$0xff]
        %v249 = vld [vmem:[%s225 + $0x80] sm:$0xff]
        %v250 = vld [vmem:[%s225 + $0x88] sm:$0xff]
        %v251 = vld [vmem:[%s225 + $0x90] sm:$0xff]
        %v252 = vld [vmem:[%s225 + $0x98] sm:$0xff]
        %v253 = vld [vmem:[%s225 + $0xa0] sm:$0xff]
        %v254 = vld [vmem:[%s225 + $0xa8] sm:$0xff]
        %v255 = vld [vmem:[%s225 + $0xb0] sm:$0xff]
        %v256 = vld [vmem:[%s225 + $0xb8] sm:$0xff]
        %v257 = vld [vmem:[%s225 + $0xc0] sm:$0xff]
        %v258 = vld [vmem:[%s225 + $0xc8] sm:$0xff]
        %v259 = vld [vmem:[%s225 + $0xd0] sm:$0xff]
        %v260 = vld [vmem:[%s225 + $0xd8] sm:$0xff]
        %v261 = vld [vmem:[%s225 + $0xe0] sm:$0xff]
        %v262 = vld [vmem:[%s225 + $0xe8] sm:$0xff]
        %v263 = vld [vmem:[%s225 + $0xf0] sm:$0xff]
        %v264 = vld [vmem:[%s225 + $0xf8] sm:$0xff]
        %v265 = vld [vmem:[%s230] sm:$0xff]
        %v266 = vld [vmem:[%s230 + $0x8] sm:$0xff]
        %v267 = vld [vmem:[%s230 + $0x10] sm:$0xff]
        %v268 = vld [vmem:[%s230 + $0x18] sm:$0xff]
        %v269 = vld [vmem:[%s230 + $0x20] sm:$0xff]
        %v270 = vld [vmem:[%s230 + $0x28] sm:$0xff]
        %v271 = vld [vmem:[%s230 + $0x30] sm:$0xff]
        %v272 = vld [vmem:[%s230 + $0x38] sm:$0xff]
        %v273 = vld [vmem:[%s230 + $0x40] sm:$0xff]
        %v274 = vld [vmem:[%s230 + $0x48] sm:$0xff]
        %v275 = vld [vmem:[%s230 + $0x50] sm:$0xff]
        %v276 = vld [vmem:[%s230 + $0x58] sm:$0xff]
        %v277 = vld [vmem:[%s230 + $0x60] sm:$0xff]
        %v278 = vld [vmem:[%s230 + $0x68] sm:$0xff]
        %v279 = vld [vmem:[%s230 + $0x70] sm:$0xff]
        %v280 = vld [vmem:[%s230 + $0x78] sm:$0xff]
        %v281 = vld [vmem:[%s230 + $0x80] sm:$0xff]
        %v282 = vld [vmem:[%s230 + $0x88] sm:$0xff]
        %v283 = vld [vmem:[%s230 + $0x90] sm:$0xff]
        %v284 = vld [vmem:[%s230 + $0x98] sm:$0xff]
        %v285 = vld [vmem:[%s230 + $0xa0] sm:$0xff]
        %v286 = vld [vmem:[%s230 + $0xa8] sm:$0xff]
        %v287 = vld [vmem:[%s230 + $0xb0] sm:$0xff]
        %v288 = vld [vmem:[%s230 + $0xb8] sm:$0xff]
        %v289 = vld [vmem:[%s230 + $0xc0] sm:$0xff]
        %v290 = vld [vmem:[%s230 + $0xc8] sm:$0xff]
        %v291 = vld [vmem:[%s230 + $0xd0] sm:$0xff]
        %v292 = vld [vmem:[%s230 + $0xd8] sm:$0xff]
        %v293 = vld [vmem:[%s230 + $0xe0] sm:$0xff]
        %v294 = vld [vmem:[%s230 + $0xe8] sm:$0xff]
        %v295 = vld [vmem:[%s230 + $0xf0] sm:$0xff]
        %v296 = vld [vmem:[%s230 + $0xf8] sm:$0xff]
        %298 = vset.pattern.permute.xlu0 0
        %299 = vperm.xlu0 %298, %v233
        %v300 = vpop.permute.xlu0 %299
        %303 = vset.pattern.permute.xlu0 0
        %304 = vperm.xlu0 %303, %v234
        %v305 = vpop.permute.xlu0 %304
        %308 = vset.pattern.permute.xlu0 0
        %309 = vperm.xlu0 %308, %v235
        %v310 = vpop.permute.xlu0 %309
        %313 = vset.pattern.permute.xlu0 0
        %314 = vperm.xlu0 %313, %v236
        %v315 = vpop.permute.xlu0 %314
        %318 = vset.pattern.permute.xlu0 0
        %319 = vperm.xlu0 %318, %v237
        %v320 = vpop.permute.xlu0 %319
        %323 = vset.pattern.permute.xlu0 0
        %324 = vperm.xlu0 %323, %v238
        %v325 = vpop.permute.xlu0 %324
        %328 = vset.pattern.permute.xlu0 0
        %329 = vperm.xlu0 %328, %v239
        %v330 = vpop.permute.xlu0 %329
        %333 = vset.pattern.permute.xlu0 0
        %334 = vperm.xlu0 %333, %v240
        %v335 = vpop.permute.xlu0 %334
        %338 = vset.pattern.permute.xlu0 0
        %339 = vperm.xlu0 %338, %v241
        %v340 = vpop.permute.xlu0 %339
        %343 = vset.pattern.permute.xlu0 0
        %344 = vperm.xlu0 %343, %v242
        %v345 = vpop.permute.xlu0 %344
        %348 = vset.pattern.permute.xlu0 0
        %349 = vperm.xlu0 %348, %v243
        %v350 = vpop.permute.xlu0 %349
        %353 = vset.pattern.permute.xlu0 0
        %354 = vperm.xlu0 %353, %v244
        %v355 = vpop.permute.xlu0 %354
        %358 = vset.pattern.permute.xlu0 0
        %359 = vperm.xlu0 %358, %v245
        %v360 = vpop.permute.xlu0 %359
        %363 = vset.pattern.permute.xlu0 0
        %364 = vperm.xlu0 %363, %v246
        %v365 = vpop.permute.xlu0 %364
        %368 = vset.pattern.permute.xlu0 0
        %369 = vperm.xlu0 %368, %v247
        %v370 = vpop.permute.xlu0 %369
        %373 = vset.pattern.permute.xlu0 0
        %374 = vperm.xlu0 %373, %v248
        %v375 = vpop.permute.xlu0 %374
        %378 = vset.pattern.permute.xlu0 0
        %379 = vperm.xlu0 %378, %v249
        %v380 = vpop.permute.xlu0 %379
        %383 = vset.pattern.permute.xlu0 0
        %384 = vperm.xlu0 %383, %v250
        %v385 = vpop.permute.xlu0 %384
        %388 = vset.pattern.permute.xlu0 0
        %389 = vperm.xlu0 %388, %v251
        %v390 = vpop.permute.xlu0 %389
        %393 = vset.pattern.permute.xlu0 0
        %394 = vperm.xlu0 %393, %v252
        %v395 = vpop.permute.xlu0 %394
        %398 = vset.pattern.permute.xlu0 0
        %399 = vperm.xlu0 %398, %v253
        %v400 = vpop.permute.xlu0 %399
        %403 = vset.pattern.permute.xlu0 0
        %404 = vperm.xlu0 %403, %v254
        %v405 = vpop.permute.xlu0 %404
        %408 = vset.pattern.permute.xlu0 0
        %409 = vperm.xlu0 %408, %v255
        %v410 = vpop.permute.xlu0 %409
        %413 = vset.pattern.permute.xlu0 0
        %414 = vperm.xlu0 %413, %v256
        %v415 = vpop.permute.xlu0 %414
        %418 = vset.pattern.permute.xlu0 0
        %419 = vperm.xlu0 %418, %v257
        %v420 = vpop.permute.xlu0 %419
        %423 = vset.pattern.permute.xlu0 0
        %424 = vperm.xlu0 %423, %v258
        %v425 = vpop.permute.xlu0 %424
        %428 = vset.pattern.permute.xlu0 0
        %429 = vperm.xlu0 %428, %v259
        %v430 = vpop.permute.xlu0 %429
        %433 = vset.pattern.permute.xlu0 0
        %434 = vperm.xlu0 %433, %v260
        %v435 = vpop.permute.xlu0 %434
        %438 = vset.pattern.permute.xlu0 0
        %439 = vperm.xlu0 %438, %v261
        %v440 = vpop.permute.xlu0 %439
        %443 = vset.pattern.permute.xlu0 0
        %444 = vperm.xlu0 %443, %v262
        %v445 = vpop.permute.xlu0 %444
        %448 = vset.pattern.permute.xlu0 0
        %449 = vperm.xlu0 %448, %v263
        %v450 = vpop.permute.xlu0 %449
        %453 = vset.pattern.permute.xlu0 0
        %454 = vperm.xlu0 %453, %v264
        %v455 = vpop.permute.xlu0 %454
        %v457 = vlaneseq
        %v458 = vshrl.u32 %v457, 7
        %v459 = vsub.s32 0, %v458
        %v460 = vrot.slane %v265, %v459
        %v461 = vlaneseq
        %v462 = vshrl.u32 %v461, 7
        %v463 = vsub.s32 0, %v462
        %v464 = vrot.slane %v266, %v463
        %v465 = vlaneseq
        %v466 = vshrl.u32 %v465, 7
        %v467 = vsub.s32 0, %v466
        %v468 = vrot.slane %v267, %v467
        %v469 = vlaneseq
        %v470 = vshrl.u32 %v469, 7
        %v471 = vsub.s32 0, %v470
        %v472 = vrot.slane %v268, %v471
        %v473 = vlaneseq
        %v474 = vshrl.u32 %v473, 7
        %v475 = vsub.s32 0, %v474
        %v476 = vrot.slane %v269, %v475
        %v477 = vlaneseq
        %v478 = vshrl.u32 %v477, 7
        %v479 = vsub.s32 0, %v478
        %v480 = vrot.slane %v270, %v479
        %v481 = vlaneseq
        %v482 = vshrl.u32 %v481, 7
        %v483 = vsub.s32 0, %v482
        %v484 = vrot.slane %v271, %v483
        %v485 = vlaneseq
        %v486 = vshrl.u32 %v485, 7
        %v487 = vsub.s32 0, %v486
        %v488 = vrot.slane %v272, %v487
        %v489 = vlaneseq
        %v490 = vshrl.u32 %v489, 7
        %v491 = vsub.s32 0, %v490
        %v492 = vrot.slane %v273, %v491
        %v493 = vlaneseq
        %v494 = vshrl.u32 %v493, 7
        %v495 = vsub.s32 0, %v494
        %v496 = vrot.slane %v274, %v495
        %v497 = vlaneseq
        %v498 = vshrl.u32 %v497, 7
        %v499 = vsub.s32 0, %v498
        %v500 = vrot.slane %v275, %v499
        %v501 = vlaneseq
        %v502 = vshrl.u32 %v501, 7
        %v503 = vsub.s32 0, %v502
        %v504 = vrot.slane %v276, %v503
        %v505 = vlaneseq
        %v506 = vshrl.u32 %v505, 7
        %v507 = vsub.s32 0, %v506
        %v508 = vrot.slane %v277, %v507
        %v509 = vlaneseq
        %v510 = vshrl.u32 %v509, 7
        %v511 = vsub.s32 0, %v510
        %v512 = vrot.slane %v278, %v511
        %v513 = vlaneseq
        %v514 = vshrl.u32 %v513, 7
        %v515 = vsub.s32 0, %v514
        %v516 = vrot.slane %v279, %v515
        %v517 = vlaneseq
        %v518 = vshrl.u32 %v517, 7
        %v519 = vsub.s32 0, %v518
        %v520 = vrot.slane %v280, %v519
        %v521 = vlaneseq
        %v522 = vshrl.u32 %v521, 7
        %v523 = vsub.s32 0, %v522
        %v524 = vrot.slane %v281, %v523
        %v525 = vlaneseq
        %v526 = vshrl.u32 %v525, 7
        %v527 = vsub.s32 0, %v526
        %v528 = vrot.slane %v282, %v527
        %v529 = vlaneseq
        %v530 = vshrl.u32 %v529, 7
        %v531 = vsub.s32 0, %v530
        %v532 = vrot.slane %v283, %v531
        %v533 = vlaneseq
        %v534 = vshrl.u32 %v533, 7
        %v535 = vsub.s32 0, %v534
        %v536 = vrot.slane %v284, %v535
        %v537 = vlaneseq
        %v538 = vshrl.u32 %v537, 7
        %v539 = vsub.s32 0, %v538
        %v540 = vrot.slane %v285, %v539
        %v541 = vlaneseq
        %v542 = vshrl.u32 %v541, 7
        %v543 = vsub.s32 0, %v542
        %v544 = vrot.slane %v286, %v543
        %v545 = vlaneseq
        %v546 = vshrl.u32 %v545, 7
        %v547 = vsub.s32 0, %v546
        %v548 = vrot.slane %v287, %v547
        %v549 = vlaneseq
        %v550 = vshrl.u32 %v549, 7
        %v551 = vsub.s32 0, %v550
        %v552 = vrot.slane %v288, %v551
        %v553 = vlaneseq
        %v554 = vshrl.u32 %v553, 7
        %v555 = vsub.s32 0, %v554
        %v556 = vrot.slane %v289, %v555
        %v557 = vlaneseq
        %v558 = vshrl.u32 %v557, 7
        %v559 = vsub.s32 0, %v558
        %v560 = vrot.slane %v290, %v559
        %v561 = vlaneseq
        %v562 = vshrl.u32 %v561, 7
        %v563 = vsub.s32 0, %v562
        %v564 = vrot.slane %v291, %v563
        %v565 = vlaneseq
        %v566 = vshrl.u32 %v565, 7
        %v567 = vsub.s32 0, %v566
        %v568 = vrot.slane %v292, %v567
        %v569 = vlaneseq
        %v570 = vshrl.u32 %v569, 7
        %v571 = vsub.s32 0, %v570
        %v572 = vrot.slane %v293, %v571
        %v573 = vlaneseq
        %v574 = vshrl.u32 %v573, 7
        %v575 = vsub.s32 0, %v574
        %v576 = vrot.slane %v294, %v575
        %v577 = vlaneseq
        %v578 = vshrl.u32 %v577, 7
        %v579 = vsub.s32 0, %v578
        %v580 = vrot.slane %v295, %v579
        %v581 = vlaneseq
        %v582 = vshrl.u32 %v581, 7
        %v583 = vsub.s32 0, %v582
        %v584 = vrot.slane %v296, %v583
        %v585 = vmul.f32 %v300, %v460
        %v586 = vmul.f32 %v305, %v464
        %v587 = vmul.f32 %v310, %v468
        %v588 = vmul.f32 %v315, %v472
        %v589 = vmul.f32 %v320, %v476
        %v590 = vmul.f32 %v325, %v480
        %v591 = vmul.f32 %v330, %v484
        %v592 = vmul.f32 %v335, %v488
        %v593 = vmul.f32 %v340, %v492
        %v594 = vmul.f32 %v345, %v496
        %v595 = vmul.f32 %v350, %v500
        %v596 = vmul.f32 %v355, %v504
        %v597 = vmul.f32 %v360, %v508
        %v598 = vmul.f32 %v365, %v512
        %v599 = vmul.f32 %v370, %v516
        %v600 = vmul.f32 %v375, %v520
        %v601 = vmul.f32 %v380, %v524
        %v602 = vmul.f32 %v385, %v528
        %v603 = vmul.f32 %v390, %v532
        %v604 = vmul.f32 %v395, %v536
        %v605 = vmul.f32 %v400, %v540
        %v606 = vmul.f32 %v405, %v544
        %v607 = vmul.f32 %v410, %v548
        %v608 = vmul.f32 %v415, %v552
        %v609 = vmul.f32 %v420, %v556
        %v610 = vmul.f32 %v425, %v560
        %v611 = vmul.f32 %v430, %v564
        %v612 = vmul.f32 %v435, %v568
        %v613 = vmul.f32 %v440, %v572
        %v614 = vmul.f32 %v445, %v576
        %v615 = vmul.f32 %v450, %v580
        %v616 = vmul.f32 %v455, %v584
        %617 = vset.pattern.permute.xlu0 1
        %618 = vperm.xlu0 %617, %v233
        %v619 = vpop.permute.xlu0 %618
        %621 = vset.pattern.permute.xlu0 1
        %622 = vperm.xlu0 %621, %v234
        %v623 = vpop.permute.xlu0 %622
        %625 = vset.pattern.permute.xlu0 1
        %626 = vperm.xlu0 %625, %v235
        %v627 = vpop.permute.xlu0 %626
        %629 = vset.pattern.permute.xlu0 1
        %630 = vperm.xlu0 %629, %v236
        %v631 = vpop.permute.xlu0 %630
        %633 = vset.pattern.permute.xlu0 1
        %634 = vperm.xlu0 %633, %v237
        %v635 = vpop.permute.xlu0 %634
        %637 = vset.pattern.permute.xlu0 1
        %638 = vperm.xlu0 %637, %v238
        %v639 = vpop.permute.xlu0 %638
        %641 = vset.pattern.permute.xlu0 1
        %642 = vperm.xlu0 %641, %v239
        %v643 = vpop.permute.xlu0 %642
        %645 = vset.pattern.permute.xlu0 1
        %646 = vperm.xlu0 %645, %v240
        %v647 = vpop.permute.xlu0 %646
        %649 = vset.pattern.permute.xlu0 1
        %650 = vperm.xlu0 %649, %v241
        %v651 = vpop.permute.xlu0 %650
        %653 = vset.pattern.permute.xlu0 1
        %654 = vperm.xlu0 %653, %v242
        %v655 = vpop.permute.xlu0 %654
        %657 = vset.pattern.permute.xlu0 1
        %658 = vperm.xlu0 %657, %v243
        %v659 = vpop.permute.xlu0 %658
        %661 = vset.pattern.permute.xlu0 1
        %662 = vperm.xlu0 %661, %v244
        %v663 = vpop.permute.xlu0 %662
        %665 = vset.pattern.permute.xlu0 1
        %666 = vperm.xlu0 %665, %v245
        %v667 = vpop.permute.xlu0 %666
        %669 = vset.pattern.permute.xlu0 1
        %670 = vperm.xlu0 %669, %v246
        %v671 = vpop.permute.xlu0 %670
        %673 = vset.pattern.permute.xlu0 1
        %674 = vperm.xlu0 %673, %v247
        %v675 = vpop.permute.xlu0 %674
        %677 = vset.pattern.permute.xlu0 1
        %678 = vperm.xlu0 %677, %v248
        %v679 = vpop.permute.xlu0 %678
        %681 = vset.pattern.permute.xlu0 1
        %682 = vperm.xlu0 %681, %v249
        %v683 = vpop.permute.xlu0 %682
        %685 = vset.pattern.permute.xlu0 1
        %686 = vperm.xlu0 %685, %v250
        %v687 = vpop.permute.xlu0 %686
        %689 = vset.pattern.permute.xlu0 1
        %690 = vperm.xlu0 %689, %v251
        %v691 = vpop.permute.xlu0 %690
        %693 = vset.pattern.permute.xlu0 1
        %694 = vperm.xlu0 %693, %v252
        %v695 = vpop.permute.xlu0 %694
        %697 = vset.pattern.permute.xlu0 1
        %698 = vperm.xlu0 %697, %v253
        %v699 = vpop.permute.xlu0 %698
        %701 = vset.pattern.permute.xlu0 1
        %702 = vperm.xlu0 %701, %v254
        %v703 = vpop.permute.xlu0 %702
        %705 = vset.pattern.permute.xlu0 1
        %706 = vperm.xlu0 %705, %v255
        %v707 = vpop.permute.xlu0 %706
        %709 = vset.pattern.permute.xlu0 1
        %710 = vperm.xlu0 %709, %v256
        %v711 = vpop.permute.xlu0 %710
        %713 = vset.pattern.permute.xlu0 1
        %714 = vperm.xlu0 %713, %v257
        %v715 = vpop.permute.xlu0 %714
        %717 = vset.pattern.permute.xlu0 1
        %718 = vperm.xlu0 %717, %v258
        %v719 = vpop.permute.xlu0 %718
        %721 = vset.pattern.permute.xlu0 1
        %722 = vperm.xlu0 %721, %v259
        %v723 = vpop.permute.xlu0 %722
        %725 = vset.pattern.permute.xlu0 1
        %726 = vperm.xlu0 %725, %v260
        %v727 = vpop.permute.xlu0 %726
        %729 = vset.pattern.permute.xlu0 1
        %730 = vperm.xlu0 %729, %v261
        %v731 = vpop.permute.xlu0 %730
        %733 = vset.pattern.permute.xlu0 1
        %734 = vperm.xlu0 %733, %v262
        %v735 = vpop.permute.xlu0 %734
        %737 = vset.pattern.permute.xlu0 1
        %738 = vperm.xlu0 %737, %v263
        %v739 = vpop.permute.xlu0 %738
        %741 = vset.pattern.permute.xlu0 1
        %742 = vperm.xlu0 %741, %v264
        %v743 = vpop.permute.xlu0 %742
        %v745 = vlaneseq
        %v746 = vshrl.u32 %v745, 7
        %v747 = vsub.s32 1, %v746
        %v748 = vrot.slane %v265, %v747
        %v749 = vlaneseq
        %v750 = vshrl.u32 %v749, 7
        %v751 = vsub.s32 1, %v750
        %v752 = vrot.slane %v266, %v751
        %v753 = vlaneseq
        %v754 = vshrl.u32 %v753, 7
        %v755 = vsub.s32 1, %v754
        %v756 = vrot.slane %v267, %v755
        %v757 = vlaneseq
        %v758 = vshrl.u32 %v757, 7
        %v759 = vsub.s32 1, %v758
        %v760 = vrot.slane %v268, %v759
        %v761 = vlaneseq
        %v762 = vshrl.u32 %v761, 7
        %v763 = vsub.s32 1, %v762
        %v764 = vrot.slane %v269, %v763
        %v765 = vlaneseq
        %v766 = vshrl.u32 %v765, 7
        %v767 = vsub.s32 1, %v766
        %v768 = vrot.slane %v270, %v767
        %v769 = vlaneseq
        %v770 = vshrl.u32 %v769, 7
        %v771 = vsub.s32 1, %v770
        %v772 = vrot.slane %v271, %v771
        %v773 = vlaneseq
        %v774 = vshrl.u32 %v773, 7
        %v775 = vsub.s32 1, %v774
        %v776 = vrot.slane %v272, %v775
        %v777 = vlaneseq
        %v778 = vshrl.u32 %v777, 7
        %v779 = vsub.s32 1, %v778
        %v780 = vrot.slane %v273, %v779
        %v781 = vlaneseq
        %v782 = vshrl.u32 %v781, 7
        %v783 = vsub.s32 1, %v782
        %v784 = vrot.slane %v274, %v783
        %v785 = vlaneseq
        %v786 = vshrl.u32 %v785, 7
        %v787 = vsub.s32 1, %v786
        %v788 = vrot.slane %v275, %v787
        %v789 = vlaneseq
        %v790 = vshrl.u32 %v789, 7
        %v791 = vsub.s32 1, %v790
        %v792 = vrot.slane %v276, %v791
        %v793 = vlaneseq
        %v794 = vshrl.u32 %v793, 7
        %v795 = vsub.s32 1, %v794
        %v796 = vrot.slane %v277, %v795
        %v797 = vlaneseq
        %v798 = vshrl.u32 %v797, 7
        %v799 = vsub.s32 1, %v798
        %v800 = vrot.slane %v278, %v799
        %v801 = vlaneseq
        %v802 = vshrl.u32 %v801, 7
        %v803 = vsub.s32 1, %v802
        %v804 = vrot.slane %v279, %v803
        %v805 = vlaneseq
        %v806 = vshrl.u32 %v805, 7
        %v807 = vsub.s32 1, %v806
        %v808 = vrot.slane %v280, %v807
        %v809 = vlaneseq
        %v810 = vshrl.u32 %v809, 7
        %v811 = vsub.s32 1, %v810
        %v812 = vrot.slane %v281, %v811
        %v813 = vlaneseq
        %v814 = vshrl.u32 %v813, 7
        %v815 = vsub.s32 1, %v814
        %v816 = vrot.slane %v282, %v815
        %v817 = vlaneseq
        %v818 = vshrl.u32 %v817, 7
        %v819 = vsub.s32 1, %v818
        %v820 = vrot.slane %v283, %v819
        %v821 = vlaneseq
        %v822 = vshrl.u32 %v821, 7
        %v823 = vsub.s32 1, %v822
        %v824 = vrot.slane %v284, %v823
        %v825 = vlaneseq
        %v826 = vshrl.u32 %v825, 7
        %v827 = vsub.s32 1, %v826
        %v828 = vrot.slane %v285, %v827
        %v829 = vlaneseq
        %v830 = vshrl.u32 %v829, 7
        %v831 = vsub.s32 1, %v830
        %v832 = vrot.slane %v286, %v831
        %v833 = vlaneseq
        %v834 = vshrl.u32 %v833, 7
        %v835 = vsub.s32 1, %v834
        %v836 = vrot.slane %v287, %v835
        %v837 = vlaneseq
        %v838 = vshrl.u32 %v837, 7
        %v839 = vsub.s32 1, %v838
        %v840 = vrot.slane %v288, %v839
        %v841 = vlaneseq
        %v842 = vshrl.u32 %v841, 7
        %v843 = vsub.s32 1, %v842
        %v844 = vrot.slane %v289, %v843
        %v845 = vlaneseq
        %v846 = vshrl.u32 %v845, 7
        %v847 = vsub.s32 1, %v846
        %v848 = vrot.slane %v290, %v847
        %v849 = vlaneseq
        %v850 = vshrl.u32 %v849, 7
        %v851 = vsub.s32 1, %v850
        %v852 = vrot.slane %v291, %v851
        %v853 = vlaneseq
        %v854 = vshrl.u32 %v853, 7
        %v855 = vsub.s32 1, %v854
        %v856 = vrot.slane %v292, %v855
        %v857 = vlaneseq
        %v858 = vshrl.u32 %v857, 7
        %v859 = vsub.s32 1, %v858
        %v860 = vrot.slane %v293, %v859
        %v861 = vlaneseq
        %v862 = vshrl.u32 %v861, 7
        %v863 = vsub.s32 1, %v862
        %v864 = vrot.slane %v294, %v863
        %v865 = vlaneseq
        %v866 = vshrl.u32 %v865, 7
        %v867 = vsub.s32 1, %v866
        %v868 = vrot.slane %v295, %v867
        %v869 = vlaneseq
        %v870 = vshrl.u32 %v869, 7
        %v871 = vsub.s32 1, %v870
        %v872 = vrot.slane %v296, %v871
        %v873 = vmul.f32 %v619, %v748
        %v874 = vmul.f32 %v623, %v752
        %v875 = vmul.f32 %v627, %v756
        %v876 = vmul.f32 %v631, %v760
        %v877 = vmul.f32 %v635, %v764
        %v878 = vmul.f32 %v639, %v768
        %v879 = vmul.f32 %v643, %v772
        %v880 = vmul.f32 %v647, %v776
        %v881 = vmul.f32 %v651, %v780
        %v882 = vmul.f32 %v655, %v784
        %v883 = vmul.f32 %v659, %v788
        %v884 = vmul.f32 %v663, %v792
        %v885 = vmul.f32 %v667, %v796
        %v886 = vmul.f32 %v671, %v800
        %v887 = vmul.f32 %v675, %v804
        %v888 = vmul.f32 %v679, %v808
        %v889 = vmul.f32 %v683, %v812
        %v890 = vmul.f32 %v687, %v816
        %v891 = vmul.f32 %v691, %v820
        %v892 = vmul.f32 %v695, %v824
        %v893 = vmul.f32 %v699, %v828
        %v894 = vmul.f32 %v703, %v832
        %v895 = vmul.f32 %v707, %v836
        %v896 = vmul.f32 %v711, %v840
        %v897 = vmul.f32 %v715, %v844
        %v898 = vmul.f32 %v719, %v848
        %v899 = vmul.f32 %v723, %v852
        %v900 = vmul.f32 %v727, %v856
        %v901 = vmul.f32 %v731, %v860
        %v902 = vmul.f32 %v735, %v864
        %v903 = vmul.f32 %v739, %v868
        %v904 = vmul.f32 %v743, %v872
        %v905 = vadd.f32 %v585, %v873
        %v906 = vadd.f32 %v586, %v874
        %v907 = vadd.f32 %v587, %v875
        %v908 = vadd.f32 %v588, %v876
        %v909 = vadd.f32 %v589, %v877
        %v910 = vadd.f32 %v590, %v878
        %v911 = vadd.f32 %v591, %v879
        %v912 = vadd.f32 %v592, %v880
        %v913 = vadd.f32 %v593, %v881
        %v914 = vadd.f32 %v594, %v882
        %v915 = vadd.f32 %v595, %v883
        %v916 = vadd.f32 %v596, %v884
        %v917 = vadd.f32 %v597, %v885
        %v918 = vadd.f32 %v598, %v886
        %v919 = vadd.f32 %v599, %v887
        %v920 = vadd.f32 %v600, %v888
        %v921 = vadd.f32 %v601, %v889
        %v922 = vadd.f32 %v602, %v890
        %v923 = vadd.f32 %v603, %v891
        %v924 = vadd.f32 %v604, %v892
        %v925 = vadd.f32 %v605, %v893
        %v926 = vadd.f32 %v606, %v894
        %v927 = vadd.f32 %v607, %v895
        %v928 = vadd.f32 %v608, %v896
        %v929 = vadd.f32 %v609, %v897
        %v930 = vadd.f32 %v610, %v898
        %v931 = vadd.f32 %v611, %v899
        %v932 = vadd.f32 %v612, %v900
        %v933 = vadd.f32 %v613, %v901
        %v934 = vadd.f32 %v614, %v902
        %v935 = vadd.f32 %v615, %v903
        %v936 = vadd.f32 %v616, %v904
        %937 = vset.pattern.permute.xlu0 2
        %938 = vperm.xlu0 %937, %v233
        %v939 = vpop.permute.xlu0 %938
        %941 = vset.pattern.permute.xlu0 2
        %942 = vperm.xlu0 %941, %v234
        %v943 = vpop.permute.xlu0 %942
        %945 = vset.pattern.permute.xlu0 2
        %946 = vperm.xlu0 %945, %v235
        %v947 = vpop.permute.xlu0 %946
        %949 = vset.pattern.permute.xlu0 2
        %950 = vperm.xlu0 %949, %v236
        %v951 = vpop.permute.xlu0 %950
        %953 = vset.pattern.permute.xlu0 2
        %954 = vperm.xlu0 %953, %v237
        %v955 = vpop.permute.xlu0 %954
        %957 = vset.pattern.permute.xlu0 2
        %958 = vperm.xlu0 %957, %v238
        %v959 = vpop.permute.xlu0 %958
        %961 = vset.pattern.permute.xlu0 2
        %962 = vperm.xlu0 %961, %v239
        %v963 = vpop.permute.xlu0 %962
        %965 = vset.pattern.permute.xlu0 2
        %966 = vperm.xlu0 %965, %v240
        %v967 = vpop.permute.xlu0 %966
        %969 = vset.pattern.permute.xlu0 2
        %970 = vperm.xlu0 %969, %v241
        %v971 = vpop.permute.xlu0 %970
        %973 = vset.pattern.permute.xlu0 2
        %974 = vperm.xlu0 %973, %v242
        %v975 = vpop.permute.xlu0 %974
        %977 = vset.pattern.permute.xlu0 2
        %978 = vperm.xlu0 %977, %v243
        %v979 = vpop.permute.xlu0 %978
        %981 = vset.pattern.permute.xlu0 2
        %982 = vperm.xlu0 %981, %v244
        %v983 = vpop.permute.xlu0 %982
        %985 = vset.pattern.permute.xlu0 2
        %986 = vperm.xlu0 %985, %v245
        %v987 = vpop.permute.xlu0 %986
        %989 = vset.pattern.permute.xlu0 2
        %990 = vperm.xlu0 %989, %v246
        %v991 = vpop.permute.xlu0 %990
        %993 = vset.pattern.permute.xlu0 2
        %994 = vperm.xlu0 %993, %v247
        %v995 = vpop.permute.xlu0 %994
        %997 = vset.pattern.permute.xlu0 2
        %998 = vperm.xlu0 %997, %v248
        %v999 = vpop.permute.xlu0 %998
        %1001 = vset.pattern.permute.xlu0 2
        %1002 = vperm.xlu0 %1001, %v249
        %v1003 = vpop.permute.xlu0 %1002
        %1005 = vset.pattern.permute.xlu0 2
        %1006 = vperm.xlu0 %1005, %v250
        %v1007 = vpop.permute.xlu0 %1006
        %1009 = vset.pattern.permute.xlu0 2
        %1010 = vperm.xlu0 %1009, %v251
        %v1011 = vpop.permute.xlu0 %1010
        %1013 = vset.pattern.permute.xlu0 2
        %1014 = vperm.xlu0 %1013, %v252
        %v1015 = vpop.permute.xlu0 %1014
        %1017 = vset.pattern.permute.xlu0 2
        %1018 = vperm.xlu0 %1017, %v253
        %v1019 = vpop.permute.xlu0 %1018
        %1021 = vset.pattern.permute.xlu0 2
        %1022 = vperm.xlu0 %1021, %v254
        %v1023 = vpop.permute.xlu0 %1022
        %1025 = vset.pattern.permute.xlu0 2
        %1026 = vperm.xlu0 %1025, %v255
        %v1027 = vpop.permute.xlu0 %1026
        %1029 = vset.pattern.permute.xlu0 2
        %1030 = vperm.xlu0 %1029, %v256
        %v1031 = vpop.permute.xlu0 %1030
        %1033 = vset.pattern.permute.xlu0 2
        %1034 = vperm.xlu0 %1033, %v257
        %v1035 = vpop.permute.xlu0 %1034
        %1037 = vset.pattern.permute.xlu0 2
        %1038 = vperm.xlu0 %1037, %v258
        %v1039 = vpop.permute.xlu0 %1038
        %1041 = vset.pattern.permute.xlu0 2
        %1042 = vperm.xlu0 %1041, %v259
        %v1043 = vpop.permute.xlu0 %1042
        %1045 = vset.pattern.permute.xlu0 2
        %1046 = vperm.xlu0 %1045, %v260
        %v1047 = vpop.permute.xlu0 %1046
        %1049 = vset.pattern.permute.xlu0 2
        %1050 = vperm.xlu0 %1049, %v261
        %v1051 = vpop.permute.xlu0 %1050
        %1053 = vset.pattern.permute.xlu0 2
        %1054 = vperm.xlu0 %1053, %v262
        %v1055 = vpop.permute.xlu0 %1054
        %1057 = vset.pattern.permute.xlu0 2
        %1058 = vperm.xlu0 %1057, %v263
        %v1059 = vpop.permute.xlu0 %1058
        %1061 = vset.pattern.permute.xlu0 2
        %1062 = vperm.xlu0 %1061, %v264
        %v1063 = vpop.permute.xlu0 %1062
        %v1065 = vlaneseq
        %v1066 = vshrl.u32 %v1065, 7
        %v1067 = vsub.s32 2, %v1066
        %v1068 = vrot.slane %v265, %v1067
        %v1069 = vlaneseq
        %v1070 = vshrl.u32 %v1069, 7
        %v1071 = vsub.s32 2, %v1070
        %v1072 = vrot.slane %v266, %v1071
        %v1073 = vlaneseq
        %v1074 = vshrl.u32 %v1073, 7
        %v1075 = vsub.s32 2, %v1074
        %v1076 = vrot.slane %v267, %v1075
        %v1077 = vlaneseq
        %v1078 = vshrl.u32 %v1077, 7
        %v1079 = vsub.s32 2, %v1078
        %v1080 = vrot.slane %v268, %v1079
        %v1081 = vlaneseq
        %v1082 = vshrl.u32 %v1081, 7
        %v1083 = vsub.s32 2, %v1082
        %v1084 = vrot.slane %v269, %v1083
        %v1085 = vlaneseq
        %v1086 = vshrl.u32 %v1085, 7
        %v1087 = vsub.s32 2, %v1086
        %v1088 = vrot.slane %v270, %v1087
        %v1089 = vlaneseq
        %v1090 = vshrl.u32 %v1089, 7
        %v1091 = vsub.s32 2, %v1090
        %v1092 = vrot.slane %v271, %v1091
        %v1093 = vlaneseq
        %v1094 = vshrl.u32 %v1093, 7
        %v1095 = vsub.s32 2, %v1094
        %v1096 = vrot.slane %v272, %v1095
        %v1097 = vlaneseq
        %v1098 = vshrl.u32 %v1097, 7
        %v1099 = vsub.s32 2, %v1098
        %v1100 = vrot.slane %v273, %v1099
        %v1101 = vlaneseq
        %v1102 = vshrl.u32 %v1101, 7
        %v1103 = vsub.s32 2, %v1102
        %v1104 = vrot.slane %v274, %v1103
        %v1105 = vlaneseq
        %v1106 = vshrl.u32 %v1105, 7
        %v1107 = vsub.s32 2, %v1106
        %v1108 = vrot.slane %v275, %v1107
        %v1109 = vlaneseq
        %v1110 = vshrl.u32 %v1109, 7
        %v1111 = vsub.s32 2, %v1110
        %v1112 = vrot.slane %v276, %v1111
        %v1113 = vlaneseq
        %v1114 = vshrl.u32 %v1113, 7
        %v1115 = vsub.s32 2, %v1114
        %v1116 = vrot.slane %v277, %v1115
        %v1117 = vlaneseq
        %v1118 = vshrl.u32 %v1117, 7
        %v1119 = vsub.s32 2, %v1118
        %v1120 = vrot.slane %v278, %v1119
        %v1121 = vlaneseq
        %v1122 = vshrl.u32 %v1121, 7
        %v1123 = vsub.s32 2, %v1122
        %v1124 = vrot.slane %v279, %v1123
        %v1125 = vlaneseq
        %v1126 = vshrl.u32 %v1125, 7
        %v1127 = vsub.s32 2, %v1126
        %v1128 = vrot.slane %v280, %v1127
        %v1129 = vlaneseq
        %v1130 = vshrl.u32 %v1129, 7
        %v1131 = vsub.s32 2, %v1130
        %v1132 = vrot.slane %v281, %v1131
        %v1133 = vlaneseq
        %v1134 = vshrl.u32 %v1133, 7
        %v1135 = vsub.s32 2, %v1134
        %v1136 = vrot.slane %v282, %v1135
        %v1137 = vlaneseq
        %v1138 = vshrl.u32 %v1137, 7
        %v1139 = vsub.s32 2, %v1138
        %v1140 = vrot.slane %v283, %v1139
        %v1141 = vlaneseq
        %v1142 = vshrl.u32 %v1141, 7
        %v1143 = vsub.s32 2, %v1142
        %v1144 = vrot.slane %v284, %v1143
        %v1145 = vlaneseq
        %v1146 = vshrl.u32 %v1145, 7
        %v1147 = vsub.s32 2, %v1146
        %v1148 = vrot.slane %v285, %v1147
        %v1149 = vlaneseq
        %v1150 = vshrl.u32 %v1149, 7
        %v1151 = vsub.s32 2, %v1150
        %v1152 = vrot.slane %v286, %v1151
        %v1153 = vlaneseq
        %v1154 = vshrl.u32 %v1153, 7
        %v1155 = vsub.s32 2, %v1154
        %v1156 = vrot.slane %v287, %v1155
        %v1157 = vlaneseq
        %v1158 = vshrl.u32 %v1157, 7
        %v1159 = vsub.s32 2, %v1158
        %v1160 = vrot.slane %v288, %v1159
        %v1161 = vlaneseq
        %v1162 = vshrl.u32 %v1161, 7
        %v1163 = vsub.s32 2, %v1162
        %v1164 = vrot.slane %v289, %v1163
        %v1165 = vlaneseq
        %v1166 = vshrl.u32 %v1165, 7
        %v1167 = vsub.s32 2, %v1166
        %v1168 = vrot.slane %v290, %v1167
        %v1169 = vlaneseq
        %v1170 = vshrl.u32 %v1169, 7
        %v1171 = vsub.s32 2, %v1170
        %v1172 = vrot.slane %v291, %v1171
        %v1173 = vlaneseq
        %v1174 = vshrl.u32 %v1173, 7
        %v1175 = vsub.s32 2, %v1174
        %v1176 = vrot.slane %v292, %v1175
        %v1177 = vlaneseq
        %v1178 = vshrl.u32 %v1177, 7
        %v1179 = vsub.s32 2, %v1178
        %v1180 = vrot.slane %v293, %v1179
        %v1181 = vlaneseq
        %v1182 = vshrl.u32 %v1181, 7
        %v1183 = vsub.s32 2, %v1182
        %v1184 = vrot.slane %v294, %v1183
        %v1185 = vlaneseq
        %v1186 = vshrl.u32 %v1185, 7
        %v1187 = vsub.s32 2, %v1186
        %v1188 = vrot.slane %v295, %v1187
        %v1189 = vlaneseq
        %v1190 = vshrl.u32 %v1189, 7
        %v1191 = vsub.s32 2, %v1190
        %v1192 = vrot.slane %v296, %v1191
        %v1193 = vmul.f32 %v939, %v1068
        %v1194 = vmul.f32 %v943, %v1072
        %v1195 = vmul.f32 %v947, %v1076
        %v1196 = vmul.f32 %v951, %v1080
        %v1197 = vmul.f32 %v955, %v1084
        %v1198 = vmul.f32 %v959, %v1088
        %v1199 = vmul.f32 %v963, %v1092
        %v1200 = vmul.f32 %v967, %v1096
        %v1201 = vmul.f32 %v971, %v1100
        %v1202 = vmul.f32 %v975, %v1104
        %v1203 = vmul.f32 %v979, %v1108
        %v1204 = vmul.f32 %v983, %v1112
        %v1205 = vmul.f32 %v987, %v1116
        %v1206 = vmul.f32 %v991, %v1120
        %v1207 = vmul.f32 %v995, %v1124
        %v1208 = vmul.f32 %v999, %v1128
        %v1209 = vmul.f32 %v1003, %v1132
        %v1210 = vmul.f32 %v1007, %v1136
        %v1211 = vmul.f32 %v1011, %v1140
        %v1212 = vmul.f32 %v1015, %v1144
        %v1213 = vmul.f32 %v1019, %v1148
        %v1214 = vmul.f32 %v1023, %v1152
        %v1215 = vmul.f32 %v1027, %v1156
        %v1216 = vmul.f32 %v1031, %v1160
        %v1217 = vmul.f32 %v1035, %v1164
        %v1218 = vmul.f32 %v1039, %v1168
        %v1219 = vmul.f32 %v1043, %v1172
        %v1220 = vmul.f32 %v1047, %v1176
        %v1221 = vmul.f32 %v1051, %v1180
        %v1222 = vmul.f32 %v1055, %v1184
        %v1223 = vmul.f32 %v1059, %v1188
        %v1224 = vmul.f32 %v1063, %v1192
        %v1225 = vadd.f32 %v905, %v1193
        %v1226 = vadd.f32 %v906, %v1194
        %v1227 = vadd.f32 %v907, %v1195
        %v1228 = vadd.f32 %v908, %v1196
        %v1229 = vadd.f32 %v909, %v1197
        %v1230 = vadd.f32 %v910, %v1198
        %v1231 = vadd.f32 %v911, %v1199
        %v1232 = vadd.f32 %v912, %v1200
        %v1233 = vadd.f32 %v913, %v1201
        %v1234 = vadd.f32 %v914, %v1202
        %v1235 = vadd.f32 %v915, %v1203
        %v1236 = vadd.f32 %v916, %v1204
        %v1237 = vadd.f32 %v917, %v1205
        %v1238 = vadd.f32 %v918, %v1206
        %v1239 = vadd.f32 %v919, %v1207
        %v1240 = vadd.f32 %v920, %v1208
        %v1241 = vadd.f32 %v921, %v1209
        %v1242 = vadd.f32 %v922, %v1210
        %v1243 = vadd.f32 %v923, %v1211
        %v1244 = vadd.f32 %v924, %v1212
        %v1245 = vadd.f32 %v925, %v1213
        %v1246 = vadd.f32 %v926, %v1214
        %v1247 = vadd.f32 %v927, %v1215
        %v1248 = vadd.f32 %v928, %v1216
        %v1249 = vadd.f32 %v929, %v1217
        %v1250 = vadd.f32 %v930, %v1218
        %v1251 = vadd.f32 %v931, %v1219
        %v1252 = vadd.f32 %v932, %v1220
        %v1253 = vadd.f32 %v933, %v1221
        %v1254 = vadd.f32 %v934, %v1222
        %v1255 = vadd.f32 %v935, %v1223
        %v1256 = vadd.f32 %v936, %v1224
        %1257 = vset.pattern.permute.xlu0 3
        %1258 = vperm.xlu0 %1257, %v233
        %v1259 = vpop.permute.xlu0 %1258
        %1261 = vset.pattern.permute.xlu0 3
        %1262 = vperm.xlu0 %1261, %v234
        %v1263 = vpop.permute.xlu0 %1262
        %1265 = vset.pattern.permute.xlu0 3
        %1266 = vperm.xlu0 %1265, %v235
        %v1267 = vpop.permute.xlu0 %1266
        %1269 = vset.pattern.permute.xlu0 3
        %1270 = vperm.xlu0 %1269, %v236
        %v1271 = vpop.permute.xlu0 %1270
        %1273 = vset.pattern.permute.xlu0 3
        %1274 = vperm.xlu0 %1273, %v237
        %v1275 = vpop.permute.xlu0 %1274
        %1277 = vset.pattern.permute.xlu0 3
        %1278 = vperm.xlu0 %1277, %v238
        %v1279 = vpop.permute.xlu0 %1278
        %1281 = vset.pattern.permute.xlu0 3
        %1282 = vperm.xlu0 %1281, %v239
        %v1283 = vpop.permute.xlu0 %1282
        %1285 = vset.pattern.permute.xlu0 3
        %1286 = vperm.xlu0 %1285, %v240
        %v1287 = vpop.permute.xlu0 %1286
        %1289 = vset.pattern.permute.xlu0 3
        %1290 = vperm.xlu0 %1289, %v241
        %v1291 = vpop.permute.xlu0 %1290
        %1293 = vset.pattern.permute.xlu0 3
        %1294 = vperm.xlu0 %1293, %v242
        %v1295 = vpop.permute.xlu0 %1294
        %1297 = vset.pattern.permute.xlu0 3
        %1298 = vperm.xlu0 %1297, %v243
        %v1299 = vpop.permute.xlu0 %1298
        %1301 = vset.pattern.permute.xlu0 3
        %1302 = vperm.xlu0 %1301, %v244
        %v1303 = vpop.permute.xlu0 %1302
        %1305 = vset.pattern.permute.xlu0 3
        %1306 = vperm.xlu0 %1305, %v245
        %v1307 = vpop.permute.xlu0 %1306
        %1309 = vset.pattern.permute.xlu0 3
        %1310 = vperm.xlu0 %1309, %v246
        %v1311 = vpop.permute.xlu0 %1310
        %1313 = vset.pattern.permute.xlu0 3
        %1314 = vperm.xlu0 %1313, %v247
        %v1315 = vpop.permute.xlu0 %1314
        %1317 = vset.pattern.permute.xlu0 3
        %1318 = vperm.xlu0 %1317, %v248
        %v1319 = vpop.permute.xlu0 %1318
        %1321 = vset.pattern.permute.xlu0 3
        %1322 = vperm.xlu0 %1321, %v249
        %v1323 = vpop.permute.xlu0 %1322
        %1325 = vset.pattern.permute.xlu0 3
        %1326 = vperm.xlu0 %1325, %v250
        %v1327 = vpop.permute.xlu0 %1326
        %1329 = vset.pattern.permute.xlu0 3
        %1330 = vperm.xlu0 %1329, %v251
        %v1331 = vpop.permute.xlu0 %1330
        %1333 = vset.pattern.permute.xlu0 3
        %1334 = vperm.xlu0 %1333, %v252
        %v1335 = vpop.permute.xlu0 %1334
        %1337 = vset.pattern.permute.xlu0 3
        %1338 = vperm.xlu0 %1337, %v253
        %v1339 = vpop.permute.xlu0 %1338
        %1341 = vset.pattern.permute.xlu0 3
        %1342 = vperm.xlu0 %1341, %v254
        %v1343 = vpop.permute.xlu0 %1342
        %1345 = vset.pattern.permute.xlu0 3
        %1346 = vperm.xlu0 %1345, %v255
        %v1347 = vpop.permute.xlu0 %1346
        %1349 = vset.pattern.permute.xlu0 3
        %1350 = vperm.xlu0 %1349, %v256
        %v1351 = vpop.permute.xlu0 %1350
        %1353 = vset.pattern.permute.xlu0 3
        %1354 = vperm.xlu0 %1353, %v257
        %v1355 = vpop.permute.xlu0 %1354
        %1357 = vset.pattern.permute.xlu0 3
        %1358 = vperm.xlu0 %1357, %v258
        %v1359 = vpop.permute.xlu0 %1358
        %1361 = vset.pattern.permute.xlu0 3
        %1362 = vperm.xlu0 %1361, %v259
        %v1363 = vpop.permute.xlu0 %1362
        %1365 = vset.pattern.permute.xlu0 3
        %1366 = vperm.xlu0 %1365, %v260
        %v1367 = vpop.permute.xlu0 %1366
        %1369 = vset.pattern.permute.xlu0 3
        %1370 = vperm.xlu0 %1369, %v261
        %v1371 = vpop.permute.xlu0 %1370
        %1373 = vset.pattern.permute.xlu0 3
        %1374 = vperm.xlu0 %1373, %v262
        %v1375 = vpop.permute.xlu0 %1374
        %1377 = vset.pattern.permute.xlu0 3
        %1378 = vperm.xlu0 %1377, %v263
        %v1379 = vpop.permute.xlu0 %1378
        %1381 = vset.pattern.permute.xlu0 3
        %1382 = vperm.xlu0 %1381, %v264
        %v1383 = vpop.permute.xlu0 %1382
        %v1385 = vlaneseq
        %v1386 = vshrl.u32 %v1385, 7
        %v1387 = vsub.s32 3, %v1386
        %v1388 = vrot.slane %v265, %v1387
        %v1389 = vlaneseq
        %v1390 = vshrl.u32 %v1389, 7
        %v1391 = vsub.s32 3, %v1390
        %v1392 = vrot.slane %v266, %v1391
        %v1393 = vlaneseq
        %v1394 = vshrl.u32 %v1393, 7
        %v1395 = vsub.s32 3, %v1394
        %v1396 = vrot.slane %v267, %v1395
        %v1397 = vlaneseq
        %v1398 = vshrl.u32 %v1397, 7
        %v1399 = vsub.s32 3, %v1398
        %v1400 = vrot.slane %v268, %v1399
        %v1401 = vlaneseq
        %v1402 = vshrl.u32 %v1401, 7
        %v1403 = vsub.s32 3, %v1402
        %v1404 = vrot.slane %v269, %v1403
        %v1405 = vlaneseq
        %v1406 = vshrl.u32 %v1405, 7
        %v1407 = vsub.s32 3, %v1406
        %v1408 = vrot.slane %v270, %v1407
        %v1409 = vlaneseq
        %v1410 = vshrl.u32 %v1409, 7
        %v1411 = vsub.s32 3, %v1410
        %v1412 = vrot.slane %v271, %v1411
        %v1413 = vlaneseq
        %v1414 = vshrl.u32 %v1413, 7
        %v1415 = vsub.s32 3, %v1414
        %v1416 = vrot.slane %v272, %v1415
        %v1417 = vlaneseq
        %v1418 = vshrl.u32 %v1417, 7
        %v1419 = vsub.s32 3, %v1418
        %v1420 = vrot.slane %v273, %v1419
        %v1421 = vlaneseq
        %v1422 = vshrl.u32 %v1421, 7
        %v1423 = vsub.s32 3, %v1422
        %v1424 = vrot.slane %v274, %v1423
        %v1425 = vlaneseq
        %v1426 = vshrl.u32 %v1425, 7
        %v1427 = vsub.s32 3, %v1426
        %v1428 = vrot.slane %v275, %v1427
        %v1429 = vlaneseq
        %v1430 = vshrl.u32 %v1429, 7
        %v1431 = vsub.s32 3, %v1430
        %v1432 = vrot.slane %v276, %v1431
        %v1433 = vlaneseq
        %v1434 = vshrl.u32 %v1433, 7
        %v1435 = vsub.s32 3, %v1434
        %v1436 = vrot.slane %v277, %v1435
        %v1437 = vlaneseq
        %v1438 = vshrl.u32 %v1437, 7
        %v1439 = vsub.s32 3, %v1438
        %v1440 = vrot.slane %v278, %v1439
        %v1441 = vlaneseq
        %v1442 = vshrl.u32 %v1441, 7
        %v1443 = vsub.s32 3, %v1442
        %v1444 = vrot.slane %v279, %v1443
        %v1445 = vlaneseq
        %v1446 = vshrl.u32 %v1445, 7
        %v1447 = vsub.s32 3, %v1446
        %v1448 = vrot.slane %v280, %v1447
        %v1449 = vlaneseq
        %v1450 = vshrl.u32 %v1449, 7
        %v1451 = vsub.s32 3, %v1450
        %v1452 = vrot.slane %v281, %v1451
        %v1453 = vlaneseq
        %v1454 = vshrl.u32 %v1453, 7
        %v1455 = vsub.s32 3, %v1454
        %v1456 = vrot.slane %v282, %v1455
        %v1457 = vlaneseq
        %v1458 = vshrl.u32 %v1457, 7
        %v1459 = vsub.s32 3, %v1458
        %v1460 = vrot.slane %v283, %v1459
        %v1461 = vlaneseq
        %v1462 = vshrl.u32 %v1461, 7
        %v1463 = vsub.s32 3, %v1462
        %v1464 = vrot.slane %v284, %v1463
        %v1465 = vlaneseq
        %v1466 = vshrl.u32 %v1465, 7
        %v1467 = vsub.s32 3, %v1466
        %v1468 = vrot.slane %v285, %v1467
        %v1469 = vlaneseq
        %v1470 = vshrl.u32 %v1469, 7
        %v1471 = vsub.s32 3, %v1470
        %v1472 = vrot.slane %v286, %v1471
        %v1473 = vlaneseq
        %v1474 = vshrl.u32 %v1473, 7
        %v1475 = vsub.s32 3, %v1474
        %v1476 = vrot.slane %v287, %v1475
        %v1477 = vlaneseq
        %v1478 = vshrl.u32 %v1477, 7
        %v1479 = vsub.s32 3, %v1478
        %v1480 = vrot.slane %v288, %v1479
        %v1481 = vlaneseq
        %v1482 = vshrl.u32 %v1481, 7
        %v1483 = vsub.s32 3, %v1482
        %v1484 = vrot.slane %v289, %v1483
        %v1485 = vlaneseq
        %v1486 = vshrl.u32 %v1485, 7
        %v1487 = vsub.s32 3, %v1486
        %v1488 = vrot.slane %v290, %v1487
        %v1489 = vlaneseq
        %v1490 = vshrl.u32 %v1489, 7
        %v1491 = vsub.s32 3, %v1490
        %v1492 = vrot.slane %v291, %v1491
        %v1493 = vlaneseq
        %v1494 = vshrl.u32 %v1493, 7
        %v1495 = vsub.s32 3, %v1494
        %v1496 = vrot.slane %v292, %v1495
        %v1497 = vlaneseq
        %v1498 = vshrl.u32 %v1497, 7
        %v1499 = vsub.s32 3, %v1498
        %v1500 = vrot.slane %v293, %v1499
        %v1501 = vlaneseq
        %v1502 = vshrl.u32 %v1501, 7
        %v1503 = vsub.s32 3, %v1502
        %v1504 = vrot.slane %v294, %v1503
        %v1505 = vlaneseq
        %v1506 = vshrl.u32 %v1505, 7
        %v1507 = vsub.s32 3, %v1506
        %v1508 = vrot.slane %v295, %v1507
        %v1509 = vlaneseq
        %v1510 = vshrl.u32 %v1509, 7
        %v1511 = vsub.s32 3, %v1510
        %v1512 = vrot.slane %v296, %v1511
        %v1513 = vmul.f32 %v1259, %v1388
        %v1514 = vmul.f32 %v1263, %v1392
        %v1515 = vmul.f32 %v1267, %v1396
        %v1516 = vmul.f32 %v1271, %v1400
        %v1517 = vmul.f32 %v1275, %v1404
        %v1518 = vmul.f32 %v1279, %v1408
        %v1519 = vmul.f32 %v1283, %v1412
        %v1520 = vmul.f32 %v1287, %v1416
        %v1521 = vmul.f32 %v1291, %v1420
        %v1522 = vmul.f32 %v1295, %v1424
        %v1523 = vmul.f32 %v1299, %v1428
        %v1524 = vmul.f32 %v1303, %v1432
        %v1525 = vmul.f32 %v1307, %v1436
        %v1526 = vmul.f32 %v1311, %v1440
        %v1527 = vmul.f32 %v1315, %v1444
        %v1528 = vmul.f32 %v1319, %v1448
        %v1529 = vmul.f32 %v1323, %v1452
        %v1530 = vmul.f32 %v1327, %v1456
        %v1531 = vmul.f32 %v1331, %v1460
        %v1532 = vmul.f32 %v1335, %v1464
        %v1533 = vmul.f32 %v1339, %v1468
        %v1534 = vmul.f32 %v1343, %v1472
        %v1535 = vmul.f32 %v1347, %v1476
        %v1536 = vmul.f32 %v1351, %v1480
        %v1537 = vmul.f32 %v1355, %v1484
        %v1538 = vmul.f32 %v1359, %v1488
        %v1539 = vmul.f32 %v1363, %v1492
        %v1540 = vmul.f32 %v1367, %v1496
        %v1541 = vmul.f32 %v1371, %v1500
        %v1542 = vmul.f32 %v1375, %v1504
        %v1543 = vmul.f32 %v1379, %v1508
        %v1544 = vmul.f32 %v1383, %v1512
        %v1545 = vadd.f32 %v1225, %v1513
        %v1546 = vadd.f32 %v1226, %v1514
        %v1547 = vadd.f32 %v1227, %v1515
        %v1548 = vadd.f32 %v1228, %v1516
        %v1549 = vadd.f32 %v1229, %v1517
        %v1550 = vadd.f32 %v1230, %v1518
        %v1551 = vadd.f32 %v1231, %v1519
        %v1552 = vadd.f32 %v1232, %v1520
        %v1553 = vadd.f32 %v1233, %v1521
        %v1554 = vadd.f32 %v1234, %v1522
        %v1555 = vadd.f32 %v1235, %v1523
        %v1556 = vadd.f32 %v1236, %v1524
        %v1557 = vadd.f32 %v1237, %v1525
        %v1558 = vadd.f32 %v1238, %v1526
        %v1559 = vadd.f32 %v1239, %v1527
        %v1560 = vadd.f32 %v1240, %v1528
        %v1561 = vadd.f32 %v1241, %v1529
        %v1562 = vadd.f32 %v1242, %v1530
        %v1563 = vadd.f32 %v1243, %v1531
        %v1564 = vadd.f32 %v1244, %v1532
        %v1565 = vadd.f32 %v1245, %v1533
        %v1566 = vadd.f32 %v1246, %v1534
        %v1567 = vadd.f32 %v1247, %v1535
        %v1568 = vadd.f32 %v1248, %v1536
        %v1569 = vadd.f32 %v1249, %v1537
        %v1570 = vadd.f32 %v1250, %v1538
        %v1571 = vadd.f32 %v1251, %v1539
        %v1572 = vadd.f32 %v1252, %v1540
        %v1573 = vadd.f32 %v1253, %v1541
        %v1574 = vadd.f32 %v1254, %v1542
        %v1575 = vadd.f32 %v1255, %v1543
        %v1576 = vadd.f32 %v1256, %v1544
        %1577 = vset.pattern.permute.xlu0 4
        %1578 = vperm.xlu0 %1577, %v233
        %v1579 = vpop.permute.xlu0 %1578
        %1581 = vset.pattern.permute.xlu0 4
        %1582 = vperm.xlu0 %1581, %v234
        %v1583 = vpop.permute.xlu0 %1582
        %1585 = vset.pattern.permute.xlu0 4
        %1586 = vperm.xlu0 %1585, %v235
        %v1587 = vpop.permute.xlu0 %1586
        %1589 = vset.pattern.permute.xlu0 4
        %1590 = vperm.xlu0 %1589, %v236
        %v1591 = vpop.permute.xlu0 %1590
        %1593 = vset.pattern.permute.xlu0 4
        %1594 = vperm.xlu0 %1593, %v237
        %v1595 = vpop.permute.xlu0 %1594
        %1597 = vset.pattern.permute.xlu0 4
        %1598 = vperm.xlu0 %1597, %v238
        %v1599 = vpop.permute.xlu0 %1598
        %1601 = vset.pattern.permute.xlu0 4
        %1602 = vperm.xlu0 %1601, %v239
        %v1603 = vpop.permute.xlu0 %1602
        %1605 = vset.pattern.permute.xlu0 4
        %1606 = vperm.xlu0 %1605, %v240
        %v1607 = vpop.permute.xlu0 %1606
        %1609 = vset.pattern.permute.xlu0 4
        %1610 = vperm.xlu0 %1609, %v241
        %v1611 = vpop.permute.xlu0 %1610
        %1613 = vset.pattern.permute.xlu0 4
        %1614 = vperm.xlu0 %1613, %v242
        %v1615 = vpop.permute.xlu0 %1614
        %1617 = vset.pattern.permute.xlu0 4
        %1618 = vperm.xlu0 %1617, %v243
        %v1619 = vpop.permute.xlu0 %1618
        %1621 = vset.pattern.permute.xlu0 4
        %1622 = vperm.xlu0 %1621, %v244
        %v1623 = vpop.permute.xlu0 %1622
        %1625 = vset.pattern.permute.xlu0 4
        %1626 = vperm.xlu0 %1625, %v245
        %v1627 = vpop.permute.xlu0 %1626
        %1629 = vset.pattern.permute.xlu0 4
        %1630 = vperm.xlu0 %1629, %v246
        %v1631 = vpop.permute.xlu0 %1630
        %1633 = vset.pattern.permute.xlu0 4
        %1634 = vperm.xlu0 %1633, %v247
        %v1635 = vpop.permute.xlu0 %1634
        %1637 = vset.pattern.permute.xlu0 4
        %1638 = vperm.xlu0 %1637, %v248
        %v1639 = vpop.permute.xlu0 %1638
        %1641 = vset.pattern.permute.xlu0 4
        %1642 = vperm.xlu0 %1641, %v249
        %v1643 = vpop.permute.xlu0 %1642
        %1645 = vset.pattern.permute.xlu0 4
        %1646 = vperm.xlu0 %1645, %v250
        %v1647 = vpop.permute.xlu0 %1646
        %1649 = vset.pattern.permute.xlu0 4
        %1650 = vperm.xlu0 %1649, %v251
        %v1651 = vpop.permute.xlu0 %1650
        %1653 = vset.pattern.permute.xlu0 4
        %1654 = vperm.xlu0 %1653, %v252
        %v1655 = vpop.permute.xlu0 %1654
        %1657 = vset.pattern.permute.xlu0 4
        %1658 = vperm.xlu0 %1657, %v253
        %v1659 = vpop.permute.xlu0 %1658
        %1661 = vset.pattern.permute.xlu0 4
        %1662 = vperm.xlu0 %1661, %v254
        %v1663 = vpop.permute.xlu0 %1662
        %1665 = vset.pattern.permute.xlu0 4
        %1666 = vperm.xlu0 %1665, %v255
        %v1667 = vpop.permute.xlu0 %1666
        %1669 = vset.pattern.permute.xlu0 4
        %1670 = vperm.xlu0 %1669, %v256
        %v1671 = vpop.permute.xlu0 %1670
        %1673 = vset.pattern.permute.xlu0 4
        %1674 = vperm.xlu0 %1673, %v257
        %v1675 = vpop.permute.xlu0 %1674
        %1677 = vset.pattern.permute.xlu0 4
        %1678 = vperm.xlu0 %1677, %v258
        %v1679 = vpop.permute.xlu0 %1678
        %1681 = vset.pattern.permute.xlu0 4
        %1682 = vperm.xlu0 %1681, %v259
        %v1683 = vpop.permute.xlu0 %1682
        %1685 = vset.pattern.permute.xlu0 4
        %1686 = vperm.xlu0 %1685, %v260
        %v1687 = vpop.permute.xlu0 %1686
        %1689 = vset.pattern.permute.xlu0 4
        %1690 = vperm.xlu0 %1689, %v261
        %v1691 = vpop.permute.xlu0 %1690
        %1693 = vset.pattern.permute.xlu0 4
        %1694 = vperm.xlu0 %1693, %v262
        %v1695 = vpop.permute.xlu0 %1694
        %1697 = vset.pattern.permute.xlu0 4
        %1698 = vperm.xlu0 %1697, %v263
        %v1699 = vpop.permute.xlu0 %1698
        %1701 = vset.pattern.permute.xlu0 4
        %1702 = vperm.xlu0 %1701, %v264
        %v1703 = vpop.permute.xlu0 %1702
        %v1705 = vlaneseq
        %v1706 = vshrl.u32 %v1705, 7
        %v1707 = vsub.s32 4, %v1706
        %v1708 = vrot.slane %v265, %v1707
        %v1709 = vlaneseq
        %v1710 = vshrl.u32 %v1709, 7
        %v1711 = vsub.s32 4, %v1710
        %v1712 = vrot.slane %v266, %v1711
        %v1713 = vlaneseq
        %v1714 = vshrl.u32 %v1713, 7
        %v1715 = vsub.s32 4, %v1714
        %v1716 = vrot.slane %v267, %v1715
        %v1717 = vlaneseq
        %v1718 = vshrl.u32 %v1717, 7
        %v1719 = vsub.s32 4, %v1718
        %v1720 = vrot.slane %v268, %v1719
        %v1721 = vlaneseq
        %v1722 = vshrl.u32 %v1721, 7
        %v1723 = vsub.s32 4, %v1722
        %v1724 = vrot.slane %v269, %v1723
        %v1725 = vlaneseq
        %v1726 = vshrl.u32 %v1725, 7
        %v1727 = vsub.s32 4, %v1726
        %v1728 = vrot.slane %v270, %v1727
        %v1729 = vlaneseq
        %v1730 = vshrl.u32 %v1729, 7
        %v1731 = vsub.s32 4, %v1730
        %v1732 = vrot.slane %v271, %v1731
        %v1733 = vlaneseq
        %v1734 = vshrl.u32 %v1733, 7
        %v1735 = vsub.s32 4, %v1734
        %v1736 = vrot.slane %v272, %v1735
        %v1737 = vlaneseq
        %v1738 = vshrl.u32 %v1737, 7
        %v1739 = vsub.s32 4, %v1738
        %v1740 = vrot.slane %v273, %v1739
        %v1741 = vlaneseq
        %v1742 = vshrl.u32 %v1741, 7
        %v1743 = vsub.s32 4, %v1742
        %v1744 = vrot.slane %v274, %v1743
        %v1745 = vlaneseq
        %v1746 = vshrl.u32 %v1745, 7
        %v1747 = vsub.s32 4, %v1746
        %v1748 = vrot.slane %v275, %v1747
        %v1749 = vlaneseq
        %v1750 = vshrl.u32 %v1749, 7
        %v1751 = vsub.s32 4, %v1750
        %v1752 = vrot.slane %v276, %v1751
        %v1753 = vlaneseq
        %v1754 = vshrl.u32 %v1753, 7
        %v1755 = vsub.s32 4, %v1754
        %v1756 = vrot.slane %v277, %v1755
        %v1757 = vlaneseq
        %v1758 = vshrl.u32 %v1757, 7
        %v1759 = vsub.s32 4, %v1758
        %v1760 = vrot.slane %v278, %v1759
        %v1761 = vlaneseq
        %v1762 = vshrl.u32 %v1761, 7
        %v1763 = vsub.s32 4, %v1762
        %v1764 = vrot.slane %v279, %v1763
        %v1765 = vlaneseq
        %v1766 = vshrl.u32 %v1765, 7
        %v1767 = vsub.s32 4, %v1766
        %v1768 = vrot.slane %v280, %v1767
        %v1769 = vlaneseq
        %v1770 = vshrl.u32 %v1769, 7
        %v1771 = vsub.s32 4, %v1770
        %v1772 = vrot.slane %v281, %v1771
        %v1773 = vlaneseq
        %v1774 = vshrl.u32 %v1773, 7
        %v1775 = vsub.s32 4, %v1774
        %v1776 = vrot.slane %v282, %v1775
        %v1777 = vlaneseq
        %v1778 = vshrl.u32 %v1777, 7
        %v1779 = vsub.s32 4, %v1778
        %v1780 = vrot.slane %v283, %v1779
        %v1781 = vlaneseq
        %v1782 = vshrl.u32 %v1781, 7
        %v1783 = vsub.s32 4, %v1782
        %v1784 = vrot.slane %v284, %v1783
        %v1785 = vlaneseq
        %v1786 = vshrl.u32 %v1785, 7
        %v1787 = vsub.s32 4, %v1786
        %v1788 = vrot.slane %v285, %v1787
        %v1789 = vlaneseq
        %v1790 = vshrl.u32 %v1789, 7
        %v1791 = vsub.s32 4, %v1790
        %v1792 = vrot.slane %v286, %v1791
        %v1793 = vlaneseq
        %v1794 = vshrl.u32 %v1793, 7
        %v1795 = vsub.s32 4, %v1794
        %v1796 = vrot.slane %v287, %v1795
        %v1797 = vlaneseq
        %v1798 = vshrl.u32 %v1797, 7
        %v1799 = vsub.s32 4, %v1798
        %v1800 = vrot.slane %v288, %v1799
        %v1801 = vlaneseq
        %v1802 = vshrl.u32 %v1801, 7
        %v1803 = vsub.s32 4, %v1802
        %v1804 = vrot.slane %v289, %v1803
        %v1805 = vlaneseq
        %v1806 = vshrl.u32 %v1805, 7
        %v1807 = vsub.s32 4, %v1806
        %v1808 = vrot.slane %v290, %v1807
        %v1809 = vlaneseq
        %v1810 = vshrl.u32 %v1809, 7
        %v1811 = vsub.s32 4, %v1810
        %v1812 = vrot.slane %v291, %v1811
        %v1813 = vlaneseq
        %v1814 = vshrl.u32 %v1813, 7
        %v1815 = vsub.s32 4, %v1814
        %v1816 = vrot.slane %v292, %v1815
        %v1817 = vlaneseq
        %v1818 = vshrl.u32 %v1817, 7
        %v1819 = vsub.s32 4, %v1818
        %v1820 = vrot.slane %v293, %v1819
        %v1821 = vlaneseq
        %v1822 = vshrl.u32 %v1821, 7
        %v1823 = vsub.s32 4, %v1822
        %v1824 = vrot.slane %v294, %v1823
        %v1825 = vlaneseq
        %v1826 = vshrl.u32 %v1825, 7
        %v1827 = vsub.s32 4, %v1826
        %v1828 = vrot.slane %v295, %v1827
        %v1829 = vlaneseq
        %v1830 = vshrl.u32 %v1829, 7
        %v1831 = vsub.s32 4, %v1830
        %v1832 = vrot.slane %v296, %v1831
        %v1833 = vmul.f32 %v1579, %v1708
        %v1834 = vmul.f32 %v1583, %v1712
        %v1835 = vmul.f32 %v1587, %v1716
        %v1836 = vmul.f32 %v1591, %v1720
        %v1837 = vmul.f32 %v1595, %v1724
        %v1838 = vmul.f32 %v1599, %v1728
        %v1839 = vmul.f32 %v1603, %v1732
        %v1840 = vmul.f32 %v1607, %v1736
        %v1841 = vmul.f32 %v1611, %v1740
        %v1842 = vmul.f32 %v1615, %v1744
        %v1843 = vmul.f32 %v1619, %v1748
        %v1844 = vmul.f32 %v1623, %v1752
        %v1845 = vmul.f32 %v1627, %v1756
        %v1846 = vmul.f32 %v1631, %v1760
        %v1847 = vmul.f32 %v1635, %v1764
        %v1848 = vmul.f32 %v1639, %v1768
        %v1849 = vmul.f32 %v1643, %v1772
        %v1850 = vmul.f32 %v1647, %v1776
        %v1851 = vmul.f32 %v1651, %v1780
        %v1852 = vmul.f32 %v1655, %v1784
        %v1853 = vmul.f32 %v1659, %v1788
        %v1854 = vmul.f32 %v1663, %v1792
        %v1855 = vmul.f32 %v1667, %v1796
        %v1856 = vmul.f32 %v1671, %v1800
        %v1857 = vmul.f32 %v1675, %v1804
        %v1858 = vmul.f32 %v1679, %v1808
        %v1859 = vmul.f32 %v1683, %v1812
        %v1860 = vmul.f32 %v1687, %v1816
        %v1861 = vmul.f32 %v1691, %v1820
        %v1862 = vmul.f32 %v1695, %v1824
        %v1863 = vmul.f32 %v1699, %v1828
        %v1864 = vmul.f32 %v1703, %v1832
        %v1865 = vadd.f32 %v1545, %v1833
        %v1866 = vadd.f32 %v1546, %v1834
        %v1867 = vadd.f32 %v1547, %v1835
        %v1868 = vadd.f32 %v1548, %v1836
        %v1869 = vadd.f32 %v1549, %v1837
        %v1870 = vadd.f32 %v1550, %v1838
        %v1871 = vadd.f32 %v1551, %v1839
        %v1872 = vadd.f32 %v1552, %v1840
        %v1873 = vadd.f32 %v1553, %v1841
        %v1874 = vadd.f32 %v1554, %v1842
        %v1875 = vadd.f32 %v1555, %v1843
        %v1876 = vadd.f32 %v1556, %v1844
        %v1877 = vadd.f32 %v1557, %v1845
        %v1878 = vadd.f32 %v1558, %v1846
        %v1879 = vadd.f32 %v1559, %v1847
        %v1880 = vadd.f32 %v1560, %v1848
        %v1881 = vadd.f32 %v1561, %v1849
        %v1882 = vadd.f32 %v1562, %v1850
        %v1883 = vadd.f32 %v1563, %v1851
        %v1884 = vadd.f32 %v1564, %v1852
        %v1885 = vadd.f32 %v1565, %v1853
        %v1886 = vadd.f32 %v1566, %v1854
        %v1887 = vadd.f32 %v1567, %v1855
        %v1888 = vadd.f32 %v1568, %v1856
        %v1889 = vadd.f32 %v1569, %v1857
        %v1890 = vadd.f32 %v1570, %v1858
        %v1891 = vadd.f32 %v1571, %v1859
        %v1892 = vadd.f32 %v1572, %v1860
        %v1893 = vadd.f32 %v1573, %v1861
        %v1894 = vadd.f32 %v1574, %v1862
        %v1895 = vadd.f32 %v1575, %v1863
        %v1896 = vadd.f32 %v1576, %v1864
        %1897 = vset.pattern.permute.xlu0 5
        %1898 = vperm.xlu0 %1897, %v233
        %v1899 = vpop.permute.xlu0 %1898
        %1901 = vset.pattern.permute.xlu0 5
        %1902 = vperm.xlu0 %1901, %v234
        %v1903 = vpop.permute.xlu0 %1902
        %1905 = vset.pattern.permute.xlu0 5
        %1906 = vperm.xlu0 %1905, %v235
        %v1907 = vpop.permute.xlu0 %1906
        %1909 = vset.pattern.permute.xlu0 5
        %1910 = vperm.xlu0 %1909, %v236
        %v1911 = vpop.permute.xlu0 %1910
        %1913 = vset.pattern.permute.xlu0 5
        %1914 = vperm.xlu0 %1913, %v237
        %v1915 = vpop.permute.xlu0 %1914
        %1917 = vset.pattern.permute.xlu0 5
        %1918 = vperm.xlu0 %1917, %v238
        %v1919 = vpop.permute.xlu0 %1918
        %1921 = vset.pattern.permute.xlu0 5
        %1922 = vperm.xlu0 %1921, %v239
        %v1923 = vpop.permute.xlu0 %1922
        %1925 = vset.pattern.permute.xlu0 5
        %1926 = vperm.xlu0 %1925, %v240
        %v1927 = vpop.permute.xlu0 %1926
        %1929 = vset.pattern.permute.xlu0 5
        %1930 = vperm.xlu0 %1929, %v241
        %v1931 = vpop.permute.xlu0 %1930
        %1933 = vset.pattern.permute.xlu0 5
        %1934 = vperm.xlu0 %1933, %v242
        %v1935 = vpop.permute.xlu0 %1934
        %1937 = vset.pattern.permute.xlu0 5
        %1938 = vperm.xlu0 %1937, %v243
        %v1939 = vpop.permute.xlu0 %1938
        %1941 = vset.pattern.permute.xlu0 5
        %1942 = vperm.xlu0 %1941, %v244
        %v1943 = vpop.permute.xlu0 %1942
        %1945 = vset.pattern.permute.xlu0 5
        %1946 = vperm.xlu0 %1945, %v245
        %v1947 = vpop.permute.xlu0 %1946
        %1949 = vset.pattern.permute.xlu0 5
        %1950 = vperm.xlu0 %1949, %v246
        %v1951 = vpop.permute.xlu0 %1950
        %1953 = vset.pattern.permute.xlu0 5
        %1954 = vperm.xlu0 %1953, %v247
        %v1955 = vpop.permute.xlu0 %1954
        %1957 = vset.pattern.permute.xlu0 5
        %1958 = vperm.xlu0 %1957, %v248
        %v1959 = vpop.permute.xlu0 %1958
        %1961 = vset.pattern.permute.xlu0 5
        %1962 = vperm.xlu0 %1961, %v249
        %v1963 = vpop.permute.xlu0 %1962
        %1965 = vset.pattern.permute.xlu0 5
        %1966 = vperm.xlu0 %1965, %v250
        %v1967 = vpop.permute.xlu0 %1966
        %1969 = vset.pattern.permute.xlu0 5
        %1970 = vperm.xlu0 %1969, %v251
        %v1971 = vpop.permute.xlu0 %1970
        %1973 = vset.pattern.permute.xlu0 5
        %1974 = vperm.xlu0 %1973, %v252
        %v1975 = vpop.permute.xlu0 %1974
        %1977 = vset.pattern.permute.xlu0 5
        %1978 = vperm.xlu0 %1977, %v253
        %v1979 = vpop.permute.xlu0 %1978
        %1981 = vset.pattern.permute.xlu0 5
        %1982 = vperm.xlu0 %1981, %v254
        %v1983 = vpop.permute.xlu0 %1982
        %1985 = vset.pattern.permute.xlu0 5
        %1986 = vperm.xlu0 %1985, %v255
        %v1987 = vpop.permute.xlu0 %1986
        %1989 = vset.pattern.permute.xlu0 5
        %1990 = vperm.xlu0 %1989, %v256
        %v1991 = vpop.permute.xlu0 %1990
        %1993 = vset.pattern.permute.xlu0 5
        %1994 = vperm.xlu0 %1993, %v257
        %v1995 = vpop.permute.xlu0 %1994
        %1997 = vset.pattern.permute.xlu0 5
        %1998 = vperm.xlu0 %1997, %v258
        %v1999 = vpop.permute.xlu0 %1998
        %2001 = vset.pattern.permute.xlu0 5
        %2002 = vperm.xlu0 %2001, %v259
        %v2003 = vpop.permute.xlu0 %2002
        %2005 = vset.pattern.permute.xlu0 5
        %2006 = vperm.xlu0 %2005, %v260
        %v2007 = vpop.permute.xlu0 %2006
        %2009 = vset.pattern.permute.xlu0 5
        %2010 = vperm.xlu0 %2009, %v261
        %v2011 = vpop.permute.xlu0 %2010
        %2013 = vset.pattern.permute.xlu0 5
        %2014 = vperm.xlu0 %2013, %v262
        %v2015 = vpop.permute.xlu0 %2014
        %2017 = vset.pattern.permute.xlu0 5
        %2018 = vperm.xlu0 %2017, %v263
        %v2019 = vpop.permute.xlu0 %2018
        %2021 = vset.pattern.permute.xlu0 5
        %2022 = vperm.xlu0 %2021, %v264
        %v2023 = vpop.permute.xlu0 %2022
        %v2025 = vlaneseq
        %v2026 = vshrl.u32 %v2025, 7
        %v2027 = vsub.s32 5, %v2026
        %v2028 = vrot.slane %v265, %v2027
        %v2029 = vlaneseq
        %v2030 = vshrl.u32 %v2029, 7
        %v2031 = vsub.s32 5, %v2030
        %v2032 = vrot.slane %v266, %v2031
        %v2033 = vlaneseq
        %v2034 = vshrl.u32 %v2033, 7
        %v2035 = vsub.s32 5, %v2034
        %v2036 = vrot.slane %v267, %v2035
        %v2037 = vlaneseq
        %v2038 = vshrl.u32 %v2037, 7
        %v2039 = vsub.s32 5, %v2038
        %v2040 = vrot.slane %v268, %v2039
        %v2041 = vlaneseq
        %v2042 = vshrl.u32 %v2041, 7
        %v2043 = vsub.s32 5, %v2042
        %v2044 = vrot.slane %v269, %v2043
        %v2045 = vlaneseq
        %v2046 = vshrl.u32 %v2045, 7
        %v2047 = vsub.s32 5, %v2046
        %v2048 = vrot.slane %v270, %v2047
        %v2049 = vlaneseq
        %v2050 = vshrl.u32 %v2049, 7
        %v2051 = vsub.s32 5, %v2050
        %v2052 = vrot.slane %v271, %v2051
        %v2053 = vlaneseq
        %v2054 = vshrl.u32 %v2053, 7
        %v2055 = vsub.s32 5, %v2054
        %v2056 = vrot.slane %v272, %v2055
        %v2057 = vlaneseq
        %v2058 = vshrl.u32 %v2057, 7
        %v2059 = vsub.s32 5, %v2058
        %v2060 = vrot.slane %v273, %v2059
        %v2061 = vlaneseq
        %v2062 = vshrl.u32 %v2061, 7
        %v2063 = vsub.s32 5, %v2062
        %v2064 = vrot.slane %v274, %v2063
        %v2065 = vlaneseq
        %v2066 = vshrl.u32 %v2065, 7
        %v2067 = vsub.s32 5, %v2066
        %v2068 = vrot.slane %v275, %v2067
        %v2069 = vlaneseq
        %v2070 = vshrl.u32 %v2069, 7
        %v2071 = vsub.s32 5, %v2070
        %v2072 = vrot.slane %v276, %v2071
        %v2073 = vlaneseq
        %v2074 = vshrl.u32 %v2073, 7
        %v2075 = vsub.s32 5, %v2074
        %v2076 = vrot.slane %v277, %v2075
        %v2077 = vlaneseq
        %v2078 = vshrl.u32 %v2077, 7
        %v2079 = vsub.s32 5, %v2078
        %v2080 = vrot.slane %v278, %v2079
        %v2081 = vlaneseq
        %v2082 = vshrl.u32 %v2081, 7
        %v2083 = vsub.s32 5, %v2082
        %v2084 = vrot.slane %v279, %v2083
        %v2085 = vlaneseq
        %v2086 = vshrl.u32 %v2085, 7
        %v2087 = vsub.s32 5, %v2086
        %v2088 = vrot.slane %v280, %v2087
        %v2089 = vlaneseq
        %v2090 = vshrl.u32 %v2089, 7
        %v2091 = vsub.s32 5, %v2090
        %v2092 = vrot.slane %v281, %v2091
        %v2093 = vlaneseq
        %v2094 = vshrl.u32 %v2093, 7
        %v2095 = vsub.s32 5, %v2094
        %v2096 = vrot.slane %v282, %v2095
        %v2097 = vlaneseq
        %v2098 = vshrl.u32 %v2097, 7
        %v2099 = vsub.s32 5, %v2098
        %v2100 = vrot.slane %v283, %v2099
        %v2101 = vlaneseq
        %v2102 = vshrl.u32 %v2101, 7
        %v2103 = vsub.s32 5, %v2102
        %v2104 = vrot.slane %v284, %v2103
        %v2105 = vlaneseq
        %v2106 = vshrl.u32 %v2105, 7
        %v2107 = vsub.s32 5, %v2106
        %v2108 = vrot.slane %v285, %v2107
        %v2109 = vlaneseq
        %v2110 = vshrl.u32 %v2109, 7
        %v2111 = vsub.s32 5, %v2110
        %v2112 = vrot.slane %v286, %v2111
        %v2113 = vlaneseq
        %v2114 = vshrl.u32 %v2113, 7
        %v2115 = vsub.s32 5, %v2114
        %v2116 = vrot.slane %v287, %v2115
        %v2117 = vlaneseq
        %v2118 = vshrl.u32 %v2117, 7
        %v2119 = vsub.s32 5, %v2118
        %v2120 = vrot.slane %v288, %v2119
        %v2121 = vlaneseq
        %v2122 = vshrl.u32 %v2121, 7
        %v2123 = vsub.s32 5, %v2122
        %v2124 = vrot.slane %v289, %v2123
        %v2125 = vlaneseq
        %v2126 = vshrl.u32 %v2125, 7
        %v2127 = vsub.s32 5, %v2126
        %v2128 = vrot.slane %v290, %v2127
        %v2129 = vlaneseq
        %v2130 = vshrl.u32 %v2129, 7
        %v2131 = vsub.s32 5, %v2130
        %v2132 = vrot.slane %v291, %v2131
        %v2133 = vlaneseq
        %v2134 = vshrl.u32 %v2133, 7
        %v2135 = vsub.s32 5, %v2134
        %v2136 = vrot.slane %v292, %v2135
        %v2137 = vlaneseq
        %v2138 = vshrl.u32 %v2137, 7
        %v2139 = vsub.s32 5, %v2138
        %v2140 = vrot.slane %v293, %v2139
        %v2141 = vlaneseq
        %v2142 = vshrl.u32 %v2141, 7
        %v2143 = vsub.s32 5, %v2142
        %v2144 = vrot.slane %v294, %v2143
        %v2145 = vlaneseq
        %v2146 = vshrl.u32 %v2145, 7
        %v2147 = vsub.s32 5, %v2146
        %v2148 = vrot.slane %v295, %v2147
        %v2149 = vlaneseq
        %v2150 = vshrl.u32 %v2149, 7
        %v2151 = vsub.s32 5, %v2150
        %v2152 = vrot.slane %v296, %v2151
        %v2153 = vmul.f32 %v1899, %v2028
        %v2154 = vmul.f32 %v1903, %v2032
        %v2155 = vmul.f32 %v1907, %v2036
        %v2156 = vmul.f32 %v1911, %v2040
        %v2157 = vmul.f32 %v1915, %v2044
        %v2158 = vmul.f32 %v1919, %v2048
        %v2159 = vmul.f32 %v1923, %v2052
        %v2160 = vmul.f32 %v1927, %v2056
        %v2161 = vmul.f32 %v1931, %v2060
        %v2162 = vmul.f32 %v1935, %v2064
        %v2163 = vmul.f32 %v1939, %v2068
        %v2164 = vmul.f32 %v1943, %v2072
        %v2165 = vmul.f32 %v1947, %v2076
        %v2166 = vmul.f32 %v1951, %v2080
        %v2167 = vmul.f32 %v1955, %v2084
        %v2168 = vmul.f32 %v1959, %v2088
        %v2169 = vmul.f32 %v1963, %v2092
        %v2170 = vmul.f32 %v1967, %v2096
        %v2171 = vmul.f32 %v1971, %v2100
        %v2172 = vmul.f32 %v1975, %v2104
        %v2173 = vmul.f32 %v1979, %v2108
        %v2174 = vmul.f32 %v1983, %v2112
        %v2175 = vmul.f32 %v1987, %v2116
        %v2176 = vmul.f32 %v1991, %v2120
        %v2177 = vmul.f32 %v1995, %v2124
        %v2178 = vmul.f32 %v1999, %v2128
        %v2179 = vmul.f32 %v2003, %v2132
        %v2180 = vmul.f32 %v2007, %v2136
        %v2181 = vmul.f32 %v2011, %v2140
        %v2182 = vmul.f32 %v2015, %v2144
        %v2183 = vmul.f32 %v2019, %v2148
        %v2184 = vmul.f32 %v2023, %v2152
        %v2185 = vadd.f32 %v1865, %v2153
        %v2186 = vadd.f32 %v1866, %v2154
        %v2187 = vadd.f32 %v1867, %v2155
        %v2188 = vadd.f32 %v1868, %v2156
        %v2189 = vadd.f32 %v1869, %v2157
        %v2190 = vadd.f32 %v1870, %v2158
        %v2191 = vadd.f32 %v1871, %v2159
        %v2192 = vadd.f32 %v1872, %v2160
        %v2193 = vadd.f32 %v1873, %v2161
        %v2194 = vadd.f32 %v1874, %v2162
        %v2195 = vadd.f32 %v1875, %v2163
        %v2196 = vadd.f32 %v1876, %v2164
        %v2197 = vadd.f32 %v1877, %v2165
        %v2198 = vadd.f32 %v1878, %v2166
        %v2199 = vadd.f32 %v1879, %v2167
        %v2200 = vadd.f32 %v1880, %v2168
        %v2201 = vadd.f32 %v1881, %v2169
        %v2202 = vadd.f32 %v1882, %v2170
        %v2203 = vadd.f32 %v1883, %v2171
        %v2204 = vadd.f32 %v1884, %v2172
        %v2205 = vadd.f32 %v1885, %v2173
        %v2206 = vadd.f32 %v1886, %v2174
        %v2207 = vadd.f32 %v1887, %v2175
        %v2208 = vadd.f32 %v1888, %v2176
        %v2209 = vadd.f32 %v1889, %v2177
        %v2210 = vadd.f32 %v1890, %v2178
        %v2211 = vadd.f32 %v1891, %v2179
        %v2212 = vadd.f32 %v1892, %v2180
        %v2213 = vadd.f32 %v1893, %v2181
        %v2214 = vadd.f32 %v1894, %v2182
        %v2215 = vadd.f32 %v1895, %v2183
        %v2216 = vadd.f32 %v1896, %v2184
        %2217 = vset.pattern.permute.xlu0 6
        %2218 = vperm.xlu0 %2217, %v233
        %v2219 = vpop.permute.xlu0 %2218
        %2221 = vset.pattern.permute.xlu0 6
        %2222 = vperm.xlu0 %2221, %v234
        %v2223 = vpop.permute.xlu0 %2222
        %2225 = vset.pattern.permute.xlu0 6
        %2226 = vperm.xlu0 %2225, %v235
        %v2227 = vpop.permute.xlu0 %2226
        %2229 = vset.pattern.permute.xlu0 6
        %2230 = vperm.xlu0 %2229, %v236
        %v2231 = vpop.permute.xlu0 %2230
        %2233 = vset.pattern.permute.xlu0 6
        %2234 = vperm.xlu0 %2233, %v237
        %v2235 = vpop.permute.xlu0 %2234
        %2237 = vset.pattern.permute.xlu0 6
        %2238 = vperm.xlu0 %2237, %v238
        %v2239 = vpop.permute.xlu0 %2238
        %2241 = vset.pattern.permute.xlu0 6
        %2242 = vperm.xlu0 %2241, %v239
        %v2243 = vpop.permute.xlu0 %2242
        %2245 = vset.pattern.permute.xlu0 6
        %2246 = vperm.xlu0 %2245, %v240
        %v2247 = vpop.permute.xlu0 %2246
        %2249 = vset.pattern.permute.xlu0 6
        %2250 = vperm.xlu0 %2249, %v241
        %v2251 = vpop.permute.xlu0 %2250
        %2253 = vset.pattern.permute.xlu0 6
        %2254 = vperm.xlu0 %2253, %v242
        %v2255 = vpop.permute.xlu0 %2254
        %2257 = vset.pattern.permute.xlu0 6
        %2258 = vperm.xlu0 %2257, %v243
        %v2259 = vpop.permute.xlu0 %2258
        %2261 = vset.pattern.permute.xlu0 6
        %2262 = vperm.xlu0 %2261, %v244
        %v2263 = vpop.permute.xlu0 %2262
        %2265 = vset.pattern.permute.xlu0 6
        %2266 = vperm.xlu0 %2265, %v245
        %v2267 = vpop.permute.xlu0 %2266
        %2269 = vset.pattern.permute.xlu0 6
        %2270 = vperm.xlu0 %2269, %v246
        %v2271 = vpop.permute.xlu0 %2270
        %2273 = vset.pattern.permute.xlu0 6
        %2274 = vperm.xlu0 %2273, %v247
        %v2275 = vpop.permute.xlu0 %2274
        %2277 = vset.pattern.permute.xlu0 6
        %2278 = vperm.xlu0 %2277, %v248
        %v2279 = vpop.permute.xlu0 %2278
        %2281 = vset.pattern.permute.xlu0 6
        %2282 = vperm.xlu0 %2281, %v249
        %v2283 = vpop.permute.xlu0 %2282
        %2285 = vset.pattern.permute.xlu0 6
        %2286 = vperm.xlu0 %2285, %v250
        %v2287 = vpop.permute.xlu0 %2286
        %2289 = vset.pattern.permute.xlu0 6
        %2290 = vperm.xlu0 %2289, %v251
        %v2291 = vpop.permute.xlu0 %2290
        %2293 = vset.pattern.permute.xlu0 6
        %2294 = vperm.xlu0 %2293, %v252
        %v2295 = vpop.permute.xlu0 %2294
        %2297 = vset.pattern.permute.xlu0 6
        %2298 = vperm.xlu0 %2297, %v253
        %v2299 = vpop.permute.xlu0 %2298
        %2301 = vset.pattern.permute.xlu0 6
        %2302 = vperm.xlu0 %2301, %v254
        %v2303 = vpop.permute.xlu0 %2302
        %2305 = vset.pattern.permute.xlu0 6
        %2306 = vperm.xlu0 %2305, %v255
        %v2307 = vpop.permute.xlu0 %2306
        %2309 = vset.pattern.permute.xlu0 6
        %2310 = vperm.xlu0 %2309, %v256
        %v2311 = vpop.permute.xlu0 %2310
        %2313 = vset.pattern.permute.xlu0 6
        %2314 = vperm.xlu0 %2313, %v257
        %v2315 = vpop.permute.xlu0 %2314
        %2317 = vset.pattern.permute.xlu0 6
        %2318 = vperm.xlu0 %2317, %v258
        %v2319 = vpop.permute.xlu0 %2318
        %2321 = vset.pattern.permute.xlu0 6
        %2322 = vperm.xlu0 %2321, %v259
        %v2323 = vpop.permute.xlu0 %2322
        %2325 = vset.pattern.permute.xlu0 6
        %2326 = vperm.xlu0 %2325, %v260
        %v2327 = vpop.permute.xlu0 %2326
        %2329 = vset.pattern.permute.xlu0 6
        %2330 = vperm.xlu0 %2329, %v261
        %v2331 = vpop.permute.xlu0 %2330
        %2333 = vset.pattern.permute.xlu0 6
        %2334 = vperm.xlu0 %2333, %v262
        %v2335 = vpop.permute.xlu0 %2334
        %2337 = vset.pattern.permute.xlu0 6
        %2338 = vperm.xlu0 %2337, %v263
        %v2339 = vpop.permute.xlu0 %2338
        %2341 = vset.pattern.permute.xlu0 6
        %2342 = vperm.xlu0 %2341, %v264
        %v2343 = vpop.permute.xlu0 %2342
        %v2345 = vlaneseq
        %v2346 = vshrl.u32 %v2345, 7
        %v2347 = vsub.s32 6, %v2346
        %v2348 = vrot.slane %v265, %v2347
        %v2349 = vlaneseq
        %v2350 = vshrl.u32 %v2349, 7
        %v2351 = vsub.s32 6, %v2350
        %v2352 = vrot.slane %v266, %v2351
        %v2353 = vlaneseq
        %v2354 = vshrl.u32 %v2353, 7
        %v2355 = vsub.s32 6, %v2354
        %v2356 = vrot.slane %v267, %v2355
        %v2357 = vlaneseq
        %v2358 = vshrl.u32 %v2357, 7
        %v2359 = vsub.s32 6, %v2358
        %v2360 = vrot.slane %v268, %v2359
        %v2361 = vlaneseq
        %v2362 = vshrl.u32 %v2361, 7
        %v2363 = vsub.s32 6, %v2362
        %v2364 = vrot.slane %v269, %v2363
        %v2365 = vlaneseq
        %v2366 = vshrl.u32 %v2365, 7
        %v2367 = vsub.s32 6, %v2366
        %v2368 = vrot.slane %v270, %v2367
        %v2369 = vlaneseq
        %v2370 = vshrl.u32 %v2369, 7
        %v2371 = vsub.s32 6, %v2370
        %v2372 = vrot.slane %v271, %v2371
        %v2373 = vlaneseq
        %v2374 = vshrl.u32 %v2373, 7
        %v2375 = vsub.s32 6, %v2374
        %v2376 = vrot.slane %v272, %v2375
        %v2377 = vlaneseq
        %v2378 = vshrl.u32 %v2377, 7
        %v2379 = vsub.s32 6, %v2378
        %v2380 = vrot.slane %v273, %v2379
        %v2381 = vlaneseq
        %v2382 = vshrl.u32 %v2381, 7
        %v2383 = vsub.s32 6, %v2382
        %v2384 = vrot.slane %v274, %v2383
        %v2385 = vlaneseq
        %v2386 = vshrl.u32 %v2385, 7
        %v2387 = vsub.s32 6, %v2386
        %v2388 = vrot.slane %v275, %v2387
        %v2389 = vlaneseq
        %v2390 = vshrl.u32 %v2389, 7
        %v2391 = vsub.s32 6, %v2390
        %v2392 = vrot.slane %v276, %v2391
        %v2393 = vlaneseq
        %v2394 = vshrl.u32 %v2393, 7
        %v2395 = vsub.s32 6, %v2394
        %v2396 = vrot.slane %v277, %v2395
        %v2397 = vlaneseq
        %v2398 = vshrl.u32 %v2397, 7
        %v2399 = vsub.s32 6, %v2398
        %v2400 = vrot.slane %v278, %v2399
        %v2401 = vlaneseq
        %v2402 = vshrl.u32 %v2401, 7
        %v2403 = vsub.s32 6, %v2402
        %v2404 = vrot.slane %v279, %v2403
        %v2405 = vlaneseq
        %v2406 = vshrl.u32 %v2405, 7
        %v2407 = vsub.s32 6, %v2406
        %v2408 = vrot.slane %v280, %v2407
        %v2409 = vlaneseq
        %v2410 = vshrl.u32 %v2409, 7
        %v2411 = vsub.s32 6, %v2410
        %v2412 = vrot.slane %v281, %v2411
        %v2413 = vlaneseq
        %v2414 = vshrl.u32 %v2413, 7
        %v2415 = vsub.s32 6, %v2414
        %v2416 = vrot.slane %v282, %v2415
        %v2417 = vlaneseq
        %v2418 = vshrl.u32 %v2417, 7
        %v2419 = vsub.s32 6, %v2418
        %v2420 = vrot.slane %v283, %v2419
        %v2421 = vlaneseq
        %v2422 = vshrl.u32 %v2421, 7
        %v2423 = vsub.s32 6, %v2422
        %v2424 = vrot.slane %v284, %v2423
        %v2425 = vlaneseq
        %v2426 = vshrl.u32 %v2425, 7
        %v2427 = vsub.s32 6, %v2426
        %v2428 = vrot.slane %v285, %v2427
        %v2429 = vlaneseq
        %v2430 = vshrl.u32 %v2429, 7
        %v2431 = vsub.s32 6, %v2430
        %v2432 = vrot.slane %v286, %v2431
        %v2433 = vlaneseq
        %v2434 = vshrl.u32 %v2433, 7
        %v2435 = vsub.s32 6, %v2434
        %v2436 = vrot.slane %v287, %v2435
        %v2437 = vlaneseq
        %v2438 = vshrl.u32 %v2437, 7
        %v2439 = vsub.s32 6, %v2438
        %v2440 = vrot.slane %v288, %v2439
        %v2441 = vlaneseq
        %v2442 = vshrl.u32 %v2441, 7
        %v2443 = vsub.s32 6, %v2442
        %v2444 = vrot.slane %v289, %v2443
        %v2445 = vlaneseq
        %v2446 = vshrl.u32 %v2445, 7
        %v2447 = vsub.s32 6, %v2446
        %v2448 = vrot.slane %v290, %v2447
        %v2449 = vlaneseq
        %v2450 = vshrl.u32 %v2449, 7
        %v2451 = vsub.s32 6, %v2450
        %v2452 = vrot.slane %v291, %v2451
        %v2453 = vlaneseq
        %v2454 = vshrl.u32 %v2453, 7
        %v2455 = vsub.s32 6, %v2454
        %v2456 = vrot.slane %v292, %v2455
        %v2457 = vlaneseq
        %v2458 = vshrl.u32 %v2457, 7
        %v2459 = vsub.s32 6, %v2458
        %v2460 = vrot.slane %v293, %v2459
        %v2461 = vlaneseq
        %v2462 = vshrl.u32 %v2461, 7
        %v2463 = vsub.s32 6, %v2462
        %v2464 = vrot.slane %v294, %v2463
        %v2465 = vlaneseq
        %v2466 = vshrl.u32 %v2465, 7
        %v2467 = vsub.s32 6, %v2466
        %v2468 = vrot.slane %v295, %v2467
        %v2469 = vlaneseq
        %v2470 = vshrl.u32 %v2469, 7
        %v2471 = vsub.s32 6, %v2470
        %v2472 = vrot.slane %v296, %v2471
        %v2473 = vmul.f32 %v2219, %v2348
        %v2474 = vmul.f32 %v2223, %v2352
        %v2475 = vmul.f32 %v2227, %v2356
        %v2476 = vmul.f32 %v2231, %v2360
        %v2477 = vmul.f32 %v2235, %v2364
        %v2478 = vmul.f32 %v2239, %v2368
        %v2479 = vmul.f32 %v2243, %v2372
        %v2480 = vmul.f32 %v2247, %v2376
        %v2481 = vmul.f32 %v2251, %v2380
        %v2482 = vmul.f32 %v2255, %v2384
        %v2483 = vmul.f32 %v2259, %v2388
        %v2484 = vmul.f32 %v2263, %v2392
        %v2485 = vmul.f32 %v2267, %v2396
        %v2486 = vmul.f32 %v2271, %v2400
        %v2487 = vmul.f32 %v2275, %v2404
        %v2488 = vmul.f32 %v2279, %v2408
        %v2489 = vmul.f32 %v2283, %v2412
        %v2490 = vmul.f32 %v2287, %v2416
        %v2491 = vmul.f32 %v2291, %v2420
        %v2492 = vmul.f32 %v2295, %v2424
        %v2493 = vmul.f32 %v2299, %v2428
        %v2494 = vmul.f32 %v2303, %v2432
        %v2495 = vmul.f32 %v2307, %v2436
        %v2496 = vmul.f32 %v2311, %v2440
        %v2497 = vmul.f32 %v2315, %v2444
        %v2498 = vmul.f32 %v2319, %v2448
        %v2499 = vmul.f32 %v2323, %v2452
        %v2500 = vmul.f32 %v2327, %v2456
        %v2501 = vmul.f32 %v2331, %v2460
        %v2502 = vmul.f32 %v2335, %v2464
        %v2503 = vmul.f32 %v2339, %v2468
        %v2504 = vmul.f32 %v2343, %v2472
        %v2505 = vadd.f32 %v2185, %v2473
        %v2506 = vadd.f32 %v2186, %v2474
        %v2507 = vadd.f32 %v2187, %v2475
        %v2508 = vadd.f32 %v2188, %v2476
        %v2509 = vadd.f32 %v2189, %v2477
        %v2510 = vadd.f32 %v2190, %v2478
        %v2511 = vadd.f32 %v2191, %v2479
        %v2512 = vadd.f32 %v2192, %v2480
        %v2513 = vadd.f32 %v2193, %v2481
        %v2514 = vadd.f32 %v2194, %v2482
        %v2515 = vadd.f32 %v2195, %v2483
        %v2516 = vadd.f32 %v2196, %v2484
        %v2517 = vadd.f32 %v2197, %v2485
        %v2518 = vadd.f32 %v2198, %v2486
        %v2519 = vadd.f32 %v2199, %v2487
        %v2520 = vadd.f32 %v2200, %v2488
        %v2521 = vadd.f32 %v2201, %v2489
        %v2522 = vadd.f32 %v2202, %v2490
        %v2523 = vadd.f32 %v2203, %v2491
        %v2524 = vadd.f32 %v2204, %v2492
        %v2525 = vadd.f32 %v2205, %v2493
        %v2526 = vadd.f32 %v2206, %v2494
        %v2527 = vadd.f32 %v2207, %v2495
        %v2528 = vadd.f32 %v2208, %v2496
        %v2529 = vadd.f32 %v2209, %v2497
        %v2530 = vadd.f32 %v2210, %v2498
        %v2531 = vadd.f32 %v2211, %v2499
        %v2532 = vadd.f32 %v2212, %v2500
        %v2533 = vadd.f32 %v2213, %v2501
        %v2534 = vadd.f32 %v2214, %v2502
        %v2535 = vadd.f32 %v2215, %v2503
        %v2536 = vadd.f32 %v2216, %v2504
        %2537 = vset.pattern.permute.xlu0 7
        %2538 = vperm.xlu0 %2537, %v233
        %v2539 = vpop.permute.xlu0 %2538
        %2541 = vset.pattern.permute.xlu0 7
        %2542 = vperm.xlu0 %2541, %v234
        %v2543 = vpop.permute.xlu0 %2542
        %2545 = vset.pattern.permute.xlu0 7
        %2546 = vperm.xlu0 %2545, %v235
        %v2547 = vpop.permute.xlu0 %2546
        %2549 = vset.pattern.permute.xlu0 7
        %2550 = vperm.xlu0 %2549, %v236
        %v2551 = vpop.permute.xlu0 %2550
        %2553 = vset.pattern.permute.xlu0 7
        %2554 = vperm.xlu0 %2553, %v237
        %v2555 = vpop.permute.xlu0 %2554
        %2557 = vset.pattern.permute.xlu0 7
        %2558 = vperm.xlu0 %2557, %v238
        %v2559 = vpop.permute.xlu0 %2558
        %2561 = vset.pattern.permute.xlu0 7
        %2562 = vperm.xlu0 %2561, %v239
        %v2563 = vpop.permute.xlu0 %2562
        %2565 = vset.pattern.permute.xlu0 7
        %2566 = vperm.xlu0 %2565, %v240
        %v2567 = vpop.permute.xlu0 %2566
        %2569 = vset.pattern.permute.xlu0 7
        %2570 = vperm.xlu0 %2569, %v241
        %v2571 = vpop.permute.xlu0 %2570
        %2573 = vset.pattern.permute.xlu0 7
        %2574 = vperm.xlu0 %2573, %v242
        %v2575 = vpop.permute.xlu0 %2574
        %2577 = vset.pattern.permute.xlu0 7
        %2578 = vperm.xlu0 %2577, %v243
        %v2579 = vpop.permute.xlu0 %2578
        %2581 = vset.pattern.permute.xlu0 7
        %2582 = vperm.xlu0 %2581, %v244
        %v2583 = vpop.permute.xlu0 %2582
        %2585 = vset.pattern.permute.xlu0 7
        %2586 = vperm.xlu0 %2585, %v245
        %v2587 = vpop.permute.xlu0 %2586
        %2589 = vset.pattern.permute.xlu0 7
        %2590 = vperm.xlu0 %2589, %v246
        %v2591 = vpop.permute.xlu0 %2590
        %2593 = vset.pattern.permute.xlu0 7
        %2594 = vperm.xlu0 %2593, %v247
        %v2595 = vpop.permute.xlu0 %2594
        %2597 = vset.pattern.permute.xlu0 7
        %2598 = vperm.xlu0 %2597, %v248
        %v2599 = vpop.permute.xlu0 %2598
        %2601 = vset.pattern.permute.xlu0 7
        %2602 = vperm.xlu0 %2601, %v249
        %v2603 = vpop.permute.xlu0 %2602
        %2605 = vset.pattern.permute.xlu0 7
        %2606 = vperm.xlu0 %2605, %v250
        %v2607 = vpop.permute.xlu0 %2606
        %2609 = vset.pattern.permute.xlu0 7
        %2610 = vperm.xlu0 %2609, %v251
        %v2611 = vpop.permute.xlu0 %2610
        %2613 = vset.pattern.permute.xlu0 7
        %2614 = vperm.xlu0 %2613, %v252
        %v2615 = vpop.permute.xlu0 %2614
        %2617 = vset.pattern.permute.xlu0 7
        %2618 = vperm.xlu0 %2617, %v253
        %v2619 = vpop.permute.xlu0 %2618
        %2621 = vset.pattern.permute.xlu0 7
        %2622 = vperm.xlu0 %2621, %v254
        %v2623 = vpop.permute.xlu0 %2622
        %2625 = vset.pattern.permute.xlu0 7
        %2626 = vperm.xlu0 %2625, %v255
        %v2627 = vpop.permute.xlu0 %2626
        %2629 = vset.pattern.permute.xlu0 7
        %2630 = vperm.xlu0 %2629, %v256
        %v2631 = vpop.permute.xlu0 %2630
        %2633 = vset.pattern.permute.xlu0 7
        %2634 = vperm.xlu0 %2633, %v257
        %v2635 = vpop.permute.xlu0 %2634
        %2637 = vset.pattern.permute.xlu0 7
        %2638 = vperm.xlu0 %2637, %v258
        %v2639 = vpop.permute.xlu0 %2638
        %2641 = vset.pattern.permute.xlu0 7
        %2642 = vperm.xlu0 %2641, %v259
        %v2643 = vpop.permute.xlu0 %2642
        %2645 = vset.pattern.permute.xlu0 7
        %2646 = vperm.xlu0 %2645, %v260
        %v2647 = vpop.permute.xlu0 %2646
        %2649 = vset.pattern.permute.xlu0 7
        %2650 = vperm.xlu0 %2649, %v261
        %v2651 = vpop.permute.xlu0 %2650
        %2653 = vset.pattern.permute.xlu0 7
        %2654 = vperm.xlu0 %2653, %v262
        %v2655 = vpop.permute.xlu0 %2654
        %2657 = vset.pattern.permute.xlu0 7
        %2658 = vperm.xlu0 %2657, %v263
        %v2659 = vpop.permute.xlu0 %2658
        %2661 = vset.pattern.permute.xlu0 7
        %2662 = vperm.xlu0 %2661, %v264
        %v2663 = vpop.permute.xlu0 %2662
        %v2665 = vlaneseq
        %v2666 = vshrl.u32 %v2665, 7
        %v2667 = vsub.s32 7, %v2666
        %v2668 = vrot.slane %v265, %v2667
        %v2669 = vlaneseq
        %v2670 = vshrl.u32 %v2669, 7
        %v2671 = vsub.s32 7, %v2670
        %v2672 = vrot.slane %v266, %v2671
        %v2673 = vlaneseq
        %v2674 = vshrl.u32 %v2673, 7
        %v2675 = vsub.s32 7, %v2674
        %v2676 = vrot.slane %v267, %v2675
        %v2677 = vlaneseq
        %v2678 = vshrl.u32 %v2677, 7
        %v2679 = vsub.s32 7, %v2678
        %v2680 = vrot.slane %v268, %v2679
        %v2681 = vlaneseq
        %v2682 = vshrl.u32 %v2681, 7
        %v2683 = vsub.s32 7, %v2682
        %v2684 = vrot.slane %v269, %v2683
        %v2685 = vlaneseq
        %v2686 = vshrl.u32 %v2685, 7
        %v2687 = vsub.s32 7, %v2686
        %v2688 = vrot.slane %v270, %v2687
        %v2689 = vlaneseq
        %v2690 = vshrl.u32 %v2689, 7
        %v2691 = vsub.s32 7, %v2690
        %v2692 = vrot.slane %v271, %v2691
        %v2693 = vlaneseq
        %v2694 = vshrl.u32 %v2693, 7
        %v2695 = vsub.s32 7, %v2694
        %v2696 = vrot.slane %v272, %v2695
        %v2697 = vlaneseq
        %v2698 = vshrl.u32 %v2697, 7
        %v2699 = vsub.s32 7, %v2698
        %v2700 = vrot.slane %v273, %v2699
        %v2701 = vlaneseq
        %v2702 = vshrl.u32 %v2701, 7
        %v2703 = vsub.s32 7, %v2702
        %v2704 = vrot.slane %v274, %v2703
        %v2705 = vlaneseq
        %v2706 = vshrl.u32 %v2705, 7
        %v2707 = vsub.s32 7, %v2706
        %v2708 = vrot.slane %v275, %v2707
        %v2709 = vlaneseq
        %v2710 = vshrl.u32 %v2709, 7
        %v2711 = vsub.s32 7, %v2710
        %v2712 = vrot.slane %v276, %v2711
        %v2713 = vlaneseq
        %v2714 = vshrl.u32 %v2713, 7
        %v2715 = vsub.s32 7, %v2714
        %v2716 = vrot.slane %v277, %v2715
        %v2717 = vlaneseq
        %v2718 = vshrl.u32 %v2717, 7
        %v2719 = vsub.s32 7, %v2718
        %v2720 = vrot.slane %v278, %v2719
        %v2721 = vlaneseq
        %v2722 = vshrl.u32 %v2721, 7
        %v2723 = vsub.s32 7, %v2722
        %v2724 = vrot.slane %v279, %v2723
        %v2725 = vlaneseq
        %v2726 = vshrl.u32 %v2725, 7
        %v2727 = vsub.s32 7, %v2726
        %v2728 = vrot.slane %v280, %v2727
        %v2729 = vlaneseq
        %v2730 = vshrl.u32 %v2729, 7
        %v2731 = vsub.s32 7, %v2730
        %v2732 = vrot.slane %v281, %v2731
        %v2733 = vlaneseq
        %v2734 = vshrl.u32 %v2733, 7
        %v2735 = vsub.s32 7, %v2734
        %v2736 = vrot.slane %v282, %v2735
        %v2737 = vlaneseq
        %v2738 = vshrl.u32 %v2737, 7
        %v2739 = vsub.s32 7, %v2738
        %v2740 = vrot.slane %v283, %v2739
        %v2741 = vlaneseq
        %v2742 = vshrl.u32 %v2741, 7
        %v2743 = vsub.s32 7, %v2742
        %v2744 = vrot.slane %v284, %v2743
        %v2745 = vlaneseq
        %v2746 = vshrl.u32 %v2745, 7
        %v2747 = vsub.s32 7, %v2746
        %v2748 = vrot.slane %v285, %v2747
        %v2749 = vlaneseq
        %v2750 = vshrl.u32 %v2749, 7
        %v2751 = vsub.s32 7, %v2750
        %v2752 = vrot.slane %v286, %v2751
        %v2753 = vlaneseq
        %v2754 = vshrl.u32 %v2753, 7
        %v2755 = vsub.s32 7, %v2754
        %v2756 = vrot.slane %v287, %v2755
        %v2757 = vlaneseq
        %v2758 = vshrl.u32 %v2757, 7
        %v2759 = vsub.s32 7, %v2758
        %v2760 = vrot.slane %v288, %v2759
        %v2761 = vlaneseq
        %v2762 = vshrl.u32 %v2761, 7
        %v2763 = vsub.s32 7, %v2762
        %v2764 = vrot.slane %v289, %v2763
        %v2765 = vlaneseq
        %v2766 = vshrl.u32 %v2765, 7
        %v2767 = vsub.s32 7, %v2766
        %v2768 = vrot.slane %v290, %v2767
        %v2769 = vlaneseq
        %v2770 = vshrl.u32 %v2769, 7
        %v2771 = vsub.s32 7, %v2770
        %v2772 = vrot.slane %v291, %v2771
        %v2773 = vlaneseq
        %v2774 = vshrl.u32 %v2773, 7
        %v2775 = vsub.s32 7, %v2774
        %v2776 = vrot.slane %v292, %v2775
        %v2777 = vlaneseq
        %v2778 = vshrl.u32 %v2777, 7
        %v2779 = vsub.s32 7, %v2778
        %v2780 = vrot.slane %v293, %v2779
        %v2781 = vlaneseq
        %v2782 = vshrl.u32 %v2781, 7
        %v2783 = vsub.s32 7, %v2782
        %v2784 = vrot.slane %v294, %v2783
        %v2785 = vlaneseq
        %v2786 = vshrl.u32 %v2785, 7
        %v2787 = vsub.s32 7, %v2786
        %v2788 = vrot.slane %v295, %v2787
        %v2789 = vlaneseq
        %v2790 = vshrl.u32 %v2789, 7
        %v2791 = vsub.s32 7, %v2790
        %v2792 = vrot.slane %v296, %v2791
        %v2793 = vmul.f32 %v2539, %v2668
        %v2794 = vmul.f32 %v2543, %v2672
        %v2795 = vmul.f32 %v2547, %v2676
        %v2796 = vmul.f32 %v2551, %v2680
        %v2797 = vmul.f32 %v2555, %v2684
        %v2798 = vmul.f32 %v2559, %v2688
        %v2799 = vmul.f32 %v2563, %v2692
        %v2800 = vmul.f32 %v2567, %v2696
        %v2801 = vmul.f32 %v2571, %v2700
        %v2802 = vmul.f32 %v2575, %v2704
        %v2803 = vmul.f32 %v2579, %v2708
        %v2804 = vmul.f32 %v2583, %v2712
        %v2805 = vmul.f32 %v2587, %v2716
        %v2806 = vmul.f32 %v2591, %v2720
        %v2807 = vmul.f32 %v2595, %v2724
        %v2808 = vmul.f32 %v2599, %v2728
        %v2809 = vmul.f32 %v2603, %v2732
        %v2810 = vmul.f32 %v2607, %v2736
        %v2811 = vmul.f32 %v2611, %v2740
        %v2812 = vmul.f32 %v2615, %v2744
        %v2813 = vmul.f32 %v2619, %v2748
        %v2814 = vmul.f32 %v2623, %v2752
        %v2815 = vmul.f32 %v2627, %v2756
        %v2816 = vmul.f32 %v2631, %v2760
        %v2817 = vmul.f32 %v2635, %v2764
        %v2818 = vmul.f32 %v2639, %v2768
        %v2819 = vmul.f32 %v2643, %v2772
        %v2820 = vmul.f32 %v2647, %v2776
        %v2821 = vmul.f32 %v2651, %v2780
        %v2822 = vmul.f32 %v2655, %v2784
        %v2823 = vmul.f32 %v2659, %v2788
        %v2824 = vmul.f32 %v2663, %v2792
        %v2825 = vadd.f32 %v2505, %v2793
        %v2826 = vadd.f32 %v2506, %v2794
        %v2827 = vadd.f32 %v2507, %v2795
        %v2828 = vadd.f32 %v2508, %v2796
        %v2829 = vadd.f32 %v2509, %v2797
        %v2830 = vadd.f32 %v2510, %v2798
        %v2831 = vadd.f32 %v2511, %v2799
        %v2832 = vadd.f32 %v2512, %v2800
        %v2833 = vadd.f32 %v2513, %v2801
        %v2834 = vadd.f32 %v2514, %v2802
        %v2835 = vadd.f32 %v2515, %v2803
        %v2836 = vadd.f32 %v2516, %v2804
        %v2837 = vadd.f32 %v2517, %v2805
        %v2838 = vadd.f32 %v2518, %v2806
        %v2839 = vadd.f32 %v2519, %v2807
        %v2840 = vadd.f32 %v2520, %v2808
        %v2841 = vadd.f32 %v2521, %v2809
        %v2842 = vadd.f32 %v2522, %v2810
        %v2843 = vadd.f32 %v2523, %v2811
        %v2844 = vadd.f32 %v2524, %v2812
        %v2845 = vadd.f32 %v2525, %v2813
        %v2846 = vadd.f32 %v2526, %v2814
        %v2847 = vadd.f32 %v2527, %v2815
        %v2848 = vadd.f32 %v2528, %v2816
        %v2849 = vadd.f32 %v2529, %v2817
        %v2850 = vadd.f32 %v2530, %v2818
        %v2851 = vadd.f32 %v2531, %v2819
        %v2852 = vadd.f32 %v2532, %v2820
        %v2853 = vadd.f32 %v2533, %v2821
        %v2854 = vadd.f32 %v2534, %v2822
        %v2855 = vadd.f32 %v2535, %v2823
        %v2856 = vadd.f32 %v2536, %v2824
        %v2857 = vpack.c.bf16 %v2826, %v2825
        %v2858 = vpack.c.bf16 %v2828, %v2827
        %v2859 = vpack.c.bf16 %v2830, %v2829
        %v2860 = vpack.c.bf16 %v2832, %v2831
        %v2861 = vpack.c.bf16 %v2834, %v2833
        %v2862 = vpack.c.bf16 %v2836, %v2835
        %v2863 = vpack.c.bf16 %v2838, %v2837
        %v2864 = vpack.c.bf16 %v2840, %v2839
        %v2865 = vpack.c.bf16 %v2842, %v2841
        %v2866 = vpack.c.bf16 %v2844, %v2843
        %v2867 = vpack.c.bf16 %v2846, %v2845
        %v2868 = vpack.c.bf16 %v2848, %v2847
        %v2869 = vpack.c.bf16 %v2850, %v2849
        %v2870 = vpack.c.bf16 %v2852, %v2851
        %v2871 = vpack.c.bf16 %v2854, %v2853
        %v2872 = vpack.c.bf16 %v2856, %v2855
        %v2873 = vld [vmem:[#allocation2] sm:$0xf]
        %v2874 = vld [vmem:[#allocation2 + $0x4] sm:$0xf]
        %v2875 = vld [vmem:[#allocation2 + $0x8] sm:$0xf]
        %v2876 = vld [vmem:[#allocation2 + $0xc] sm:$0xf]
        %v2877 = vld [vmem:[#allocation2 + $0x10] sm:$0xf]
        %v2878 = vld [vmem:[#allocation2 + $0x14] sm:$0xf]
        %v2879 = vld [vmem:[#allocation2 + $0x18] sm:$0xf]
        %v2880 = vld [vmem:[#allocation2 + $0x1c] sm:$0xf]
        %v2881 = vld [vmem:[#allocation2 + $0x20] sm:$0xf]
        %v2882 = vld [vmem:[#allocation2 + $0x24] sm:$0xf]
        %v2883 = vld [vmem:[#allocation2 + $0x28] sm:$0xf]
        %v2884 = vld [vmem:[#allocation2 + $0x2c] sm:$0xf]
        %v2885 = vld [vmem:[#allocation2 + $0x30] sm:$0xf]
        %v2886 = vld [vmem:[#allocation2 + $0x34] sm:$0xf]
        %v2887 = vld [vmem:[#allocation2 + $0x38] sm:$0xf]
        %v2888 = vld [vmem:[#allocation2 + $0x3c] sm:$0xf]
        %v2889 = vld [vmem:[%s3] sm:$0x1]
        %v2890 = vlaneseq
        %v2891 = vshrl.u32 %v2890, 7
        %v2892 = vsub.s32 0, %v2891
        %v2893 = vrot.slane %v2889, %v2892
        %v2910 = vunpack.c.l.b16 %v2873
        %v2911 = vunpack.c.l.b16 %v2874
        %v2912 = vunpack.c.l.b16 %v2875
        %v2913 = vunpack.c.l.b16 %v2876
        %v2914 = vunpack.c.l.b16 %v2877
        %v2915 = vunpack.c.l.b16 %v2878
        %v2916 = vunpack.c.l.b16 %v2879
        %v2917 = vunpack.c.l.b16 %v2880
        %v2918 = vunpack.c.l.b16 %v2881
        %v2919 = vunpack.c.l.b16 %v2882
        %v2920 = vunpack.c.l.b16 %v2883
        %v2921 = vunpack.c.l.b16 %v2884
        %v2922 = vunpack.c.l.b16 %v2885
        %v2923 = vunpack.c.l.b16 %v2886
        %v2924 = vunpack.c.l.b16 %v2887
        %v2925 = vunpack.c.l.b16 %v2888
        %v2926 = vpack.c.b16 %v2911, %v2910
        %v2927 = vpack.c.b16 %v2913, %v2912
        %v2928 = vpack.c.b16 %v2915, %v2914
        %v2929 = vpack.c.b16 %v2917, %v2916
        %v2930 = vpack.c.b16 %v2919, %v2918
        %v2931 = vpack.c.b16 %v2921, %v2920
        %v2932 = vpack.c.b16 %v2923, %v2922
        %v2933 = vpack.c.b16 %v2925, %v2924
        %2942 = vmatprep.subr.bf16.mxu0 0
        %2943 = vmatpush1.bf16.msra.mxu0 %v2933
        %2944 = vmatprep.subr.bf16.mxu0 0
        %2945 = vmatpush1.bf16.msra.mxu0 %v2932
        %2946 = vmatprep.subr.bf16.mxu0 0
        %2947 = vmatpush1.bf16.msra.mxu0 %v2931
        %2948 = vmatprep.subr.bf16.mxu0 0
        %2949 = vmatpush1.bf16.msra.mxu0 %v2930
        %2950 = vmatprep.subr.bf16.mxu0 0
        %2951 = vmatpush1.bf16.msra.mxu0 %v2929
        %2952 = vmatprep.subr.bf16.mxu0 0
        %2953 = vmatpush1.bf16.msra.mxu0 %v2928
        %2954 = vmatprep.subr.bf16.mxu0 0
        %2955 = vmatpush1.bf16.msra.mxu0 %v2927
        %2956 = vmatprep.subr.bf16.mxu0 0
        %2957 = vmatpush1.bf16.msra.mxu0 %v2926
        %2958 = vmatprep.subr.bf16.mxu0 0
        %2959 = vmatpush2.bf16.msra.mxu0 0
        %2960 = vmatprep.subr.bf16.mxu0 0
        %2961 = vmatpush2.bf16.msra.mxu0 0
        %2962 = vmatprep.subr.bf16.mxu0 0
        %2963 = vmatpush2.bf16.msra.mxu0 0
        %2964 = vmatprep.subr.bf16.mxu0 0
        %2965 = vmatpush2.bf16.msra.mxu0 0
        %2966 = vmatprep.subr.bf16.mxu0 0
        %2967 = vmatpush2.bf16.msra.mxu0 0
        %2968 = vmatprep.subr.bf16.mxu0 0
        %2969 = vmatpush2.bf16.msra.mxu0 0
        %2970 = vmatprep.subr.bf16.mxu0 0
        %2971 = vmatpush2.bf16.msra.mxu0 0
        %2972 = vmatprep.subr.bf16.mxu0 0
        %2973 = vmatpush2.bf16.msra.mxu0 0
        %2974 = vmatprep.mubr.bf16.mxu0 0
        %2975 = vmatmul.mubr.bf16.gmra.mxu0 %v2857
        %v2976 = vpop.f32.mrf.mxu0
        %v2977 = vadd.f32 %v2893, %v2976
        %v2978 = vpop.f32.mrf.mxu0
        %v2979 = vpop.f32.mrf.mxu0
        %v2980 = vadd.f32 %v2893, %v2979
        %v2981 = vpop.f32.mrf.mxu0
        %2982 = vmatprep.mubr.bf16.mxu0 0
        %2983 = vmatmul.mubr.bf16.gmra.mxu0 %v2858
        %v2984 = vpop.f32.mrf.mxu0
        %v2985 = vadd.f32 %v2893, %v2984
        %v2986 = vpop.f32.mrf.mxu0
        %v2987 = vpop.f32.mrf.mxu0
        %v2988 = vadd.f32 %v2893, %v2987
        %v2989 = vpop.f32.mrf.mxu0
        %2990 = vmatprep.mubr.bf16.mxu0 0
        %2991 = vmatmul.mubr.bf16.gmra.mxu0 %v2859
        %v2992 = vpop.f32.mrf.mxu0
        %v2993 = vadd.f32 %v2893, %v2992
        %v2994 = vpop.f32.mrf.mxu0
        %v2995 = vpop.f32.mrf.mxu0
        %v2996 = vadd.f32 %v2893, %v2995
        %v2997 = vpop.f32.mrf.mxu0
        %2998 = vmatprep.mubr.bf16.mxu0 0
        %2999 = vmatmul.mubr.bf16.gmra.mxu0 %v2860
        %v3000 = vpop.f32.mrf.mxu0
        %v3001 = vadd.f32 %v2893, %v3000
        %v3002 = vpop.f32.mrf.mxu0
        %v3003 = vpop.f32.mrf.mxu0
        %v3004 = vadd.f32 %v2893, %v3003
        %v3005 = vpop.f32.mrf.mxu0
        %3006 = vmatprep.mubr.bf16.mxu0 0
        %3007 = vmatmul.mubr.bf16.gmra.mxu0 %v2861
        %v3008 = vpop.f32.mrf.mxu0
        %v3009 = vadd.f32 %v2893, %v3008
        %v3010 = vpop.f32.mrf.mxu0
        %v3011 = vpop.f32.mrf.mxu0
        %v3012 = vadd.f32 %v2893, %v3011
        %v3013 = vpop.f32.mrf.mxu0
        %3014 = vmatprep.mubr.bf16.mxu0 0
        %3015 = vmatmul.mubr.bf16.gmra.mxu0 %v2862
        %v3016 = vpop.f32.mrf.mxu0
        %v3017 = vadd.f32 %v2893, %v3016
        %v3018 = vpop.f32.mrf.mxu0
        %v3019 = vpop.f32.mrf.mxu0
        %v3020 = vadd.f32 %v2893, %v3019
        %v3021 = vpop.f32.mrf.mxu0
        %3022 = vmatprep.mubr.bf16.mxu0 0
        %3023 = vmatmul.mubr.bf16.gmra.mxu0 %v2863
        %v3024 = vpop.f32.mrf.mxu0
        %v3025 = vadd.f32 %v2893, %v3024
        %v3026 = vpop.f32.mrf.mxu0
        %v3027 = vpop.f32.mrf.mxu0
        %v3028 = vadd.f32 %v2893, %v3027
        %v3029 = vpop.f32.mrf.mxu0
        %3030 = vmatprep.mubr.bf16.mxu0 0
        %3031 = vmatmul.mubr.bf16.gmra.mxu0 %v2864
        %v3032 = vpop.f32.mrf.mxu0
        %v3033 = vadd.f32 %v2893, %v3032
        %v3034 = vpop.f32.mrf.mxu0
        %v3035 = vpop.f32.mrf.mxu0
        %v3036 = vadd.f32 %v2893, %v3035
        %v3037 = vpop.f32.mrf.mxu0
        %3038 = vmatprep.mubr.bf16.mxu0 0
        %3039 = vmatmul.mubr.bf16.gmra.mxu0 %v2865
        %v3040 = vpop.f32.mrf.mxu0
        %v3041 = vadd.f32 %v2893, %v3040
        %v3042 = vpop.f32.mrf.mxu0
        %v3043 = vpop.f32.mrf.mxu0
        %v3044 = vadd.f32 %v2893, %v3043
        %v3045 = vpop.f32.mrf.mxu0
        %3046 = vmatprep.mubr.bf16.mxu0 0
        %3047 = vmatmul.mubr.bf16.gmra.mxu0 %v2866
        %v3048 = vpop.f32.mrf.mxu0
        %v3049 = vadd.f32 %v2893, %v3048
        %v3050 = vpop.f32.mrf.mxu0
        %v3051 = vpop.f32.mrf.mxu0
        %v3052 = vadd.f32 %v2893, %v3051
        %v3053 = vpop.f32.mrf.mxu0
        %3054 = vmatprep.mubr.bf16.mxu0 0
        %3055 = vmatmul.mubr.bf16.gmra.mxu0 %v2867
        %v3056 = vpop.f32.mrf.mxu0
        %v3057 = vadd.f32 %v2893, %v3056
        %v3058 = vpop.f32.mrf.mxu0
        %v3059 = vpop.f32.mrf.mxu0
        %v3060 = vadd.f32 %v2893, %v3059
        %v3061 = vpop.f32.mrf.mxu0
        %3062 = vmatprep.mubr.bf16.mxu0 0
        %3063 = vmatmul.mubr.bf16.gmra.mxu0 %v2868
        %v3064 = vpop.f32.mrf.mxu0
        %v3065 = vadd.f32 %v2893, %v3064
        %v3066 = vpop.f32.mrf.mxu0
        %v3067 = vpop.f32.mrf.mxu0
        %v3068 = vadd.f32 %v2893, %v3067
        %v3069 = vpop.f32.mrf.mxu0
        %3070 = vmatprep.mubr.bf16.mxu0 0
        %3071 = vmatmul.mubr.bf16.gmra.mxu0 %v2869
        %v3072 = vpop.f32.mrf.mxu0
        %v3073 = vadd.f32 %v2893, %v3072
        %v3074 = vpop.f32.mrf.mxu0
        %v3075 = vpop.f32.mrf.mxu0
        %v3076 = vadd.f32 %v2893, %v3075
        %v3077 = vpop.f32.mrf.mxu0
        %3078 = vmatprep.mubr.bf16.mxu0 0
        %3079 = vmatmul.mubr.bf16.gmra.mxu0 %v2870
        %v3080 = vpop.f32.mrf.mxu0
        %v3081 = vadd.f32 %v2893, %v3080
        %v3082 = vpop.f32.mrf.mxu0
        %v3083 = vpop.f32.mrf.mxu0
        %v3084 = vadd.f32 %v2893, %v3083
        %v3085 = vpop.f32.mrf.mxu0
        %3086 = vmatprep.mubr.bf16.mxu0 0
        %3087 = vmatmul.mubr.bf16.gmra.mxu0 %v2871
        %v3088 = vpop.f32.mrf.mxu0
        %v3089 = vadd.f32 %v2893, %v3088
        %v3090 = vpop.f32.mrf.mxu0
        %v3091 = vpop.f32.mrf.mxu0
        %v3092 = vadd.f32 %v2893, %v3091
        %v3093 = vpop.f32.mrf.mxu0
        %3094 = vmatprep.mubr.bf16.mxu0 0
        %3095 = vmatmul.mubr.bf16.gmra.mxu0 %v2872
        %v3096 = vpop.f32.mrf.mxu0
        %v3097 = vadd.f32 %v2893, %v3096
        %v3098 = vpop.f32.mrf.mxu0
        %v3099 = vpop.f32.mrf.mxu0
        %v3100 = vadd.f32 %v2893, %v3099
        %v3101 = vpop.f32.mrf.mxu0
        %3102 = vdwg.mxu0
        %v3103 = vmax.f32 %v2977, 0.0
        %v3104 = vmax.f32 %v2980, 0.0
        %v3105 = vmax.f32 %v2985, 0.0
        %v3106 = vmax.f32 %v2988, 0.0
        %v3107 = vmax.f32 %v2993, 0.0
        %v3108 = vmax.f32 %v2996, 0.0
        %v3109 = vmax.f32 %v3001, 0.0
        %v3110 = vmax.f32 %v3004, 0.0
        %v3111 = vmax.f32 %v3009, 0.0
        %v3112 = vmax.f32 %v3012, 0.0
        %v3113 = vmax.f32 %v3017, 0.0
        %v3114 = vmax.f32 %v3020, 0.0
        %v3115 = vmax.f32 %v3025, 0.0
        %v3116 = vmax.f32 %v3028, 0.0
        %v3117 = vmax.f32 %v3033, 0.0
        %v3118 = vmax.f32 %v3036, 0.0
        %v3119 = vmax.f32 %v3041, 0.0
        %v3120 = vmax.f32 %v3044, 0.0
        %v3121 = vmax.f32 %v3049, 0.0
        %v3122 = vmax.f32 %v3052, 0.0
        %v3123 = vmax.f32 %v3057, 0.0
        %v3124 = vmax.f32 %v3060, 0.0
        %v3125 = vmax.f32 %v3065, 0.0
        %v3126 = vmax.f32 %v3068, 0.0
        %v3127 = vmax.f32 %v3073, 0.0
        %v3128 = vmax.f32 %v3076, 0.0
        %v3129 = vmax.f32 %v3081, 0.0
        %v3130 = vmax.f32 %v3084, 0.0
        %v3131 = vmax.f32 %v3089, 0.0
        %v3132 = vmax.f32 %v3092, 0.0
        %v3133 = vmax.f32 %v3097, 0.0
        %v3134 = vmax.f32 %v3100, 0.0
        %v3135 = vlaneseq
        %v3136 = vshrl.u32 %v3135, 7
        %v3137 = vsub.s32 0, %v3136
        %v3138 = vrot.slane %v3103, %v3137
        %v3139 = vlaneseq
        %v3140 = vshrl.u32 %v3139, 7
        %v3141 = vsub.s32 0, %v3140
        %v3142 = vrot.slane %v3104, %v3141
        %v3143 = vlaneseq
        %v3144 = vshrl.u32 %v3143, 7
        %v3145 = vsub.s32 0, %v3144
        %v3146 = vrot.slane %v3105, %v3145
        %v3147 = vlaneseq
        %v3148 = vshrl.u32 %v3147, 7
        %v3149 = vsub.s32 0, %v3148
        %v3150 = vrot.slane %v3106, %v3149
        %v3151 = vlaneseq
        %v3152 = vshrl.u32 %v3151, 7
        %v3153 = vsub.s32 0, %v3152
        %v3154 = vrot.slane %v3107, %v3153
        %v3155 = vlaneseq
        %v3156 = vshrl.u32 %v3155, 7
        %v3157 = vsub.s32 0, %v3156
        %v3158 = vrot.slane %v3108, %v3157
        %v3159 = vlaneseq
        %v3160 = vshrl.u32 %v3159, 7
        %v3161 = vsub.s32 0, %v3160
        %v3162 = vrot.slane %v3109, %v3161
        %v3163 = vlaneseq
        %v3164 = vshrl.u32 %v3163, 7
        %v3165 = vsub.s32 0, %v3164
        %v3166 = vrot.slane %v3110, %v3165
        %v3167 = vlaneseq
        %v3168 = vshrl.u32 %v3167, 7
        %v3169 = vsub.s32 0, %v3168
        %v3170 = vrot.slane %v3111, %v3169
        %v3171 = vlaneseq
        %v3172 = vshrl.u32 %v3171, 7
        %v3173 = vsub.s32 0, %v3172
        %v3174 = vrot.slane %v3112, %v3173
        %v3175 = vlaneseq
        %v3176 = vshrl.u32 %v3175, 7
        %v3177 = vsub.s32 0, %v3176
        %v3178 = vrot.slane %v3113, %v3177
        %v3179 = vlaneseq
        %v3180 = vshrl.u32 %v3179, 7
        %v3181 = vsub.s32 0, %v3180
        %v3182 = vrot.slane %v3114, %v3181
        %v3183 = vlaneseq
        %v3184 = vshrl.u32 %v3183, 7
        %v3185 = vsub.s32 0, %v3184
        %v3186 = vrot.slane %v3115, %v3185
        %v3187 = vlaneseq
        %v3188 = vshrl.u32 %v3187, 7
        %v3189 = vsub.s32 0, %v3188
        %v3190 = vrot.slane %v3116, %v3189
        %v3191 = vlaneseq
        %v3192 = vshrl.u32 %v3191, 7
        %v3193 = vsub.s32 0, %v3192
        %v3194 = vrot.slane %v3117, %v3193
        %v3195 = vlaneseq
        %v3196 = vshrl.u32 %v3195, 7
        %v3197 = vsub.s32 0, %v3196
        %v3198 = vrot.slane %v3118, %v3197
        %v3199 = vlaneseq
        %v3200 = vshrl.u32 %v3199, 7
        %v3201 = vsub.s32 0, %v3200
        %v3202 = vrot.slane %v3119, %v3201
        %v3203 = vlaneseq
        %v3204 = vshrl.u32 %v3203, 7
        %v3205 = vsub.s32 0, %v3204
        %v3206 = vrot.slane %v3120, %v3205
        %v3207 = vlaneseq
        %v3208 = vshrl.u32 %v3207, 7
        %v3209 = vsub.s32 0, %v3208
        %v3210 = vrot.slane %v3121, %v3209
        %v3211 = vlaneseq
        %v3212 = vshrl.u32 %v3211, 7
        %v3213 = vsub.s32 0, %v3212
        %v3214 = vrot.slane %v3122, %v3213
        %v3215 = vlaneseq
        %v3216 = vshrl.u32 %v3215, 7
        %v3217 = vsub.s32 0, %v3216
        %v3218 = vrot.slane %v3123, %v3217
        %v3219 = vlaneseq
        %v3220 = vshrl.u32 %v3219, 7
        %v3221 = vsub.s32 0, %v3220
        %v3222 = vrot.slane %v3124, %v3221
        %v3223 = vlaneseq
        %v3224 = vshrl.u32 %v3223, 7
        %v3225 = vsub.s32 0, %v3224
        %v3226 = vrot.slane %v3125, %v3225
        %v3227 = vlaneseq
        %v3228 = vshrl.u32 %v3227, 7
        %v3229 = vsub.s32 0, %v3228
        %v3230 = vrot.slane %v3126, %v3229
        %v3231 = vlaneseq
        %v3232 = vshrl.u32 %v3231, 7
        %v3233 = vsub.s32 0, %v3232
        %v3234 = vrot.slane %v3127, %v3233
        %v3235 = vlaneseq
        %v3236 = vshrl.u32 %v3235, 7
        %v3237 = vsub.s32 0, %v3236
        %v3238 = vrot.slane %v3128, %v3237
        %v3239 = vlaneseq
        %v3240 = vshrl.u32 %v3239, 7
        %v3241 = vsub.s32 0, %v3240
        %v3242 = vrot.slane %v3129, %v3241
        %v3243 = vlaneseq
        %v3244 = vshrl.u32 %v3243, 7
        %v3245 = vsub.s32 0, %v3244
        %v3246 = vrot.slane %v3130, %v3245
        %v3247 = vlaneseq
        %v3248 = vshrl.u32 %v3247, 7
        %v3249 = vsub.s32 0, %v3248
        %v3250 = vrot.slane %v3131, %v3249
        %v3251 = vlaneseq
        %v3252 = vshrl.u32 %v3251, 7
        %v3253 = vsub.s32 0, %v3252
        %v3254 = vrot.slane %v3132, %v3253
        %v3255 = vlaneseq
        %v3256 = vshrl.u32 %v3255, 7
        %v3257 = vsub.s32 0, %v3256
        %v3258 = vrot.slane %v3133, %v3257
        %v3259 = vlaneseq
        %v3260 = vshrl.u32 %v3259, 7
        %v3261 = vsub.s32 0, %v3260
        %v3262 = vrot.slane %v3134, %v3261
        %v3263 = vmul.f32 %v300, %v3138
        %v3264 = vmul.f32 %v305, %v3142
        %v3265 = vmul.f32 %v310, %v3146
        %v3266 = vmul.f32 %v315, %v3150
        %v3267 = vmul.f32 %v320, %v3154
        %v3268 = vmul.f32 %v325, %v3158
        %v3269 = vmul.f32 %v330, %v3162
        %v3270 = vmul.f32 %v335, %v3166
        %v3271 = vmul.f32 %v340, %v3170
        %v3272 = vmul.f32 %v345, %v3174
        %v3273 = vmul.f32 %v350, %v3178
        %v3274 = vmul.f32 %v355, %v3182
        %v3275 = vmul.f32 %v360, %v3186
        %v3276 = vmul.f32 %v365, %v3190
        %v3277 = vmul.f32 %v370, %v3194
        %v3278 = vmul.f32 %v375, %v3198
        %v3279 = vmul.f32 %v380, %v3202
        %v3280 = vmul.f32 %v385, %v3206
        %v3281 = vmul.f32 %v390, %v3210
        %v3282 = vmul.f32 %v395, %v3214
        %v3283 = vmul.f32 %v400, %v3218
        %v3284 = vmul.f32 %v405, %v3222
        %v3285 = vmul.f32 %v410, %v3226
        %v3286 = vmul.f32 %v415, %v3230
        %v3287 = vmul.f32 %v420, %v3234
        %v3288 = vmul.f32 %v425, %v3238
        %v3289 = vmul.f32 %v430, %v3242
        %v3290 = vmul.f32 %v435, %v3246
        %v3291 = vmul.f32 %v440, %v3250
        %v3292 = vmul.f32 %v445, %v3254
        %v3293 = vmul.f32 %v450, %v3258
        %v3294 = vmul.f32 %v455, %v3262
        %v3295 = vlaneseq
        %v3296 = vshrl.u32 %v3295, 7
        %v3297 = vsub.s32 1, %v3296
        %v3298 = vrot.slane %v3103, %v3297
        %v3299 = vlaneseq
        %v3300 = vshrl.u32 %v3299, 7
        %v3301 = vsub.s32 1, %v3300
        %v3302 = vrot.slane %v3104, %v3301
        %v3303 = vlaneseq
        %v3304 = vshrl.u32 %v3303, 7
        %v3305 = vsub.s32 1, %v3304
        %v3306 = vrot.slane %v3105, %v3305
        %v3307 = vlaneseq
        %v3308 = vshrl.u32 %v3307, 7
        %v3309 = vsub.s32 1, %v3308
        %v3310 = vrot.slane %v3106, %v3309
        %v3311 = vlaneseq
        %v3312 = vshrl.u32 %v3311, 7
        %v3313 = vsub.s32 1, %v3312
        %v3314 = vrot.slane %v3107, %v3313
        %v3315 = vlaneseq
        %v3316 = vshrl.u32 %v3315, 7
        %v3317 = vsub.s32 1, %v3316
        %v3318 = vrot.slane %v3108, %v3317
        %v3319 = vlaneseq
        %v3320 = vshrl.u32 %v3319, 7
        %v3321 = vsub.s32 1, %v3320
        %v3322 = vrot.slane %v3109, %v3321
        %v3323 = vlaneseq
        %v3324 = vshrl.u32 %v3323, 7
        %v3325 = vsub.s32 1, %v3324
        %v3326 = vrot.slane %v3110, %v3325
        %v3327 = vlaneseq
        %v3328 = vshrl.u32 %v3327, 7
        %v3329 = vsub.s32 1, %v3328
        %v3330 = vrot.slane %v3111, %v3329
        %v3331 = vlaneseq
        %v3332 = vshrl.u32 %v3331, 7
        %v3333 = vsub.s32 1, %v3332
        %v3334 = vrot.slane %v3112, %v3333
        %v3335 = vlaneseq
        %v3336 = vshrl.u32 %v3335, 7
        %v3337 = vsub.s32 1, %v3336
        %v3338 = vrot.slane %v3113, %v3337
        %v3339 = vlaneseq
        %v3340 = vshrl.u32 %v3339, 7
        %v3341 = vsub.s32 1, %v3340
        %v3342 = vrot.slane %v3114, %v3341
        %v3343 = vlaneseq
        %v3344 = vshrl.u32 %v3343, 7
        %v3345 = vsub.s32 1, %v3344
        %v3346 = vrot.slane %v3115, %v3345
        %v3347 = vlaneseq
        %v3348 = vshrl.u32 %v3347, 7
        %v3349 = vsub.s32 1, %v3348
        %v3350 = vrot.slane %v3116, %v3349
        %v3351 = vlaneseq
        %v3352 = vshrl.u32 %v3351, 7
        %v3353 = vsub.s32 1, %v3352
        %v3354 = vrot.slane %v3117, %v3353
        %v3355 = vlaneseq
        %v3356 = vshrl.u32 %v3355, 7
        %v3357 = vsub.s32 1, %v3356
        %v3358 = vrot.slane %v3118, %v3357
        %v3359 = vlaneseq
        %v3360 = vshrl.u32 %v3359, 7
        %v3361 = vsub.s32 1, %v3360
        %v3362 = vrot.slane %v3119, %v3361
        %v3363 = vlaneseq
        %v3364 = vshrl.u32 %v3363, 7
        %v3365 = vsub.s32 1, %v3364
        %v3366 = vrot.slane %v3120, %v3365
        %v3367 = vlaneseq
        %v3368 = vshrl.u32 %v3367, 7
        %v3369 = vsub.s32 1, %v3368
        %v3370 = vrot.slane %v3121, %v3369
        %v3371 = vlaneseq
        %v3372 = vshrl.u32 %v3371, 7
        %v3373 = vsub.s32 1, %v3372
        %v3374 = vrot.slane %v3122, %v3373
        %v3375 = vlaneseq
        %v3376 = vshrl.u32 %v3375, 7
        %v3377 = vsub.s32 1, %v3376
        %v3378 = vrot.slane %v3123, %v3377
        %v3379 = vlaneseq
        %v3380 = vshrl.u32 %v3379, 7
        %v3381 = vsub.s32 1, %v3380
        %v3382 = vrot.slane %v3124, %v3381
        %v3383 = vlaneseq
        %v3384 = vshrl.u32 %v3383, 7
        %v3385 = vsub.s32 1, %v3384
        %v3386 = vrot.slane %v3125, %v3385
        %v3387 = vlaneseq
        %v3388 = vshrl.u32 %v3387, 7
        %v3389 = vsub.s32 1, %v3388
        %v3390 = vrot.slane %v3126, %v3389
        %v3391 = vlaneseq
        %v3392 = vshrl.u32 %v3391, 7
        %v3393 = vsub.s32 1, %v3392
        %v3394 = vrot.slane %v3127, %v3393
        %v3395 = vlaneseq
        %v3396 = vshrl.u32 %v3395, 7
        %v3397 = vsub.s32 1, %v3396
        %v3398 = vrot.slane %v3128, %v3397
        %v3399 = vlaneseq
        %v3400 = vshrl.u32 %v3399, 7
        %v3401 = vsub.s32 1, %v3400
        %v3402 = vrot.slane %v3129, %v3401
        %v3403 = vlaneseq
        %v3404 = vshrl.u32 %v3403, 7
        %v3405 = vsub.s32 1, %v3404
        %v3406 = vrot.slane %v3130, %v3405
        %v3407 = vlaneseq
        %v3408 = vshrl.u32 %v3407, 7
        %v3409 = vsub.s32 1, %v3408
        %v3410 = vrot.slane %v3131, %v3409
        %v3411 = vlaneseq
        %v3412 = vshrl.u32 %v3411, 7
        %v3413 = vsub.s32 1, %v3412
        %v3414 = vrot.slane %v3132, %v3413
        %v3415 = vlaneseq
        %v3416 = vshrl.u32 %v3415, 7
        %v3417 = vsub.s32 1, %v3416
        %v3418 = vrot.slane %v3133, %v3417
        %v3419 = vlaneseq
        %v3420 = vshrl.u32 %v3419, 7
        %v3421 = vsub.s32 1, %v3420
        %v3422 = vrot.slane %v3134, %v3421
        %v3423 = vmul.f32 %v619, %v3298
        %v3424 = vmul.f32 %v623, %v3302
        %v3425 = vmul.f32 %v627, %v3306
        %v3426 = vmul.f32 %v631, %v3310
        %v3427 = vmul.f32 %v635, %v3314
        %v3428 = vmul.f32 %v639, %v3318
        %v3429 = vmul.f32 %v643, %v3322
        %v3430 = vmul.f32 %v647, %v3326
        %v3431 = vmul.f32 %v651, %v3330
        %v3432 = vmul.f32 %v655, %v3334
        %v3433 = vmul.f32 %v659, %v3338
        %v3434 = vmul.f32 %v663, %v3342
        %v3435 = vmul.f32 %v667, %v3346
        %v3436 = vmul.f32 %v671, %v3350
        %v3437 = vmul.f32 %v675, %v3354
        %v3438 = vmul.f32 %v679, %v3358
        %v3439 = vmul.f32 %v683, %v3362
        %v3440 = vmul.f32 %v687, %v3366
        %v3441 = vmul.f32 %v691, %v3370
        %v3442 = vmul.f32 %v695, %v3374
        %v3443 = vmul.f32 %v699, %v3378
        %v3444 = vmul.f32 %v703, %v3382
        %v3445 = vmul.f32 %v707, %v3386
        %v3446 = vmul.f32 %v711, %v3390
        %v3447 = vmul.f32 %v715, %v3394
        %v3448 = vmul.f32 %v719, %v3398
        %v3449 = vmul.f32 %v723, %v3402
        %v3450 = vmul.f32 %v727, %v3406
        %v3451 = vmul.f32 %v731, %v3410
        %v3452 = vmul.f32 %v735, %v3414
        %v3453 = vmul.f32 %v739, %v3418
        %v3454 = vmul.f32 %v743, %v3422
        %v3455 = vadd.f32 %v3263, %v3423
        %v3456 = vadd.f32 %v3264, %v3424
        %v3457 = vadd.f32 %v3265, %v3425
        %v3458 = vadd.f32 %v3266, %v3426
        %v3459 = vadd.f32 %v3267, %v3427
        %v3460 = vadd.f32 %v3268, %v3428
        %v3461 = vadd.f32 %v3269, %v3429
        %v3462 = vadd.f32 %v3270, %v3430
        %v3463 = vadd.f32 %v3271, %v3431
        %v3464 = vadd.f32 %v3272, %v3432
        %v3465 = vadd.f32 %v3273, %v3433
        %v3466 = vadd.f32 %v3274, %v3434
        %v3467 = vadd.f32 %v3275, %v3435
        %v3468 = vadd.f32 %v3276, %v3436
        %v3469 = vadd.f32 %v3277, %v3437
        %v3470 = vadd.f32 %v3278, %v3438
        %v3471 = vadd.f32 %v3279, %v3439
        %v3472 = vadd.f32 %v3280, %v3440
        %v3473 = vadd.f32 %v3281, %v3441
        %v3474 = vadd.f32 %v3282, %v3442
        %v3475 = vadd.f32 %v3283, %v3443
        %v3476 = vadd.f32 %v3284, %v3444
        %v3477 = vadd.f32 %v3285, %v3445
        %v3478 = vadd.f32 %v3286, %v3446
        %v3479 = vadd.f32 %v3287, %v3447
        %v3480 = vadd.f32 %v3288, %v3448
        %v3481 = vadd.f32 %v3289, %v3449
        %v3482 = vadd.f32 %v3290, %v3450
        %v3483 = vadd.f32 %v3291, %v3451
        %v3484 = vadd.f32 %v3292, %v3452
        %v3485 = vadd.f32 %v3293, %v3453
        %v3486 = vadd.f32 %v3294, %v3454
        %v3487 = vlaneseq
        %v3488 = vshrl.u32 %v3487, 7
        %v3489 = vsub.s32 2, %v3488
        %v3490 = vrot.slane %v3103, %v3489
        %v3491 = vlaneseq
        %v3492 = vshrl.u32 %v3491, 7
        %v3493 = vsub.s32 2, %v3492
        %v3494 = vrot.slane %v3104, %v3493
        %v3495 = vlaneseq
        %v3496 = vshrl.u32 %v3495, 7
        %v3497 = vsub.s32 2, %v3496
        %v3498 = vrot.slane %v3105, %v3497
        %v3499 = vlaneseq
        %v3500 = vshrl.u32 %v3499, 7
        %v3501 = vsub.s32 2, %v3500
        %v3502 = vrot.slane %v3106, %v3501
        %v3503 = vlaneseq
        %v3504 = vshrl.u32 %v3503, 7
        %v3505 = vsub.s32 2, %v3504
        %v3506 = vrot.slane %v3107, %v3505
        %v3507 = vlaneseq
        %v3508 = vshrl.u32 %v3507, 7
        %v3509 = vsub.s32 2, %v3508
        %v3510 = vrot.slane %v3108, %v3509
        %v3511 = vlaneseq
        %v3512 = vshrl.u32 %v3511, 7
        %v3513 = vsub.s32 2, %v3512
        %v3514 = vrot.slane %v3109, %v3513
        %v3515 = vlaneseq
        %v3516 = vshrl.u32 %v3515, 7
        %v3517 = vsub.s32 2, %v3516
        %v3518 = vrot.slane %v3110, %v3517
        %v3519 = vlaneseq
        %v3520 = vshrl.u32 %v3519, 7
        %v3521 = vsub.s32 2, %v3520
        %v3522 = vrot.slane %v3111, %v3521
        %v3523 = vlaneseq
        %v3524 = vshrl.u32 %v3523, 7
        %v3525 = vsub.s32 2, %v3524
        %v3526 = vrot.slane %v3112, %v3525
        %v3527 = vlaneseq
        %v3528 = vshrl.u32 %v3527, 7
        %v3529 = vsub.s32 2, %v3528
        %v3530 = vrot.slane %v3113, %v3529
        %v3531 = vlaneseq
        %v3532 = vshrl.u32 %v3531, 7
        %v3533 = vsub.s32 2, %v3532
        %v3534 = vrot.slane %v3114, %v3533
        %v3535 = vlaneseq
        %v3536 = vshrl.u32 %v3535, 7
        %v3537 = vsub.s32 2, %v3536
        %v3538 = vrot.slane %v3115, %v3537
        %v3539 = vlaneseq
        %v3540 = vshrl.u32 %v3539, 7
        %v3541 = vsub.s32 2, %v3540
        %v3542 = vrot.slane %v3116, %v3541
        %v3543 = vlaneseq
        %v3544 = vshrl.u32 %v3543, 7
        %v3545 = vsub.s32 2, %v3544
        %v3546 = vrot.slane %v3117, %v3545
        %v3547 = vlaneseq
        %v3548 = vshrl.u32 %v3547, 7
        %v3549 = vsub.s32 2, %v3548
        %v3550 = vrot.slane %v3118, %v3549
        %v3551 = vlaneseq
        %v3552 = vshrl.u32 %v3551, 7
        %v3553 = vsub.s32 2, %v3552
        %v3554 = vrot.slane %v3119, %v3553
        %v3555 = vlaneseq
        %v3556 = vshrl.u32 %v3555, 7
        %v3557 = vsub.s32 2, %v3556
        %v3558 = vrot.slane %v3120, %v3557
        %v3559 = vlaneseq
        %v3560 = vshrl.u32 %v3559, 7
        %v3561 = vsub.s32 2, %v3560
        %v3562 = vrot.slane %v3121, %v3561
        %v3563 = vlaneseq
        %v3564 = vshrl.u32 %v3563, 7
        %v3565 = vsub.s32 2, %v3564
        %v3566 = vrot.slane %v3122, %v3565
        %v3567 = vlaneseq
        %v3568 = vshrl.u32 %v3567, 7
        %v3569 = vsub.s32 2, %v3568
        %v3570 = vrot.slane %v3123, %v3569
        %v3571 = vlaneseq
        %v3572 = vshrl.u32 %v3571, 7
        %v3573 = vsub.s32 2, %v3572
        %v3574 = vrot.slane %v3124, %v3573
        %v3575 = vlaneseq
        %v3576 = vshrl.u32 %v3575, 7
        %v3577 = vsub.s32 2, %v3576
        %v3578 = vrot.slane %v3125, %v3577
        %v3579 = vlaneseq
        %v3580 = vshrl.u32 %v3579, 7
        %v3581 = vsub.s32 2, %v3580
        %v3582 = vrot.slane %v3126, %v3581
        %v3583 = vlaneseq
        %v3584 = vshrl.u32 %v3583, 7
        %v3585 = vsub.s32 2, %v3584
        %v3586 = vrot.slane %v3127, %v3585
        %v3587 = vlaneseq
        %v3588 = vshrl.u32 %v3587, 7
        %v3589 = vsub.s32 2, %v3588
        %v3590 = vrot.slane %v3128, %v3589
        %v3591 = vlaneseq
        %v3592 = vshrl.u32 %v3591, 7
        %v3593 = vsub.s32 2, %v3592
        %v3594 = vrot.slane %v3129, %v3593
        %v3595 = vlaneseq
        %v3596 = vshrl.u32 %v3595, 7
        %v3597 = vsub.s32 2, %v3596
        %v3598 = vrot.slane %v3130, %v3597
        %v3599 = vlaneseq
        %v3600 = vshrl.u32 %v3599, 7
        %v3601 = vsub.s32 2, %v3600
        %v3602 = vrot.slane %v3131, %v3601
        %v3603 = vlaneseq
        %v3604 = vshrl.u32 %v3603, 7
        %v3605 = vsub.s32 2, %v3604
        %v3606 = vrot.slane %v3132, %v3605
        %v3607 = vlaneseq
        %v3608 = vshrl.u32 %v3607, 7
        %v3609 = vsub.s32 2, %v3608
        %v3610 = vrot.slane %v3133, %v3609
        %v3611 = vlaneseq
        %v3612 = vshrl.u32 %v3611, 7
        %v3613 = vsub.s32 2, %v3612
        %v3614 = vrot.slane %v3134, %v3613
        %v3615 = vmul.f32 %v939, %v3490
        %v3616 = vmul.f32 %v943, %v3494
        %v3617 = vmul.f32 %v947, %v3498
        %v3618 = vmul.f32 %v951, %v3502
        %v3619 = vmul.f32 %v955, %v3506
        %v3620 = vmul.f32 %v959, %v3510
        %v3621 = vmul.f32 %v963, %v3514
        %v3622 = vmul.f32 %v967, %v3518
        %v3623 = vmul.f32 %v971, %v3522
        %v3624 = vmul.f32 %v975, %v3526
        %v3625 = vmul.f32 %v979, %v3530
        %v3626 = vmul.f32 %v983, %v3534
        %v3627 = vmul.f32 %v987, %v3538
        %v3628 = vmul.f32 %v991, %v3542
        %v3629 = vmul.f32 %v995, %v3546
        %v3630 = vmul.f32 %v999, %v3550
        %v3631 = vmul.f32 %v1003, %v3554
        %v3632 = vmul.f32 %v1007, %v3558
        %v3633 = vmul.f32 %v1011, %v3562
        %v3634 = vmul.f32 %v1015, %v3566
        %v3635 = vmul.f32 %v1019, %v3570
        %v3636 = vmul.f32 %v1023, %v3574
        %v3637 = vmul.f32 %v1027, %v3578
        %v3638 = vmul.f32 %v1031, %v3582
        %v3639 = vmul.f32 %v1035, %v3586
        %v3640 = vmul.f32 %v1039, %v3590
        %v3641 = vmul.f32 %v1043, %v3594
        %v3642 = vmul.f32 %v1047, %v3598
        %v3643 = vmul.f32 %v1051, %v3602
        %v3644 = vmul.f32 %v1055, %v3606
        %v3645 = vmul.f32 %v1059, %v3610
        %v3646 = vmul.f32 %v1063, %v3614
        %v3647 = vadd.f32 %v3455, %v3615
        %v3648 = vadd.f32 %v3456, %v3616
        %v3649 = vadd.f32 %v3457, %v3617
        %v3650 = vadd.f32 %v3458, %v3618
        %v3651 = vadd.f32 %v3459, %v3619
        %v3652 = vadd.f32 %v3460, %v3620
        %v3653 = vadd.f32 %v3461, %v3621
        %v3654 = vadd.f32 %v3462, %v3622
        %v3655 = vadd.f32 %v3463, %v3623
        %v3656 = vadd.f32 %v3464, %v3624
        %v3657 = vadd.f32 %v3465, %v3625
        %v3658 = vadd.f32 %v3466, %v3626
        %v3659 = vadd.f32 %v3467, %v3627
        %v3660 = vadd.f32 %v3468, %v3628
        %v3661 = vadd.f32 %v3469, %v3629
        %v3662 = vadd.f32 %v3470, %v3630
        %v3663 = vadd.f32 %v3471, %v3631
        %v3664 = vadd.f32 %v3472, %v3632
        %v3665 = vadd.f32 %v3473, %v3633
        %v3666 = vadd.f32 %v3474, %v3634
        %v3667 = vadd.f32 %v3475, %v3635
        %v3668 = vadd.f32 %v3476, %v3636
        %v3669 = vadd.f32 %v3477, %v3637
        %v3670 = vadd.f32 %v3478, %v3638
        %v3671 = vadd.f32 %v3479, %v3639
        %v3672 = vadd.f32 %v3480, %v3640
        %v3673 = vadd.f32 %v3481, %v3641
        %v3674 = vadd.f32 %v3482, %v3642
        %v3675 = vadd.f32 %v3483, %v3643
        %v3676 = vadd.f32 %v3484, %v3644
        %v3677 = vadd.f32 %v3485, %v3645
        %v3678 = vadd.f32 %v3486, %v3646
        %v3679 = vlaneseq
        %v3680 = vshrl.u32 %v3679, 7
        %v3681 = vsub.s32 3, %v3680
        %v3682 = vrot.slane %v3103, %v3681
        %v3683 = vlaneseq
        %v3684 = vshrl.u32 %v3683, 7
        %v3685 = vsub.s32 3, %v3684
        %v3686 = vrot.slane %v3104, %v3685
        %v3687 = vlaneseq
        %v3688 = vshrl.u32 %v3687, 7
        %v3689 = vsub.s32 3, %v3688
        %v3690 = vrot.slane %v3105, %v3689
        %v3691 = vlaneseq
        %v3692 = vshrl.u32 %v3691, 7
        %v3693 = vsub.s32 3, %v3692
        %v3694 = vrot.slane %v3106, %v3693
        %v3695 = vlaneseq
        %v3696 = vshrl.u32 %v3695, 7
        %v3697 = vsub.s32 3, %v3696
        %v3698 = vrot.slane %v3107, %v3697
        %v3699 = vlaneseq
        %v3700 = vshrl.u32 %v3699, 7
        %v3701 = vsub.s32 3, %v3700
        %v3702 = vrot.slane %v3108, %v3701
        %v3703 = vlaneseq
        %v3704 = vshrl.u32 %v3703, 7
        %v3705 = vsub.s32 3, %v3704
        %v3706 = vrot.slane %v3109, %v3705
        %v3707 = vlaneseq
        %v3708 = vshrl.u32 %v3707, 7
        %v3709 = vsub.s32 3, %v3708
        %v3710 = vrot.slane %v3110, %v3709
        %v3711 = vlaneseq
        %v3712 = vshrl.u32 %v3711, 7
        %v3713 = vsub.s32 3, %v3712
        %v3714 = vrot.slane %v3111, %v3713
        %v3715 = vlaneseq
        %v3716 = vshrl.u32 %v3715, 7
        %v3717 = vsub.s32 3, %v3716
        %v3718 = vrot.slane %v3112, %v3717
        %v3719 = vlaneseq
        %v3720 = vshrl.u32 %v3719, 7
        %v3721 = vsub.s32 3, %v3720
        %v3722 = vrot.slane %v3113, %v3721
        %v3723 = vlaneseq
        %v3724 = vshrl.u32 %v3723, 7
        %v3725 = vsub.s32 3, %v3724
        %v3726 = vrot.slane %v3114, %v3725
        %v3727 = vlaneseq
        %v3728 = vshrl.u32 %v3727, 7
        %v3729 = vsub.s32 3, %v3728
        %v3730 = vrot.slane %v3115, %v3729
        %v3731 = vlaneseq
        %v3732 = vshrl.u32 %v3731, 7
        %v3733 = vsub.s32 3, %v3732
        %v3734 = vrot.slane %v3116, %v3733
        %v3735 = vlaneseq
        %v3736 = vshrl.u32 %v3735, 7
        %v3737 = vsub.s32 3, %v3736
        %v3738 = vrot.slane %v3117, %v3737
        %v3739 = vlaneseq
        %v3740 = vshrl.u32 %v3739, 7
        %v3741 = vsub.s32 3, %v3740
        %v3742 = vrot.slane %v3118, %v3741
        %v3743 = vlaneseq
        %v3744 = vshrl.u32 %v3743, 7
        %v3745 = vsub.s32 3, %v3744
        %v3746 = vrot.slane %v3119, %v3745
        %v3747 = vlaneseq
        %v3748 = vshrl.u32 %v3747, 7
        %v3749 = vsub.s32 3, %v3748
        %v3750 = vrot.slane %v3120, %v3749
        %v3751 = vlaneseq
        %v3752 = vshrl.u32 %v3751, 7
        %v3753 = vsub.s32 3, %v3752
        %v3754 = vrot.slane %v3121, %v3753
        %v3755 = vlaneseq
        %v3756 = vshrl.u32 %v3755, 7
        %v3757 = vsub.s32 3, %v3756
        %v3758 = vrot.slane %v3122, %v3757
        %v3759 = vlaneseq
        %v3760 = vshrl.u32 %v3759, 7
        %v3761 = vsub.s32 3, %v3760
        %v3762 = vrot.slane %v3123, %v3761
        %v3763 = vlaneseq
        %v3764 = vshrl.u32 %v3763, 7
        %v3765 = vsub.s32 3, %v3764
        %v3766 = vrot.slane %v3124, %v3765
        %v3767 = vlaneseq
        %v3768 = vshrl.u32 %v3767, 7
        %v3769 = vsub.s32 3, %v3768
        %v3770 = vrot.slane %v3125, %v3769
        %v3771 = vlaneseq
        %v3772 = vshrl.u32 %v3771, 7
        %v3773 = vsub.s32 3, %v3772
        %v3774 = vrot.slane %v3126, %v3773
        %v3775 = vlaneseq
        %v3776 = vshrl.u32 %v3775, 7
        %v3777 = vsub.s32 3, %v3776
        %v3778 = vrot.slane %v3127, %v3777
        %v3779 = vlaneseq
        %v3780 = vshrl.u32 %v3779, 7
        %v3781 = vsub.s32 3, %v3780
        %v3782 = vrot.slane %v3128, %v3781
        %v3783 = vlaneseq
        %v3784 = vshrl.u32 %v3783, 7
        %v3785 = vsub.s32 3, %v3784
        %v3786 = vrot.slane %v3129, %v3785
        %v3787 = vlaneseq
        %v3788 = vshrl.u32 %v3787, 7
        %v3789 = vsub.s32 3, %v3788
        %v3790 = vrot.slane %v3130, %v3789
        %v3791 = vlaneseq
        %v3792 = vshrl.u32 %v3791, 7
        %v3793 = vsub.s32 3, %v3792
        %v3794 = vrot.slane %v3131, %v3793
        %v3795 = vlaneseq
        %v3796 = vshrl.u32 %v3795, 7
        %v3797 = vsub.s32 3, %v3796
        %v3798 = vrot.slane %v3132, %v3797
        %v3799 = vlaneseq
        %v3800 = vshrl.u32 %v3799, 7
        %v3801 = vsub.s32 3, %v3800
        %v3802 = vrot.slane %v3133, %v3801
        %v3803 = vlaneseq
        %v3804 = vshrl.u32 %v3803, 7
        %v3805 = vsub.s32 3, %v3804
        %v3806 = vrot.slane %v3134, %v3805
        %v3807 = vmul.f32 %v1259, %v3682
        %v3808 = vmul.f32 %v1263, %v3686
        %v3809 = vmul.f32 %v1267, %v3690
        %v3810 = vmul.f32 %v1271, %v3694
        %v3811 = vmul.f32 %v1275, %v3698
        %v3812 = vmul.f32 %v1279, %v3702
        %v3813 = vmul.f32 %v1283, %v3706
        %v3814 = vmul.f32 %v1287, %v3710
        %v3815 = vmul.f32 %v1291, %v3714
        %v3816 = vmul.f32 %v1295, %v3718
        %v3817 = vmul.f32 %v1299, %v3722
        %v3818 = vmul.f32 %v1303, %v3726
        %v3819 = vmul.f32 %v1307, %v3730
        %v3820 = vmul.f32 %v1311, %v3734
        %v3821 = vmul.f32 %v1315, %v3738
        %v3822 = vmul.f32 %v1319, %v3742
        %v3823 = vmul.f32 %v1323, %v3746
        %v3824 = vmul.f32 %v1327, %v3750
        %v3825 = vmul.f32 %v1331, %v3754
        %v3826 = vmul.f32 %v1335, %v3758
        %v3827 = vmul.f32 %v1339, %v3762
        %v3828 = vmul.f32 %v1343, %v3766
        %v3829 = vmul.f32 %v1347, %v3770
        %v3830 = vmul.f32 %v1351, %v3774
        %v3831 = vmul.f32 %v1355, %v3778
        %v3832 = vmul.f32 %v1359, %v3782
        %v3833 = vmul.f32 %v1363, %v3786
        %v3834 = vmul.f32 %v1367, %v3790
        %v3835 = vmul.f32 %v1371, %v3794
        %v3836 = vmul.f32 %v1375, %v3798
        %v3837 = vmul.f32 %v1379, %v3802
        %v3838 = vmul.f32 %v1383, %v3806
        %v3839 = vadd.f32 %v3647, %v3807
        %v3840 = vadd.f32 %v3648, %v3808
        %v3841 = vadd.f32 %v3649, %v3809
        %v3842 = vadd.f32 %v3650, %v3810
        %v3843 = vadd.f32 %v3651, %v3811
        %v3844 = vadd.f32 %v3652, %v3812
        %v3845 = vadd.f32 %v3653, %v3813
        %v3846 = vadd.f32 %v3654, %v3814
        %v3847 = vadd.f32 %v3655, %v3815
        %v3848 = vadd.f32 %v3656, %v3816
        %v3849 = vadd.f32 %v3657, %v3817
        %v3850 = vadd.f32 %v3658, %v3818
        %v3851 = vadd.f32 %v3659, %v3819
        %v3852 = vadd.f32 %v3660, %v3820
        %v3853 = vadd.f32 %v3661, %v3821
        %v3854 = vadd.f32 %v3662, %v3822
        %v3855 = vadd.f32 %v3663, %v3823
        %v3856 = vadd.f32 %v3664, %v3824
        %v3857 = vadd.f32 %v3665, %v3825
        %v3858 = vadd.f32 %v3666, %v3826
        %v3859 = vadd.f32 %v3667, %v3827
        %v3860 = vadd.f32 %v3668, %v3828
        %v3861 = vadd.f32 %v3669, %v3829
        %v3862 = vadd.f32 %v3670, %v3830
        %v3863 = vadd.f32 %v3671, %v3831
        %v3864 = vadd.f32 %v3672, %v3832
        %v3865 = vadd.f32 %v3673, %v3833
        %v3866 = vadd.f32 %v3674, %v3834
        %v3867 = vadd.f32 %v3675, %v3835
        %v3868 = vadd.f32 %v3676, %v3836
        %v3869 = vadd.f32 %v3677, %v3837
        %v3870 = vadd.f32 %v3678, %v3838
        %v3871 = vlaneseq
        %v3872 = vshrl.u32 %v3871, 7
        %v3873 = vsub.s32 4, %v3872
        %v3874 = vrot.slane %v3103, %v3873
        %v3875 = vlaneseq
        %v3876 = vshrl.u32 %v3875, 7
        %v3877 = vsub.s32 4, %v3876
        %v3878 = vrot.slane %v3104, %v3877
        %v3879 = vlaneseq
        %v3880 = vshrl.u32 %v3879, 7
        %v3881 = vsub.s32 4, %v3880
        %v3882 = vrot.slane %v3105, %v3881
        %v3883 = vlaneseq
        %v3884 = vshrl.u32 %v3883, 7
        %v3885 = vsub.s32 4, %v3884
        %v3886 = vrot.slane %v3106, %v3885
        %v3887 = vlaneseq
        %v3888 = vshrl.u32 %v3887, 7
        %v3889 = vsub.s32 4, %v3888
        %v3890 = vrot.slane %v3107, %v3889
        %v3891 = vlaneseq
        %v3892 = vshrl.u32 %v3891, 7
        %v3893 = vsub.s32 4, %v3892
        %v3894 = vrot.slane %v3108, %v3893
        %v3895 = vlaneseq
        %v3896 = vshrl.u32 %v3895, 7
        %v3897 = vsub.s32 4, %v3896
        %v3898 = vrot.slane %v3109, %v3897
        %v3899 = vlaneseq
        %v3900 = vshrl.u32 %v3899, 7
        %v3901 = vsub.s32 4, %v3900
        %v3902 = vrot.slane %v3110, %v3901
        %v3903 = vlaneseq
        %v3904 = vshrl.u32 %v3903, 7
        %v3905 = vsub.s32 4, %v3904
        %v3906 = vrot.slane %v3111, %v3905
        %v3907 = vlaneseq
        %v3908 = vshrl.u32 %v3907, 7
        %v3909 = vsub.s32 4, %v3908
        %v3910 = vrot.slane %v3112, %v3909
        %v3911 = vlaneseq
        %v3912 = vshrl.u32 %v3911, 7
        %v3913 = vsub.s32 4, %v3912
        %v3914 = vrot.slane %v3113, %v3913
        %v3915 = vlaneseq
        %v3916 = vshrl.u32 %v3915, 7
        %v3917 = vsub.s32 4, %v3916
        %v3918 = vrot.slane %v3114, %v3917
        %v3919 = vlaneseq
        %v3920 = vshrl.u32 %v3919, 7
        %v3921 = vsub.s32 4, %v3920
        %v3922 = vrot.slane %v3115, %v3921
        %v3923 = vlaneseq
        %v3924 = vshrl.u32 %v3923, 7
        %v3925 = vsub.s32 4, %v3924
        %v3926 = vrot.slane %v3116, %v3925
        %v3927 = vlaneseq
        %v3928 = vshrl.u32 %v3927, 7
        %v3929 = vsub.s32 4, %v3928
        %v3930 = vrot.slane %v3117, %v3929
        %v3931 = vlaneseq
        %v3932 = vshrl.u32 %v3931, 7
        %v3933 = vsub.s32 4, %v3932
        %v3934 = vrot.slane %v3118, %v3933
        %v3935 = vlaneseq
        %v3936 = vshrl.u32 %v3935, 7
        %v3937 = vsub.s32 4, %v3936
        %v3938 = vrot.slane %v3119, %v3937
        %v3939 = vlaneseq
        %v3940 = vshrl.u32 %v3939, 7
        %v3941 = vsub.s32 4, %v3940
        %v3942 = vrot.slane %v3120, %v3941
        %v3943 = vlaneseq
        %v3944 = vshrl.u32 %v3943, 7
        %v3945 = vsub.s32 4, %v3944
        %v3946 = vrot.slane %v3121, %v3945
        %v3947 = vlaneseq
        %v3948 = vshrl.u32 %v3947, 7
        %v3949 = vsub.s32 4, %v3948
        %v3950 = vrot.slane %v3122, %v3949
        %v3951 = vlaneseq
        %v3952 = vshrl.u32 %v3951, 7
        %v3953 = vsub.s32 4, %v3952
        %v3954 = vrot.slane %v3123, %v3953
        %v3955 = vlaneseq
        %v3956 = vshrl.u32 %v3955, 7
        %v3957 = vsub.s32 4, %v3956
        %v3958 = vrot.slane %v3124, %v3957
        %v3959 = vlaneseq
        %v3960 = vshrl.u32 %v3959, 7
        %v3961 = vsub.s32 4, %v3960
        %v3962 = vrot.slane %v3125, %v3961
        %v3963 = vlaneseq
        %v3964 = vshrl.u32 %v3963, 7
        %v3965 = vsub.s32 4, %v3964
        %v3966 = vrot.slane %v3126, %v3965
        %v3967 = vlaneseq
        %v3968 = vshrl.u32 %v3967, 7
        %v3969 = vsub.s32 4, %v3968
        %v3970 = vrot.slane %v3127, %v3969
        %v3971 = vlaneseq
        %v3972 = vshrl.u32 %v3971, 7
        %v3973 = vsub.s32 4, %v3972
        %v3974 = vrot.slane %v3128, %v3973
        %v3975 = vlaneseq
        %v3976 = vshrl.u32 %v3975, 7
        %v3977 = vsub.s32 4, %v3976
        %v3978 = vrot.slane %v3129, %v3977
        %v3979 = vlaneseq
        %v3980 = vshrl.u32 %v3979, 7
        %v3981 = vsub.s32 4, %v3980
        %v3982 = vrot.slane %v3130, %v3981
        %v3983 = vlaneseq
        %v3984 = vshrl.u32 %v3983, 7
        %v3985 = vsub.s32 4, %v3984
        %v3986 = vrot.slane %v3131, %v3985
        %v3987 = vlaneseq
        %v3988 = vshrl.u32 %v3987, 7
        %v3989 = vsub.s32 4, %v3988
        %v3990 = vrot.slane %v3132, %v3989
        %v3991 = vlaneseq
        %v3992 = vshrl.u32 %v3991, 7
        %v3993 = vsub.s32 4, %v3992
        %v3994 = vrot.slane %v3133, %v3993
        %v3995 = vlaneseq
        %v3996 = vshrl.u32 %v3995, 7
        %v3997 = vsub.s32 4, %v3996
        %v3998 = vrot.slane %v3134, %v3997
        %v3999 = vmul.f32 %v1579, %v3874
        %v4000 = vmul.f32 %v1583, %v3878
        %v4001 = vmul.f32 %v1587, %v3882
        %v4002 = vmul.f32 %v1591, %v3886
        %v4003 = vmul.f32 %v1595, %v3890
        %v4004 = vmul.f32 %v1599, %v3894
        %v4005 = vmul.f32 %v1603, %v3898
        %v4006 = vmul.f32 %v1607, %v3902
        %v4007 = vmul.f32 %v1611, %v3906
        %v4008 = vmul.f32 %v1615, %v3910
        %v4009 = vmul.f32 %v1619, %v3914
        %v4010 = vmul.f32 %v1623, %v3918
        %v4011 = vmul.f32 %v1627, %v3922
        %v4012 = vmul.f32 %v1631, %v3926
        %v4013 = vmul.f32 %v1635, %v3930
        %v4014 = vmul.f32 %v1639, %v3934
        %v4015 = vmul.f32 %v1643, %v3938
        %v4016 = vmul.f32 %v1647, %v3942
        %v4017 = vmul.f32 %v1651, %v3946
        %v4018 = vmul.f32 %v1655, %v3950
        %v4019 = vmul.f32 %v1659, %v3954
        %v4020 = vmul.f32 %v1663, %v3958
        %v4021 = vmul.f32 %v1667, %v3962
        %v4022 = vmul.f32 %v1671, %v3966
        %v4023 = vmul.f32 %v1675, %v3970
        %v4024 = vmul.f32 %v1679, %v3974
        %v4025 = vmul.f32 %v1683, %v3978
        %v4026 = vmul.f32 %v1687, %v3982
        %v4027 = vmul.f32 %v1691, %v3986
        %v4028 = vmul.f32 %v1695, %v3990
        %v4029 = vmul.f32 %v1699, %v3994
        %v4030 = vmul.f32 %v1703, %v3998
        %v4031 = vadd.f32 %v3839, %v3999
        %v4032 = vadd.f32 %v3840, %v4000
        %v4033 = vadd.f32 %v3841, %v4001
        %v4034 = vadd.f32 %v3842, %v4002
        %v4035 = vadd.f32 %v3843, %v4003
        %v4036 = vadd.f32 %v3844, %v4004
        %v4037 = vadd.f32 %v3845, %v4005
        %v4038 = vadd.f32 %v3846, %v4006
        %v4039 = vadd.f32 %v3847, %v4007
        %v4040 = vadd.f32 %v3848, %v4008
        %v4041 = vadd.f32 %v3849, %v4009
        %v4042 = vadd.f32 %v3850, %v4010
        %v4043 = vadd.f32 %v3851, %v4011
        %v4044 = vadd.f32 %v3852, %v4012
        %v4045 = vadd.f32 %v3853, %v4013
        %v4046 = vadd.f32 %v3854, %v4014
        %v4047 = vadd.f32 %v3855, %v4015
        %v4048 = vadd.f32 %v3856, %v4016
        %v4049 = vadd.f32 %v3857, %v4017
        %v4050 = vadd.f32 %v3858, %v4018
        %v4051 = vadd.f32 %v3859, %v4019
        %v4052 = vadd.f32 %v3860, %v4020
        %v4053 = vadd.f32 %v3861, %v4021
        %v4054 = vadd.f32 %v3862, %v4022
        %v4055 = vadd.f32 %v3863, %v4023
        %v4056 = vadd.f32 %v3864, %v4024
        %v4057 = vadd.f32 %v3865, %v4025
        %v4058 = vadd.f32 %v3866, %v4026
        %v4059 = vadd.f32 %v3867, %v4027
        %v4060 = vadd.f32 %v3868, %v4028
        %v4061 = vadd.f32 %v3869, %v4029
        %v4062 = vadd.f32 %v3870, %v4030
        %v4063 = vlaneseq
        %v4064 = vshrl.u32 %v4063, 7
        %v4065 = vsub.s32 5, %v4064
        %v4066 = vrot.slane %v3103, %v4065
        %v4067 = vlaneseq
        %v4068 = vshrl.u32 %v4067, 7
        %v4069 = vsub.s32 5, %v4068
        %v4070 = vrot.slane %v3104, %v4069
        %v4071 = vlaneseq
        %v4072 = vshrl.u32 %v4071, 7
        %v4073 = vsub.s32 5, %v4072
        %v4074 = vrot.slane %v3105, %v4073
        %v4075 = vlaneseq
        %v4076 = vshrl.u32 %v4075, 7
        %v4077 = vsub.s32 5, %v4076
        %v4078 = vrot.slane %v3106, %v4077
        %v4079 = vlaneseq
        %v4080 = vshrl.u32 %v4079, 7
        %v4081 = vsub.s32 5, %v4080
        %v4082 = vrot.slane %v3107, %v4081
        %v4083 = vlaneseq
        %v4084 = vshrl.u32 %v4083, 7
        %v4085 = vsub.s32 5, %v4084
        %v4086 = vrot.slane %v3108, %v4085
        %v4087 = vlaneseq
        %v4088 = vshrl.u32 %v4087, 7
        %v4089 = vsub.s32 5, %v4088
        %v4090 = vrot.slane %v3109, %v4089
        %v4091 = vlaneseq
        %v4092 = vshrl.u32 %v4091, 7
        %v4093 = vsub.s32 5, %v4092
        %v4094 = vrot.slane %v3110, %v4093
        %v4095 = vlaneseq
        %v4096 = vshrl.u32 %v4095, 7
        %v4097 = vsub.s32 5, %v4096
        %v4098 = vrot.slane %v3111, %v4097
        %v4099 = vlaneseq
        %v4100 = vshrl.u32 %v4099, 7
        %v4101 = vsub.s32 5, %v4100
        %v4102 = vrot.slane %v3112, %v4101
        %v4103 = vlaneseq
        %v4104 = vshrl.u32 %v4103, 7
        %v4105 = vsub.s32 5, %v4104
        %v4106 = vrot.slane %v3113, %v4105
        %v4107 = vlaneseq
        %v4108 = vshrl.u32 %v4107, 7
        %v4109 = vsub.s32 5, %v4108
        %v4110 = vrot.slane %v3114, %v4109
        %v4111 = vlaneseq
        %v4112 = vshrl.u32 %v4111, 7
        %v4113 = vsub.s32 5, %v4112
        %v4114 = vrot.slane %v3115, %v4113
        %v4115 = vlaneseq
        %v4116 = vshrl.u32 %v4115, 7
        %v4117 = vsub.s32 5, %v4116
        %v4118 = vrot.slane %v3116, %v4117
        %v4119 = vlaneseq
        %v4120 = vshrl.u32 %v4119, 7
        %v4121 = vsub.s32 5, %v4120
        %v4122 = vrot.slane %v3117, %v4121
        %v4123 = vlaneseq
        %v4124 = vshrl.u32 %v4123, 7
        %v4125 = vsub.s32 5, %v4124
        %v4126 = vrot.slane %v3118, %v4125
        %v4127 = vlaneseq
        %v4128 = vshrl.u32 %v4127, 7
        %v4129 = vsub.s32 5, %v4128
        %v4130 = vrot.slane %v3119, %v4129
        %v4131 = vlaneseq
        %v4132 = vshrl.u32 %v4131, 7
        %v4133 = vsub.s32 5, %v4132
        %v4134 = vrot.slane %v3120, %v4133
        %v4135 = vlaneseq
        %v4136 = vshrl.u32 %v4135, 7
        %v4137 = vsub.s32 5, %v4136
        %v4138 = vrot.slane %v3121, %v4137
        %v4139 = vlaneseq
        %v4140 = vshrl.u32 %v4139, 7
        %v4141 = vsub.s32 5, %v4140
        %v4142 = vrot.slane %v3122, %v4141
        %v4143 = vlaneseq
        %v4144 = vshrl.u32 %v4143, 7
        %v4145 = vsub.s32 5, %v4144
        %v4146 = vrot.slane %v3123, %v4145
        %v4147 = vlaneseq
        %v4148 = vshrl.u32 %v4147, 7
        %v4149 = vsub.s32 5, %v4148
        %v4150 = vrot.slane %v3124, %v4149
        %v4151 = vlaneseq
        %v4152 = vshrl.u32 %v4151, 7
        %v4153 = vsub.s32 5, %v4152
        %v4154 = vrot.slane %v3125, %v4153
        %v4155 = vlaneseq
        %v4156 = vshrl.u32 %v4155, 7
        %v4157 = vsub.s32 5, %v4156
        %v4158 = vrot.slane %v3126, %v4157
        %v4159 = vlaneseq
        %v4160 = vshrl.u32 %v4159, 7
        %v4161 = vsub.s32 5, %v4160
        %v4162 = vrot.slane %v3127, %v4161
        %v4163 = vlaneseq
        %v4164 = vshrl.u32 %v4163, 7
        %v4165 = vsub.s32 5, %v4164
        %v4166 = vrot.slane %v3128, %v4165
        %v4167 = vlaneseq
        %v4168 = vshrl.u32 %v4167, 7
        %v4169 = vsub.s32 5, %v4168
        %v4170 = vrot.slane %v3129, %v4169
        %v4171 = vlaneseq
        %v4172 = vshrl.u32 %v4171, 7
        %v4173 = vsub.s32 5, %v4172
        %v4174 = vrot.slane %v3130, %v4173
        %v4175 = vlaneseq
        %v4176 = vshrl.u32 %v4175, 7
        %v4177 = vsub.s32 5, %v4176
        %v4178 = vrot.slane %v3131, %v4177
        %v4179 = vlaneseq
        %v4180 = vshrl.u32 %v4179, 7
        %v4181 = vsub.s32 5, %v4180
        %v4182 = vrot.slane %v3132, %v4181
        %v4183 = vlaneseq
        %v4184 = vshrl.u32 %v4183, 7
        %v4185 = vsub.s32 5, %v4184
        %v4186 = vrot.slane %v3133, %v4185
        %v4187 = vlaneseq
        %v4188 = vshrl.u32 %v4187, 7
        %v4189 = vsub.s32 5, %v4188
        %v4190 = vrot.slane %v3134, %v4189
        %v4191 = vmul.f32 %v1899, %v4066
        %v4192 = vmul.f32 %v1903, %v4070
        %v4193 = vmul.f32 %v1907, %v4074
        %v4194 = vmul.f32 %v1911, %v4078
        %v4195 = vmul.f32 %v1915, %v4082
        %v4196 = vmul.f32 %v1919, %v4086
        %v4197 = vmul.f32 %v1923, %v4090
        %v4198 = vmul.f32 %v1927, %v4094
        %v4199 = vmul.f32 %v1931, %v4098
        %v4200 = vmul.f32 %v1935, %v4102
        %v4201 = vmul.f32 %v1939, %v4106
        %v4202 = vmul.f32 %v1943, %v4110
        %v4203 = vmul.f32 %v1947, %v4114
        %v4204 = vmul.f32 %v1951, %v4118
        %v4205 = vmul.f32 %v1955, %v4122
        %v4206 = vmul.f32 %v1959, %v4126
        %v4207 = vmul.f32 %v1963, %v4130
        %v4208 = vmul.f32 %v1967, %v4134
        %v4209 = vmul.f32 %v1971, %v4138
        %v4210 = vmul.f32 %v1975, %v4142
        %v4211 = vmul.f32 %v1979, %v4146
        %v4212 = vmul.f32 %v1983, %v4150
        %v4213 = vmul.f32 %v1987, %v4154
        %v4214 = vmul.f32 %v1991, %v4158
        %v4215 = vmul.f32 %v1995, %v4162
        %v4216 = vmul.f32 %v1999, %v4166
        %v4217 = vmul.f32 %v2003, %v4170
        %v4218 = vmul.f32 %v2007, %v4174
        %v4219 = vmul.f32 %v2011, %v4178
        %v4220 = vmul.f32 %v2015, %v4182
        %v4221 = vmul.f32 %v2019, %v4186
        %v4222 = vmul.f32 %v2023, %v4190
        %v4223 = vadd.f32 %v4031, %v4191
        %v4224 = vadd.f32 %v4032, %v4192
        %v4225 = vadd.f32 %v4033, %v4193
        %v4226 = vadd.f32 %v4034, %v4194
        %v4227 = vadd.f32 %v4035, %v4195
        %v4228 = vadd.f32 %v4036, %v4196
        %v4229 = vadd.f32 %v4037, %v4197
        %v4230 = vadd.f32 %v4038, %v4198
        %v4231 = vadd.f32 %v4039, %v4199
        %v4232 = vadd.f32 %v4040, %v4200
        %v4233 = vadd.f32 %v4041, %v4201
        %v4234 = vadd.f32 %v4042, %v4202
        %v4235 = vadd.f32 %v4043, %v4203
        %v4236 = vadd.f32 %v4044, %v4204
        %v4237 = vadd.f32 %v4045, %v4205
        %v4238 = vadd.f32 %v4046, %v4206
        %v4239 = vadd.f32 %v4047, %v4207
        %v4240 = vadd.f32 %v4048, %v4208
        %v4241 = vadd.f32 %v4049, %v4209
        %v4242 = vadd.f32 %v4050, %v4210
        %v4243 = vadd.f32 %v4051, %v4211
        %v4244 = vadd.f32 %v4052, %v4212
        %v4245 = vadd.f32 %v4053, %v4213
        %v4246 = vadd.f32 %v4054, %v4214
        %v4247 = vadd.f32 %v4055, %v4215
        %v4248 = vadd.f32 %v4056, %v4216
        %v4249 = vadd.f32 %v4057, %v4217
        %v4250 = vadd.f32 %v4058, %v4218
        %v4251 = vadd.f32 %v4059, %v4219
        %v4252 = vadd.f32 %v4060, %v4220
        %v4253 = vadd.f32 %v4061, %v4221
        %v4254 = vadd.f32 %v4062, %v4222
        %v4255 = vlaneseq
        %v4256 = vshrl.u32 %v4255, 7
        %v4257 = vsub.s32 6, %v4256
        %v4258 = vrot.slane %v3103, %v4257
        %v4259 = vlaneseq
        %v4260 = vshrl.u32 %v4259, 7
        %v4261 = vsub.s32 6, %v4260
        %v4262 = vrot.slane %v3104, %v4261
        %v4263 = vlaneseq
        %v4264 = vshrl.u32 %v4263, 7
        %v4265 = vsub.s32 6, %v4264
        %v4266 = vrot.slane %v3105, %v4265
        %v4267 = vlaneseq
        %v4268 = vshrl.u32 %v4267, 7
        %v4269 = vsub.s32 6, %v4268
        %v4270 = vrot.slane %v3106, %v4269
        %v4271 = vlaneseq
        %v4272 = vshrl.u32 %v4271, 7
        %v4273 = vsub.s32 6, %v4272
        %v4274 = vrot.slane %v3107, %v4273
        %v4275 = vlaneseq
        %v4276 = vshrl.u32 %v4275, 7
        %v4277 = vsub.s32 6, %v4276
        %v4278 = vrot.slane %v3108, %v4277
        %v4279 = vlaneseq
        %v4280 = vshrl.u32 %v4279, 7
        %v4281 = vsub.s32 6, %v4280
        %v4282 = vrot.slane %v3109, %v4281
        %v4283 = vlaneseq
        %v4284 = vshrl.u32 %v4283, 7
        %v4285 = vsub.s32 6, %v4284
        %v4286 = vrot.slane %v3110, %v4285
        %v4287 = vlaneseq
        %v4288 = vshrl.u32 %v4287, 7
        %v4289 = vsub.s32 6, %v4288
        %v4290 = vrot.slane %v3111, %v4289
        %v4291 = vlaneseq
        %v4292 = vshrl.u32 %v4291, 7
        %v4293 = vsub.s32 6, %v4292
        %v4294 = vrot.slane %v3112, %v4293
        %v4295 = vlaneseq
        %v4296 = vshrl.u32 %v4295, 7
        %v4297 = vsub.s32 6, %v4296
        %v4298 = vrot.slane %v3113, %v4297
        %v4299 = vlaneseq
        %v4300 = vshrl.u32 %v4299, 7
        %v4301 = vsub.s32 6, %v4300
        %v4302 = vrot.slane %v3114, %v4301
        %v4303 = vlaneseq
        %v4304 = vshrl.u32 %v4303, 7
        %v4305 = vsub.s32 6, %v4304
        %v4306 = vrot.slane %v3115, %v4305
        %v4307 = vlaneseq
        %v4308 = vshrl.u32 %v4307, 7
        %v4309 = vsub.s32 6, %v4308
        %v4310 = vrot.slane %v3116, %v4309
        %v4311 = vlaneseq
        %v4312 = vshrl.u32 %v4311, 7
        %v4313 = vsub.s32 6, %v4312
        %v4314 = vrot.slane %v3117, %v4313
        %v4315 = vlaneseq
        %v4316 = vshrl.u32 %v4315, 7
        %v4317 = vsub.s32 6, %v4316
        %v4318 = vrot.slane %v3118, %v4317
        %v4319 = vlaneseq
        %v4320 = vshrl.u32 %v4319, 7
        %v4321 = vsub.s32 6, %v4320
        %v4322 = vrot.slane %v3119, %v4321
        %v4323 = vlaneseq
        %v4324 = vshrl.u32 %v4323, 7
        %v4325 = vsub.s32 6, %v4324
        %v4326 = vrot.slane %v3120, %v4325
        %v4327 = vlaneseq
        %v4328 = vshrl.u32 %v4327, 7
        %v4329 = vsub.s32 6, %v4328
        %v4330 = vrot.slane %v3121, %v4329
        %v4331 = vlaneseq
        %v4332 = vshrl.u32 %v4331, 7
        %v4333 = vsub.s32 6, %v4332
        %v4334 = vrot.slane %v3122, %v4333
        %v4335 = vlaneseq
        %v4336 = vshrl.u32 %v4335, 7
        %v4337 = vsub.s32 6, %v4336
        %v4338 = vrot.slane %v3123, %v4337
        %v4339 = vlaneseq
        %v4340 = vshrl.u32 %v4339, 7
        %v4341 = vsub.s32 6, %v4340
        %v4342 = vrot.slane %v3124, %v4341
        %v4343 = vlaneseq
        %v4344 = vshrl.u32 %v4343, 7
        %v4345 = vsub.s32 6, %v4344
        %v4346 = vrot.slane %v3125, %v4345
        %v4347 = vlaneseq
        %v4348 = vshrl.u32 %v4347, 7
        %v4349 = vsub.s32 6, %v4348
        %v4350 = vrot.slane %v3126, %v4349
        %v4351 = vlaneseq
        %v4352 = vshrl.u32 %v4351, 7
        %v4353 = vsub.s32 6, %v4352
        %v4354 = vrot.slane %v3127, %v4353
        %v4355 = vlaneseq
        %v4356 = vshrl.u32 %v4355, 7
        %v4357 = vsub.s32 6, %v4356
        %v4358 = vrot.slane %v3128, %v4357
        %v4359 = vlaneseq
        %v4360 = vshrl.u32 %v4359, 7
        %v4361 = vsub.s32 6, %v4360
        %v4362 = vrot.slane %v3129, %v4361
        %v4363 = vlaneseq
        %v4364 = vshrl.u32 %v4363, 7
        %v4365 = vsub.s32 6, %v4364
        %v4366 = vrot.slane %v3130, %v4365
        %v4367 = vlaneseq
        %v4368 = vshrl.u32 %v4367, 7
        %v4369 = vsub.s32 6, %v4368
        %v4370 = vrot.slane %v3131, %v4369
        %v4371 = vlaneseq
        %v4372 = vshrl.u32 %v4371, 7
        %v4373 = vsub.s32 6, %v4372
        %v4374 = vrot.slane %v3132, %v4373
        %v4375 = vlaneseq
        %v4376 = vshrl.u32 %v4375, 7
        %v4377 = vsub.s32 6, %v4376
        %v4378 = vrot.slane %v3133, %v4377
        %v4379 = vlaneseq
        %v4380 = vshrl.u32 %v4379, 7
        %v4381 = vsub.s32 6, %v4380
        %v4382 = vrot.slane %v3134, %v4381
        %v4383 = vmul.f32 %v2219, %v4258
        %v4384 = vmul.f32 %v2223, %v4262
        %v4385 = vmul.f32 %v2227, %v4266
        %v4386 = vmul.f32 %v2231, %v4270
        %v4387 = vmul.f32 %v2235, %v4274
        %v4388 = vmul.f32 %v2239, %v4278
        %v4389 = vmul.f32 %v2243, %v4282
        %v4390 = vmul.f32 %v2247, %v4286
        %v4391 = vmul.f32 %v2251, %v4290
        %v4392 = vmul.f32 %v2255, %v4294
        %v4393 = vmul.f32 %v2259, %v4298
        %v4394 = vmul.f32 %v2263, %v4302
        %v4395 = vmul.f32 %v2267, %v4306
        %v4396 = vmul.f32 %v2271, %v4310
        %v4397 = vmul.f32 %v2275, %v4314
        %v4398 = vmul.f32 %v2279, %v4318
        %v4399 = vmul.f32 %v2283, %v4322
        %v4400 = vmul.f32 %v2287, %v4326
        %v4401 = vmul.f32 %v2291, %v4330
        %v4402 = vmul.f32 %v2295, %v4334
        %v4403 = vmul.f32 %v2299, %v4338
        %v4404 = vmul.f32 %v2303, %v4342
        %v4405 = vmul.f32 %v2307, %v4346
        %v4406 = vmul.f32 %v2311, %v4350
        %v4407 = vmul.f32 %v2315, %v4354
        %v4408 = vmul.f32 %v2319, %v4358
        %v4409 = vmul.f32 %v2323, %v4362
        %v4410 = vmul.f32 %v2327, %v4366
        %v4411 = vmul.f32 %v2331, %v4370
        %v4412 = vmul.f32 %v2335, %v4374
        %v4413 = vmul.f32 %v2339, %v4378
        %v4414 = vmul.f32 %v2343, %v4382
        %v4415 = vadd.f32 %v4223, %v4383
        %v4416 = vadd.f32 %v4224, %v4384
        %v4417 = vadd.f32 %v4225, %v4385
        %v4418 = vadd.f32 %v4226, %v4386
        %v4419 = vadd.f32 %v4227, %v4387
        %v4420 = vadd.f32 %v4228, %v4388
        %v4421 = vadd.f32 %v4229, %v4389
        %v4422 = vadd.f32 %v4230, %v4390
        %v4423 = vadd.f32 %v4231, %v4391
        %v4424 = vadd.f32 %v4232, %v4392
        %v4425 = vadd.f32 %v4233, %v4393
        %v4426 = vadd.f32 %v4234, %v4394
        %v4427 = vadd.f32 %v4235, %v4395
        %v4428 = vadd.f32 %v4236, %v4396
        %v4429 = vadd.f32 %v4237, %v4397
        %v4430 = vadd.f32 %v4238, %v4398
        %v4431 = vadd.f32 %v4239, %v4399
        %v4432 = vadd.f32 %v4240, %v4400
        %v4433 = vadd.f32 %v4241, %v4401
        %v4434 = vadd.f32 %v4242, %v4402
        %v4435 = vadd.f32 %v4243, %v4403
        %v4436 = vadd.f32 %v4244, %v4404
        %v4437 = vadd.f32 %v4245, %v4405
        %v4438 = vadd.f32 %v4246, %v4406
        %v4439 = vadd.f32 %v4247, %v4407
        %v4440 = vadd.f32 %v4248, %v4408
        %v4441 = vadd.f32 %v4249, %v4409
        %v4442 = vadd.f32 %v4250, %v4410
        %v4443 = vadd.f32 %v4251, %v4411
        %v4444 = vadd.f32 %v4252, %v4412
        %v4445 = vadd.f32 %v4253, %v4413
        %v4446 = vadd.f32 %v4254, %v4414
        %v4447 = vlaneseq
        %v4448 = vshrl.u32 %v4447, 7
        %v4449 = vsub.s32 7, %v4448
        %v4450 = vrot.slane %v3103, %v4449
        %v4451 = vlaneseq
        %v4452 = vshrl.u32 %v4451, 7
        %v4453 = vsub.s32 7, %v4452
        %v4454 = vrot.slane %v3104, %v4453
        %v4455 = vlaneseq
        %v4456 = vshrl.u32 %v4455, 7
        %v4457 = vsub.s32 7, %v4456
        %v4458 = vrot.slane %v3105, %v4457
        %v4459 = vlaneseq
        %v4460 = vshrl.u32 %v4459, 7
        %v4461 = vsub.s32 7, %v4460
        %v4462 = vrot.slane %v3106, %v4461
        %v4463 = vlaneseq
        %v4464 = vshrl.u32 %v4463, 7
        %v4465 = vsub.s32 7, %v4464
        %v4466 = vrot.slane %v3107, %v4465
        %v4467 = vlaneseq
        %v4468 = vshrl.u32 %v4467, 7
        %v4469 = vsub.s32 7, %v4468
        %v4470 = vrot.slane %v3108, %v4469
        %v4471 = vlaneseq
        %v4472 = vshrl.u32 %v4471, 7
        %v4473 = vsub.s32 7, %v4472
        %v4474 = vrot.slane %v3109, %v4473
        %v4475 = vlaneseq
        %v4476 = vshrl.u32 %v4475, 7
        %v4477 = vsub.s32 7, %v4476
        %v4478 = vrot.slane %v3110, %v4477
        %v4479 = vlaneseq
        %v4480 = vshrl.u32 %v4479, 7
        %v4481 = vsub.s32 7, %v4480
        %v4482 = vrot.slane %v3111, %v4481
        %v4483 = vlaneseq
        %v4484 = vshrl.u32 %v4483, 7
        %v4485 = vsub.s32 7, %v4484
        %v4486 = vrot.slane %v3112, %v4485
        %v4487 = vlaneseq
        %v4488 = vshrl.u32 %v4487, 7
        %v4489 = vsub.s32 7, %v4488
        %v4490 = vrot.slane %v3113, %v4489
        %v4491 = vlaneseq
        %v4492 = vshrl.u32 %v4491, 7
        %v4493 = vsub.s32 7, %v4492
        %v4494 = vrot.slane %v3114, %v4493
        %v4495 = vlaneseq
        %v4496 = vshrl.u32 %v4495, 7
        %v4497 = vsub.s32 7, %v4496
        %v4498 = vrot.slane %v3115, %v4497
        %v4499 = vlaneseq
        %v4500 = vshrl.u32 %v4499, 7
        %v4501 = vsub.s32 7, %v4500
        %v4502 = vrot.slane %v3116, %v4501
        %v4503 = vlaneseq
        %v4504 = vshrl.u32 %v4503, 7
        %v4505 = vsub.s32 7, %v4504
        %v4506 = vrot.slane %v3117, %v4505
        %v4507 = vlaneseq
        %v4508 = vshrl.u32 %v4507, 7
        %v4509 = vsub.s32 7, %v4508
        %v4510 = vrot.slane %v3118, %v4509
        %v4511 = vlaneseq
        %v4512 = vshrl.u32 %v4511, 7
        %v4513 = vsub.s32 7, %v4512
        %v4514 = vrot.slane %v3119, %v4513
        %v4515 = vlaneseq
        %v4516 = vshrl.u32 %v4515, 7
        %v4517 = vsub.s32 7, %v4516
        %v4518 = vrot.slane %v3120, %v4517
        %v4519 = vlaneseq
        %v4520 = vshrl.u32 %v4519, 7
        %v4521 = vsub.s32 7, %v4520
        %v4522 = vrot.slane %v3121, %v4521
        %v4523 = vlaneseq
        %v4524 = vshrl.u32 %v4523, 7
        %v4525 = vsub.s32 7, %v4524
        %v4526 = vrot.slane %v3122, %v4525
        %v4527 = vlaneseq
        %v4528 = vshrl.u32 %v4527, 7
        %v4529 = vsub.s32 7, %v4528
        %v4530 = vrot.slane %v3123, %v4529
        %v4531 = vlaneseq
        %v4532 = vshrl.u32 %v4531, 7
        %v4533 = vsub.s32 7, %v4532
        %v4534 = vrot.slane %v3124, %v4533
        %v4535 = vlaneseq
        %v4536 = vshrl.u32 %v4535, 7
        %v4537 = vsub.s32 7, %v4536
        %v4538 = vrot.slane %v3125, %v4537
        %v4539 = vlaneseq
        %v4540 = vshrl.u32 %v4539, 7
        %v4541 = vsub.s32 7, %v4540
        %v4542 = vrot.slane %v3126, %v4541
        %v4543 = vlaneseq
        %v4544 = vshrl.u32 %v4543, 7
        %v4545 = vsub.s32 7, %v4544
        %v4546 = vrot.slane %v3127, %v4545
        %v4547 = vlaneseq
        %v4548 = vshrl.u32 %v4547, 7
        %v4549 = vsub.s32 7, %v4548
        %v4550 = vrot.slane %v3128, %v4549
        %v4551 = vlaneseq
        %v4552 = vshrl.u32 %v4551, 7
        %v4553 = vsub.s32 7, %v4552
        %v4554 = vrot.slane %v3129, %v4553
        %v4555 = vlaneseq
        %v4556 = vshrl.u32 %v4555, 7
        %v4557 = vsub.s32 7, %v4556
        %v4558 = vrot.slane %v3130, %v4557
        %v4559 = vlaneseq
        %v4560 = vshrl.u32 %v4559, 7
        %v4561 = vsub.s32 7, %v4560
        %v4562 = vrot.slane %v3131, %v4561
        %v4563 = vlaneseq
        %v4564 = vshrl.u32 %v4563, 7
        %v4565 = vsub.s32 7, %v4564
        %v4566 = vrot.slane %v3132, %v4565
        %v4567 = vlaneseq
        %v4568 = vshrl.u32 %v4567, 7
        %v4569 = vsub.s32 7, %v4568
        %v4570 = vrot.slane %v3133, %v4569
        %v4571 = vlaneseq
        %v4572 = vshrl.u32 %v4571, 7
        %v4573 = vsub.s32 7, %v4572
        %v4574 = vrot.slane %v3134, %v4573
        %v4575 = vmul.f32 %v2539, %v4450
        %v4576 = vmul.f32 %v2543, %v4454
        %v4577 = vmul.f32 %v2547, %v4458
        %v4578 = vmul.f32 %v2551, %v4462
        %v4579 = vmul.f32 %v2555, %v4466
        %v4580 = vmul.f32 %v2559, %v4470
        %v4581 = vmul.f32 %v2563, %v4474
        %v4582 = vmul.f32 %v2567, %v4478
        %v4583 = vmul.f32 %v2571, %v4482
        %v4584 = vmul.f32 %v2575, %v4486
        %v4585 = vmul.f32 %v2579, %v4490
        %v4586 = vmul.f32 %v2583, %v4494
        %v4587 = vmul.f32 %v2587, %v4498
        %v4588 = vmul.f32 %v2591, %v4502
        %v4589 = vmul.f32 %v2595, %v4506
        %v4590 = vmul.f32 %v2599, %v4510
        %v4591 = vmul.f32 %v2603, %v4514
        %v4592 = vmul.f32 %v2607, %v4518
        %v4593 = vmul.f32 %v2611, %v4522
        %v4594 = vmul.f32 %v2615, %v4526
        %v4595 = vmul.f32 %v2619, %v4530
        %v4596 = vmul.f32 %v2623, %v4534
        %v4597 = vmul.f32 %v2627, %v4538
        %v4598 = vmul.f32 %v2631, %v4542
        %v4599 = vmul.f32 %v2635, %v4546
        %v4600 = vmul.f32 %v2639, %v4550
        %v4601 = vmul.f32 %v2643, %v4554
        %v4602 = vmul.f32 %v2647, %v4558
        %v4603 = vmul.f32 %v2651, %v4562
        %v4604 = vmul.f32 %v2655, %v4566
        %v4605 = vmul.f32 %v2659, %v4570
        %v4606 = vmul.f32 %v2663, %v4574
        %v4607 = vadd.f32 %v4415, %v4575
        %v4608 = vadd.f32 %v4416, %v4576
        %v4609 = vadd.f32 %v4417, %v4577
        %v4610 = vadd.f32 %v4418, %v4578
        %v4611 = vadd.f32 %v4419, %v4579
        %v4612 = vadd.f32 %v4420, %v4580
        %v4613 = vadd.f32 %v4421, %v4581
        %v4614 = vadd.f32 %v4422, %v4582
        %v4615 = vadd.f32 %v4423, %v4583
        %v4616 = vadd.f32 %v4424, %v4584
        %v4617 = vadd.f32 %v4425, %v4585
        %v4618 = vadd.f32 %v4426, %v4586
        %v4619 = vadd.f32 %v4427, %v4587
        %v4620 = vadd.f32 %v4428, %v4588
        %v4621 = vadd.f32 %v4429, %v4589
        %v4622 = vadd.f32 %v4430, %v4590
        %v4623 = vadd.f32 %v4431, %v4591
        %v4624 = vadd.f32 %v4432, %v4592
        %v4625 = vadd.f32 %v4433, %v4593
        %v4626 = vadd.f32 %v4434, %v4594
        %v4627 = vadd.f32 %v4435, %v4595
        %v4628 = vadd.f32 %v4436, %v4596
        %v4629 = vadd.f32 %v4437, %v4597
        %v4630 = vadd.f32 %v4438, %v4598
        %v4631 = vadd.f32 %v4439, %v4599
        %v4632 = vadd.f32 %v4440, %v4600
        %v4633 = vadd.f32 %v4441, %v4601
        %v4634 = vadd.f32 %v4442, %v4602
        %v4635 = vadd.f32 %v4443, %v4603
        %v4636 = vadd.f32 %v4444, %v4604
        %v4637 = vadd.f32 %v4445, %v4605
        %v4638 = vadd.f32 %v4446, %v4606
        %v4639 = vpack.c.bf16 %v4608, %v4607
        %v4640 = vpack.c.bf16 %v4610, %v4609
        %v4641 = vpack.c.bf16 %v4612, %v4611
        %v4642 = vpack.c.bf16 %v4614, %v4613
        %v4643 = vpack.c.bf16 %v4616, %v4615
        %v4644 = vpack.c.bf16 %v4618, %v4617
        %v4645 = vpack.c.bf16 %v4620, %v4619
        %v4646 = vpack.c.bf16 %v4622, %v4621
        %v4647 = vpack.c.bf16 %v4624, %v4623
        %v4648 = vpack.c.bf16 %v4626, %v4625
        %v4649 = vpack.c.bf16 %v4628, %v4627
        %v4650 = vpack.c.bf16 %v4630, %v4629
        %v4651 = vpack.c.bf16 %v4632, %v4631
        %v4652 = vpack.c.bf16 %v4634, %v4633
        %v4653 = vpack.c.bf16 %v4636, %v4635
        %v4654 = vpack.c.bf16 %v4638, %v4637
        %s4655 = scalar_lea.vmem [#allocation2], 64
        %v4656 = vld [vmem:[%s4655] sm:$0xf]
        %v4657 = vld [vmem:[%s4655 + $0x4] sm:$0xf]
        %v4658 = vld [vmem:[%s4655 + $0x8] sm:$0xf]
        %v4659 = vld [vmem:[%s4655 + $0xc] sm:$0xf]
        %v4660 = vld [vmem:[%s4655 + $0x10] sm:$0xf]
        %v4661 = vld [vmem:[%s4655 + $0x14] sm:$0xf]
        %v4662 = vld [vmem:[%s4655 + $0x18] sm:$0xf]
        %v4663 = vld [vmem:[%s4655 + $0x1c] sm:$0xf]
        %v4664 = vld [vmem:[%s4655 + $0x20] sm:$0xf]
        %v4665 = vld [vmem:[%s4655 + $0x24] sm:$0xf]
        %v4666 = vld [vmem:[%s4655 + $0x28] sm:$0xf]
        %v4667 = vld [vmem:[%s4655 + $0x2c] sm:$0xf]
        %v4668 = vld [vmem:[%s4655 + $0x30] sm:$0xf]
        %v4669 = vld [vmem:[%s4655 + $0x34] sm:$0xf]
        %v4670 = vld [vmem:[%s4655 + $0x38] sm:$0xf]
        %v4671 = vld [vmem:[%s4655 + $0x3c] sm:$0xf]
        %v4672 = vld [vmem:[%s3 + $0x1] sm:$0x1]
        %v4673 = vlaneseq
        %v4674 = vshrl.u32 %v4673, 7
        %v4675 = vsub.s32 0, %v4674
        %v4676 = vrot.slane %v4672, %v4675
        %v4693 = vunpack.c.l.b16 %v4656
        %v4694 = vunpack.c.l.b16 %v4657
        %v4695 = vunpack.c.l.b16 %v4658
        %v4696 = vunpack.c.l.b16 %v4659
        %v4697 = vunpack.c.l.b16 %v4660
        %v4698 = vunpack.c.l.b16 %v4661
        %v4699 = vunpack.c.l.b16 %v4662
        %v4700 = vunpack.c.l.b16 %v4663
        %v4701 = vunpack.c.l.b16 %v4664
        %v4702 = vunpack.c.l.b16 %v4665
        %v4703 = vunpack.c.l.b16 %v4666
        %v4704 = vunpack.c.l.b16 %v4667
        %v4705 = vunpack.c.l.b16 %v4668
        %v4706 = vunpack.c.l.b16 %v4669
        %v4707 = vunpack.c.l.b16 %v4670
        %v4708 = vunpack.c.l.b16 %v4671
        %v4709 = vpack.c.b16 %v4694, %v4693
        %v4710 = vpack.c.b16 %v4696, %v4695
        %v4711 = vpack.c.b16 %v4698, %v4697
        %v4712 = vpack.c.b16 %v4700, %v4699
        %v4713 = vpack.c.b16 %v4702, %v4701
        %v4714 = vpack.c.b16 %v4704, %v4703
        %v4715 = vpack.c.b16 %v4706, %v4705
        %v4716 = vpack.c.b16 %v4708, %v4707
        %4725 = vmatprep.subr.bf16.mxu0 0
        %4726 = vmatpush1.bf16.msra.mxu0 %v4716
        %4727 = vmatprep.subr.bf16.mxu0 0
        %4728 = vmatpush1.bf16.msra.mxu0 %v4715
        %4729 = vmatprep.subr.bf16.mxu0 0
        %4730 = vmatpush1.bf16.msra.mxu0 %v4714
        %4731 = vmatprep.subr.bf16.mxu0 0
        %4732 = vmatpush1.bf16.msra.mxu0 %v4713
        %4733 = vmatprep.subr.bf16.mxu0 0
        %4734 = vmatpush1.bf16.msra.mxu0 %v4712
        %4735 = vmatprep.subr.bf16.mxu0 0
        %4736 = vmatpush1.bf16.msra.mxu0 %v4711
        %4737 = vmatprep.subr.bf16.mxu0 0
        %4738 = vmatpush1.bf16.msra.mxu0 %v4710
        %4739 = vmatprep.subr.bf16.mxu0 0
        %4740 = vmatpush1.bf16.msra.mxu0 %v4709
        %4741 = vmatprep.subr.bf16.mxu0 0
        %4742 = vmatpush2.bf16.msra.mxu0 0
        %4743 = vmatprep.subr.bf16.mxu0 0
        %4744 = vmatpush2.bf16.msra.mxu0 0
        %4745 = vmatprep.subr.bf16.mxu0 0
        %4746 = vmatpush2.bf16.msra.mxu0 0
        %4747 = vmatprep.subr.bf16.mxu0 0
        %4748 = vmatpush2.bf16.msra.mxu0 0
        %4749 = vmatprep.subr.bf16.mxu0 0
        %4750 = vmatpush2.bf16.msra.mxu0 0
        %4751 = vmatprep.subr.bf16.mxu0 0
        %4752 = vmatpush2.bf16.msra.mxu0 0
        %4753 = vmatprep.subr.bf16.mxu0 0
        %4754 = vmatpush2.bf16.msra.mxu0 0
        %4755 = vmatprep.subr.bf16.mxu0 0
        %4756 = vmatpush2.bf16.msra.mxu0 0
        %4757 = vmatprep.mubr.bf16.mxu0 0
        %4758 = vmatmul.mubr.bf16.gmra.mxu0 %v4639
        %v4759 = vpop.f32.mrf.mxu0
        %v4760 = vadd.f32 %v4676, %v4759
        %v4761 = vpop.f32.mrf.mxu0
        %v4762 = vpop.f32.mrf.mxu0
        %v4763 = vadd.f32 %v4676, %v4762
        %v4764 = vpop.f32.mrf.mxu0
        %4765 = vmatprep.mubr.bf16.mxu0 0
        %4766 = vmatmul.mubr.bf16.gmra.mxu0 %v4640
        %v4767 = vpop.f32.mrf.mxu0
        %v4768 = vadd.f32 %v4676, %v4767
        %v4769 = vpop.f32.mrf.mxu0
        %v4770 = vpop.f32.mrf.mxu0
        %v4771 = vadd.f32 %v4676, %v4770
        %v4772 = vpop.f32.mrf.mxu0
        %4773 = vmatprep.mubr.bf16.mxu0 0
        %4774 = vmatmul.mubr.bf16.gmra.mxu0 %v4641
        %v4775 = vpop.f32.mrf.mxu0
        %v4776 = vadd.f32 %v4676, %v4775
        %v4777 = vpop.f32.mrf.mxu0
        %v4778 = vpop.f32.mrf.mxu0
        %v4779 = vadd.f32 %v4676, %v4778
        %v4780 = vpop.f32.mrf.mxu0
        %4781 = vmatprep.mubr.bf16.mxu0 0
        %4782 = vmatmul.mubr.bf16.gmra.mxu0 %v4642
        %v4783 = vpop.f32.mrf.mxu0
        %v4784 = vadd.f32 %v4676, %v4783
        %v4785 = vpop.f32.mrf.mxu0
        %v4786 = vpop.f32.mrf.mxu0
        %v4787 = vadd.f32 %v4676, %v4786
        %v4788 = vpop.f32.mrf.mxu0
        %4789 = vmatprep.mubr.bf16.mxu0 0
        %4790 = vmatmul.mubr.bf16.gmra.mxu0 %v4643
        %v4791 = vpop.f32.mrf.mxu0
        %v4792 = vadd.f32 %v4676, %v4791
        %v4793 = vpop.f32.mrf.mxu0
        %v4794 = vpop.f32.mrf.mxu0
        %v4795 = vadd.f32 %v4676, %v4794
        %v4796 = vpop.f32.mrf.mxu0
        %4797 = vmatprep.mubr.bf16.mxu0 0
        %4798 = vmatmul.mubr.bf16.gmra.mxu0 %v4644
        %v4799 = vpop.f32.mrf.mxu0
        %v4800 = vadd.f32 %v4676, %v4799
        %v4801 = vpop.f32.mrf.mxu0
        %v4802 = vpop.f32.mrf.mxu0
        %v4803 = vadd.f32 %v4676, %v4802
        %v4804 = vpop.f32.mrf.mxu0
        %4805 = vmatprep.mubr.bf16.mxu0 0
        %4806 = vmatmul.mubr.bf16.gmra.mxu0 %v4645
        %v4807 = vpop.f32.mrf.mxu0
        %v4808 = vadd.f32 %v4676, %v4807
        %v4809 = vpop.f32.mrf.mxu0
        %v4810 = vpop.f32.mrf.mxu0
        %v4811 = vadd.f32 %v4676, %v4810
        %v4812 = vpop.f32.mrf.mxu0
        %4813 = vmatprep.mubr.bf16.mxu0 0
        %4814 = vmatmul.mubr.bf16.gmra.mxu0 %v4646
        %v4815 = vpop.f32.mrf.mxu0
        %v4816 = vadd.f32 %v4676, %v4815
        %v4817 = vpop.f32.mrf.mxu0
        %v4818 = vpop.f32.mrf.mxu0
        %v4819 = vadd.f32 %v4676, %v4818
        %v4820 = vpop.f32.mrf.mxu0
        %4821 = vmatprep.mubr.bf16.mxu0 0
        %4822 = vmatmul.mubr.bf16.gmra.mxu0 %v4647
        %v4823 = vpop.f32.mrf.mxu0
        %v4824 = vadd.f32 %v4676, %v4823
        %v4825 = vpop.f32.mrf.mxu0
        %v4826 = vpop.f32.mrf.mxu0
        %v4827 = vadd.f32 %v4676, %v4826
        %v4828 = vpop.f32.mrf.mxu0
        %4829 = vmatprep.mubr.bf16.mxu0 0
        %4830 = vmatmul.mubr.bf16.gmra.mxu0 %v4648
        %v4831 = vpop.f32.mrf.mxu0
        %v4832 = vadd.f32 %v4676, %v4831
        %v4833 = vpop.f32.mrf.mxu0
        %v4834 = vpop.f32.mrf.mxu0
        %v4835 = vadd.f32 %v4676, %v4834
        %v4836 = vpop.f32.mrf.mxu0
        %4837 = vmatprep.mubr.bf16.mxu0 0
        %4838 = vmatmul.mubr.bf16.gmra.mxu0 %v4649
        %v4839 = vpop.f32.mrf.mxu0
        %v4840 = vadd.f32 %v4676, %v4839
        %v4841 = vpop.f32.mrf.mxu0
        %v4842 = vpop.f32.mrf.mxu0
        %v4843 = vadd.f32 %v4676, %v4842
        %v4844 = vpop.f32.mrf.mxu0
        %4845 = vmatprep.mubr.bf16.mxu0 0
        %4846 = vmatmul.mubr.bf16.gmra.mxu0 %v4650
        %v4847 = vpop.f32.mrf.mxu0
        %v4848 = vadd.f32 %v4676, %v4847
        %v4849 = vpop.f32.mrf.mxu0
        %v4850 = vpop.f32.mrf.mxu0
        %v4851 = vadd.f32 %v4676, %v4850
        %v4852 = vpop.f32.mrf.mxu0
        %4853 = vmatprep.mubr.bf16.mxu0 0
        %4854 = vmatmul.mubr.bf16.gmra.mxu0 %v4651
        %v4855 = vpop.f32.mrf.mxu0
        %v4856 = vadd.f32 %v4676, %v4855
        %v4857 = vpop.f32.mrf.mxu0
        %v4858 = vpop.f32.mrf.mxu0
        %v4859 = vadd.f32 %v4676, %v4858
        %v4860 = vpop.f32.mrf.mxu0
        %4861 = vmatprep.mubr.bf16.mxu0 0
        %4862 = vmatmul.mubr.bf16.gmra.mxu0 %v4652
        %v4863 = vpop.f32.mrf.mxu0
        %v4864 = vadd.f32 %v4676, %v4863
        %v4865 = vpop.f32.mrf.mxu0
        %v4866 = vpop.f32.mrf.mxu0
        %v4867 = vadd.f32 %v4676, %v4866
        %v4868 = vpop.f32.mrf.mxu0
        %4869 = vmatprep.mubr.bf16.mxu0 0
        %4870 = vmatmul.mubr.bf16.gmra.mxu0 %v4653
        %v4871 = vpop.f32.mrf.mxu0
        %v4872 = vadd.f32 %v4676, %v4871
        %v4873 = vpop.f32.mrf.mxu0
        %v4874 = vpop.f32.mrf.mxu0
        %v4875 = vadd.f32 %v4676, %v4874
        %v4876 = vpop.f32.mrf.mxu0
        %4877 = vmatprep.mubr.bf16.mxu0 0
        %4878 = vmatmul.mubr.bf16.gmra.mxu0 %v4654
        %v4879 = vpop.f32.mrf.mxu0
        %v4880 = vadd.f32 %v4676, %v4879
        %v4881 = vpop.f32.mrf.mxu0
        %v4882 = vpop.f32.mrf.mxu0
        %v4883 = vadd.f32 %v4676, %v4882
        %v4884 = vpop.f32.mrf.mxu0
        %4885 = vdwg.mxu0
        %v4886 = vmax.f32 %v4760, 0.0
        %v4887 = vmax.f32 %v4763, 0.0
        %v4888 = vmax.f32 %v4768, 0.0
        %v4889 = vmax.f32 %v4771, 0.0
        %v4890 = vmax.f32 %v4776, 0.0
        %v4891 = vmax.f32 %v4779, 0.0
        %v4892 = vmax.f32 %v4784, 0.0
        %v4893 = vmax.f32 %v4787, 0.0
        %v4894 = vmax.f32 %v4792, 0.0
        %v4895 = vmax.f32 %v4795, 0.0
        %v4896 = vmax.f32 %v4800, 0.0
        %v4897 = vmax.f32 %v4803, 0.0
        %v4898 = vmax.f32 %v4808, 0.0
        %v4899 = vmax.f32 %v4811, 0.0
        %v4900 = vmax.f32 %v4816, 0.0
        %v4901 = vmax.f32 %v4819, 0.0
        %v4902 = vmax.f32 %v4824, 0.0
        %v4903 = vmax.f32 %v4827, 0.0
        %v4904 = vmax.f32 %v4832, 0.0
        %v4905 = vmax.f32 %v4835, 0.0
        %v4906 = vmax.f32 %v4840, 0.0
        %v4907 = vmax.f32 %v4843, 0.0
        %v4908 = vmax.f32 %v4848, 0.0
        %v4909 = vmax.f32 %v4851, 0.0
        %v4910 = vmax.f32 %v4856, 0.0
        %v4911 = vmax.f32 %v4859, 0.0
        %v4912 = vmax.f32 %v4864, 0.0
        %v4913 = vmax.f32 %v4867, 0.0
        %v4914 = vmax.f32 %v4872, 0.0
        %v4915 = vmax.f32 %v4875, 0.0
        %v4916 = vmax.f32 %v4880, 0.0
        %v4917 = vmax.f32 %v4883, 0.0
        %v4918 = vrot.slane %v4886, 4
        %v4919 = vadd.f32 %v4886, %v4918
        %v4920 = vrot.slane %v4919, 2
        %v4921 = vadd.f32 %v4919, %v4920
        %v4922 = vrot.slane %v4921, 1
        %v4923 = vadd.f32 %v4921, %v4922
        %v4924 = vrot.slane %v4887, 4
        %v4925 = vadd.f32 %v4887, %v4924
        %v4926 = vrot.slane %v4925, 2
        %v4927 = vadd.f32 %v4925, %v4926
        %v4928 = vrot.slane %v4927, 1
        %v4929 = vadd.f32 %v4927, %v4928
        %v4930 = vrot.slane %v4888, 4
        %v4931 = vadd.f32 %v4888, %v4930
        %v4932 = vrot.slane %v4931, 2
        %v4933 = vadd.f32 %v4931, %v4932
        %v4934 = vrot.slane %v4933, 1
        %v4935 = vadd.f32 %v4933, %v4934
        %v4936 = vrot.slane %v4889, 4
        %v4937 = vadd.f32 %v4889, %v4936
        %v4938 = vrot.slane %v4937, 2
        %v4939 = vadd.f32 %v4937, %v4938
        %v4940 = vrot.slane %v4939, 1
        %v4941 = vadd.f32 %v4939, %v4940
        %v4942 = vrot.slane %v4890, 4
        %v4943 = vadd.f32 %v4890, %v4942
        %v4944 = vrot.slane %v4943, 2
        %v4945 = vadd.f32 %v4943, %v4944
        %v4946 = vrot.slane %v4945, 1
        %v4947 = vadd.f32 %v4945, %v4946
        %v4948 = vrot.slane %v4891, 4
        %v4949 = vadd.f32 %v4891, %v4948
        %v4950 = vrot.slane %v4949, 2
        %v4951 = vadd.f32 %v4949, %v4950
        %v4952 = vrot.slane %v4951, 1
        %v4953 = vadd.f32 %v4951, %v4952
        %v4954 = vrot.slane %v4892, 4
        %v4955 = vadd.f32 %v4892, %v4954
        %v4956 = vrot.slane %v4955, 2
        %v4957 = vadd.f32 %v4955, %v4956
        %v4958 = vrot.slane %v4957, 1
        %v4959 = vadd.f32 %v4957, %v4958
        %v4960 = vrot.slane %v4893, 4
        %v4961 = vadd.f32 %v4893, %v4960
        %v4962 = vrot.slane %v4961, 2
        %v4963 = vadd.f32 %v4961, %v4962
        %v4964 = vrot.slane %v4963, 1
        %v4965 = vadd.f32 %v4963, %v4964
        %v4966 = vrot.slane %v4894, 4
        %v4967 = vadd.f32 %v4894, %v4966
        %v4968 = vrot.slane %v4967, 2
        %v4969 = vadd.f32 %v4967, %v4968
        %v4970 = vrot.slane %v4969, 1
        %v4971 = vadd.f32 %v4969, %v4970
        %v4972 = vrot.slane %v4895, 4
        %v4973 = vadd.f32 %v4895, %v4972
        %v4974 = vrot.slane %v4973, 2
        %v4975 = vadd.f32 %v4973, %v4974
        %v4976 = vrot.slane %v4975, 1
        %v4977 = vadd.f32 %v4975, %v4976
        %v4978 = vrot.slane %v4896, 4
        %v4979 = vadd.f32 %v4896, %v4978
        %v4980 = vrot.slane %v4979, 2
        %v4981 = vadd.f32 %v4979, %v4980
        %v4982 = vrot.slane %v4981, 1
        %v4983 = vadd.f32 %v4981, %v4982
        %v4984 = vrot.slane %v4897, 4
        %v4985 = vadd.f32 %v4897, %v4984
        %v4986 = vrot.slane %v4985, 2
        %v4987 = vadd.f32 %v4985, %v4986
        %v4988 = vrot.slane %v4987, 1
        %v4989 = vadd.f32 %v4987, %v4988
        %v4990 = vrot.slane %v4898, 4
        %v4991 = vadd.f32 %v4898, %v4990
        %v4992 = vrot.slane %v4991, 2
        %v4993 = vadd.f32 %v4991, %v4992
        %v4994 = vrot.slane %v4993, 1
        %v4995 = vadd.f32 %v4993, %v4994
        %v4996 = vrot.slane %v4899, 4
        %v4997 = vadd.f32 %v4899, %v4996
        %v4998 = vrot.slane %v4997, 2
        %v4999 = vadd.f32 %v4997, %v4998
        %v5000 = vrot.slane %v4999, 1
        %v5001 = vadd.f32 %v4999, %v5000
        %v5002 = vrot.slane %v4900, 4
        %v5003 = vadd.f32 %v4900, %v5002
        %v5004 = vrot.slane %v5003, 2
        %v5005 = vadd.f32 %v5003, %v5004
        %v5006 = vrot.slane %v5005, 1
        %v5007 = vadd.f32 %v5005, %v5006
        %v5008 = vrot.slane %v4901, 4
        %v5009 = vadd.f32 %v4901, %v5008
        %v5010 = vrot.slane %v5009, 2
        %v5011 = vadd.f32 %v5009, %v5010
        %v5012 = vrot.slane %v5011, 1
        %v5013 = vadd.f32 %v5011, %v5012
        %v5014 = vrot.slane %v4902, 4
        %v5015 = vadd.f32 %v4902, %v5014
        %v5016 = vrot.slane %v5015, 2
        %v5017 = vadd.f32 %v5015, %v5016
        %v5018 = vrot.slane %v5017, 1
        %v5019 = vadd.f32 %v5017, %v5018
        %v5020 = vrot.slane %v4903, 4
        %v5021 = vadd.f32 %v4903, %v5020
        %v5022 = vrot.slane %v5021, 2
        %v5023 = vadd.f32 %v5021, %v5022
        %v5024 = vrot.slane %v5023, 1
        %v5025 = vadd.f32 %v5023, %v5024
        %v5026 = vrot.slane %v4904, 4
        %v5027 = vadd.f32 %v4904, %v5026
        %v5028 = vrot.slane %v5027, 2
        %v5029 = vadd.f32 %v5027, %v5028
        %v5030 = vrot.slane %v5029, 1
        %v5031 = vadd.f32 %v5029, %v5030
        %v5032 = vrot.slane %v4905, 4
        %v5033 = vadd.f32 %v4905, %v5032
        %v5034 = vrot.slane %v5033, 2
        %v5035 = vadd.f32 %v5033, %v5034
        %v5036 = vrot.slane %v5035, 1
        %v5037 = vadd.f32 %v5035, %v5036
        %v5038 = vrot.slane %v4906, 4
        %v5039 = vadd.f32 %v4906, %v5038
        %v5040 = vrot.slane %v5039, 2
        %v5041 = vadd.f32 %v5039, %v5040
        %v5042 = vrot.slane %v5041, 1
        %v5043 = vadd.f32 %v5041, %v5042
        %v5044 = vrot.slane %v4907, 4
        %v5045 = vadd.f32 %v4907, %v5044
        %v5046 = vrot.slane %v5045, 2
        %v5047 = vadd.f32 %v5045, %v5046
        %v5048 = vrot.slane %v5047, 1
        %v5049 = vadd.f32 %v5047, %v5048
        %v5050 = vrot.slane %v4908, 4
        %v5051 = vadd.f32 %v4908, %v5050
        %v5052 = vrot.slane %v5051, 2
        %v5053 = vadd.f32 %v5051, %v5052
        %v5054 = vrot.slane %v5053, 1
        %v5055 = vadd.f32 %v5053, %v5054
        %v5056 = vrot.slane %v4909, 4
        %v5057 = vadd.f32 %v4909, %v5056
        %v5058 = vrot.slane %v5057, 2
        %v5059 = vadd.f32 %v5057, %v5058
        %v5060 = vrot.slane %v5059, 1
        %v5061 = vadd.f32 %v5059, %v5060
        %v5062 = vrot.slane %v4910, 4
        %v5063 = vadd.f32 %v4910, %v5062
        %v5064 = vrot.slane %v5063, 2
        %v5065 = vadd.f32 %v5063, %v5064
        %v5066 = vrot.slane %v5065, 1
        %v5067 = vadd.f32 %v5065, %v5066
        %v5068 = vrot.slane %v4911, 4
        %v5069 = vadd.f32 %v4911, %v5068
        %v5070 = vrot.slane %v5069, 2
        %v5071 = vadd.f32 %v5069, %v5070
        %v5072 = vrot.slane %v5071, 1
        %v5073 = vadd.f32 %v5071, %v5072
        %v5074 = vrot.slane %v4912, 4
        %v5075 = vadd.f32 %v4912, %v5074
        %v5076 = vrot.slane %v5075, 2
        %v5077 = vadd.f32 %v5075, %v5076
        %v5078 = vrot.slane %v5077, 1
        %v5079 = vadd.f32 %v5077, %v5078
        %v5080 = vrot.slane %v4913, 4
        %v5081 = vadd.f32 %v4913, %v5080
        %v5082 = vrot.slane %v5081, 2
        %v5083 = vadd.f32 %v5081, %v5082
        %v5084 = vrot.slane %v5083, 1
        %v5085 = vadd.f32 %v5083, %v5084
        %v5086 = vrot.slane %v4914, 4
        %v5087 = vadd.f32 %v4914, %v5086
        %v5088 = vrot.slane %v5087, 2
        %v5089 = vadd.f32 %v5087, %v5088
        %v5090 = vrot.slane %v5089, 1
        %v5091 = vadd.f32 %v5089, %v5090
        %v5092 = vrot.slane %v4915, 4
        %v5093 = vadd.f32 %v4915, %v5092
        %v5094 = vrot.slane %v5093, 2
        %v5095 = vadd.f32 %v5093, %v5094
        %v5096 = vrot.slane %v5095, 1
        %v5097 = vadd.f32 %v5095, %v5096
        %v5098 = vrot.slane %v4916, 4
        %v5099 = vadd.f32 %v4916, %v5098
        %v5100 = vrot.slane %v5099, 2
        %v5101 = vadd.f32 %v5099, %v5100
        %v5102 = vrot.slane %v5101, 1
        %v5103 = vadd.f32 %v5101, %v5102
        %v5104 = vrot.slane %v4917, 4
        %v5105 = vadd.f32 %v4917, %v5104
        %v5106 = vrot.slane %v5105, 2
        %v5107 = vadd.f32 %v5105, %v5106
        %v5108 = vrot.slane %v5107, 1
        %v5109 = vadd.f32 %v5107, %v5108
        %v5110 = vmul.f32 %v4923, 0.125
        %v5111 = vmul.f32 %v4929, 0.125
        %v5112 = vmul.f32 %v4935, 0.125
        %v5113 = vmul.f32 %v4941, 0.125
        %v5114 = vmul.f32 %v4947, 0.125
        %v5115 = vmul.f32 %v4953, 0.125
        %v5116 = vmul.f32 %v4959, 0.125
        %v5117 = vmul.f32 %v4965, 0.125
        %v5118 = vmul.f32 %v4971, 0.125
        %v5119 = vmul.f32 %v4977, 0.125
        %v5120 = vmul.f32 %v4983, 0.125
        %v5121 = vmul.f32 %v4989, 0.125
        %v5122 = vmul.f32 %v4995, 0.125
        %v5123 = vmul.f32 %v5001, 0.125
        %v5124 = vmul.f32 %v5007, 0.125
        %v5125 = vmul.f32 %v5013, 0.125
        %v5126 = vmul.f32 %v5019, 0.125
        %v5127 = vmul.f32 %v5025, 0.125
        %v5128 = vmul.f32 %v5031, 0.125
        %v5129 = vmul.f32 %v5037, 0.125
        %v5130 = vmul.f32 %v5043, 0.125
        %v5131 = vmul.f32 %v5049, 0.125
        %v5132 = vmul.f32 %v5055, 0.125
        %v5133 = vmul.f32 %v5061, 0.125
        %v5134 = vmul.f32 %v5067, 0.125
        %v5135 = vmul.f32 %v5073, 0.125
        %v5136 = vmul.f32 %v5079, 0.125
        %v5137 = vmul.f32 %v5085, 0.125
        %v5138 = vmul.f32 %v5091, 0.125
        %v5139 = vmul.f32 %v5097, 0.125
        %v5140 = vmul.f32 %v5103, 0.125
        %v5141 = vmul.f32 %v5109, 0.125
        %v5142 = vpack.c.bf16 %v5110, %v5110
        %v5143 = vpack.c.bf16 %v5111, %v5111
        %v5144 = vpack.c.bf16 %v5112, %v5112
        %v5145 = vpack.c.bf16 %v5113, %v5113
        %v5146 = vpack.c.bf16 %v5114, %v5114
        %v5147 = vpack.c.bf16 %v5115, %v5115
        %v5148 = vpack.c.bf16 %v5116, %v5116
        %v5149 = vpack.c.bf16 %v5117, %v5117
        %v5150 = vpack.c.bf16 %v5118, %v5118
        %v5151 = vpack.c.bf16 %v5119, %v5119
        %v5152 = vpack.c.bf16 %v5120, %v5120
        %v5153 = vpack.c.bf16 %v5121, %v5121
        %v5154 = vpack.c.bf16 %v5122, %v5122
        %v5155 = vpack.c.bf16 %v5123, %v5123
        %v5156 = vpack.c.bf16 %v5124, %v5124
        %v5157 = vpack.c.bf16 %v5125, %v5125
        %s5158 = scalar_lea.vmem [#allocation2], 128
        %v5159 = vld [vmem:[%s5158] sm:$0xf]
        %v5160 = vld [vmem:[%s5158 + $0x4] sm:$0xf]
        %v5161 = vld [vmem:[%s5158 + $0x8] sm:$0xf]
        %v5162 = vld [vmem:[%s5158 + $0xc] sm:$0xf]
        %v5163 = vld [vmem:[%s5158 + $0x10] sm:$0xf]
        %v5164 = vld [vmem:[%s5158 + $0x14] sm:$0xf]
        %v5165 = vld [vmem:[%s5158 + $0x18] sm:$0xf]
        %v5166 = vld [vmem:[%s5158 + $0x1c] sm:$0xf]
        %v5167 = vld [vmem:[%s5158 + $0x20] sm:$0xf]
        %v5168 = vld [vmem:[%s5158 + $0x24] sm:$0xf]
        %v5169 = vld [vmem:[%s5158 + $0x28] sm:$0xf]
        %v5170 = vld [vmem:[%s5158 + $0x2c] sm:$0xf]
        %v5171 = vld [vmem:[%s5158 + $0x30] sm:$0xf]
        %v5172 = vld [vmem:[%s5158 + $0x34] sm:$0xf]
        %v5173 = vld [vmem:[%s5158 + $0x38] sm:$0xf]
        %v5174 = vld [vmem:[%s5158 + $0x3c] sm:$0xf]
        %v5175 = vpack.c.bf16 %v5126, %v5126
        %v5176 = vpack.c.bf16 %v5127, %v5127
        %v5177 = vpack.c.bf16 %v5128, %v5128
        %v5178 = vpack.c.bf16 %v5129, %v5129
        %v5179 = vpack.c.bf16 %v5130, %v5130
        %v5180 = vpack.c.bf16 %v5131, %v5131
        %v5181 = vpack.c.bf16 %v5132, %v5132
        %v5182 = vpack.c.bf16 %v5133, %v5133
        %v5183 = vpack.c.bf16 %v5134, %v5134
        %v5184 = vpack.c.bf16 %v5135, %v5135
        %v5185 = vpack.c.bf16 %v5136, %v5136
        %v5186 = vpack.c.bf16 %v5137, %v5137
        %v5187 = vpack.c.bf16 %v5138, %v5138
        %v5188 = vpack.c.bf16 %v5139, %v5139
        %v5189 = vpack.c.bf16 %v5140, %v5140
        %v5190 = vpack.c.bf16 %v5141, %v5141
        %s5191 = scalar_lea.vmem [#allocation2], 192
        %v5192 = vld [vmem:[%s5191] sm:$0xf]
        %v5193 = vld [vmem:[%s5191 + $0x4] sm:$0xf]
        %v5194 = vld [vmem:[%s5191 + $0x8] sm:$0xf]
        %v5195 = vld [vmem:[%s5191 + $0xc] sm:$0xf]
        %v5196 = vld [vmem:[%s5191 + $0x10] sm:$0xf]
        %v5197 = vld [vmem:[%s5191 + $0x14] sm:$0xf]
        %v5198 = vld [vmem:[%s5191 + $0x18] sm:$0xf]
        %v5199 = vld [vmem:[%s5191 + $0x1c] sm:$0xf]
        %v5200 = vld [vmem:[%s5191 + $0x20] sm:$0xf]
        %v5201 = vld [vmem:[%s5191 + $0x24] sm:$0xf]
        %v5202 = vld [vmem:[%s5191 + $0x28] sm:$0xf]
        %v5203 = vld [vmem:[%s5191 + $0x2c] sm:$0xf]
        %v5204 = vld [vmem:[%s5191 + $0x30] sm:$0xf]
        %v5205 = vld [vmem:[%s5191 + $0x34] sm:$0xf]
        %v5206 = vld [vmem:[%s5191 + $0x38] sm:$0xf]
        %v5207 = vld [vmem:[%s5191 + $0x3c] sm:$0xf]
        %v5224 = vunpack.c.l.b16 %v5175
        %v5225 = vunpack.c.l.b16 %v5176
        %v5226 = vunpack.c.l.b16 %v5177
        %v5227 = vunpack.c.l.b16 %v5178
        %v5228 = vunpack.c.l.b16 %v5179
        %v5229 = vunpack.c.l.b16 %v5180
        %v5230 = vunpack.c.l.b16 %v5181
        %v5231 = vunpack.c.l.b16 %v5182
        %v5232 = vunpack.c.l.b16 %v5183
        %v5233 = vunpack.c.l.b16 %v5184
        %v5234 = vunpack.c.l.b16 %v5185
        %v5235 = vunpack.c.l.b16 %v5186
        %v5236 = vunpack.c.l.b16 %v5187
        %v5237 = vunpack.c.l.b16 %v5188
        %v5238 = vunpack.c.l.b16 %v5189
        %v5239 = vunpack.c.l.b16 %v5190
        %vm5240 = vcmask 1041409
        %v5241 = vsel %vm5240, %v5225, %v5224
        %vm5242 = vcmask 1042434
        %v5243 = vsel %vm5242, %v5226, %v5241
        %vm5244 = vcmask 1043459
        %v5245 = vsel %vm5244, %v5227, %v5243
        %vm5246 = vcmask 1044484
        %v5247 = vsel %vm5246, %v5228, %v5245
        %vm5248 = vcmask 1045509
        %v5249 = vsel %vm5248, %v5229, %v5247
        %vm5250 = vcmask 1046534
        %v5251 = vsel %vm5250, %v5230, %v5249
        %vm5252 = vcmask 1047559
        %v5253 = vsel %vm5252, %v5231, %v5251
        %v5254 = vsel %vm5240, %v5233, %v5232
        %v5255 = vsel %vm5242, %v5234, %v5254
        %v5256 = vsel %vm5244, %v5235, %v5255
        %v5257 = vsel %vm5246, %v5236, %v5256
        %v5258 = vsel %vm5248, %v5237, %v5257
        %v5259 = vsel %vm5250, %v5238, %v5258
        %v5260 = vsel %vm5252, %v5239, %v5259
        %v5261 = vpack.c.b16 %v5260, %v5253
        %v5279 = vunpack.c.l.b16 %v5192
        %v5280 = vunpack.c.l.b16 %v5193
        %v5281 = vunpack.c.l.b16 %v5194
        %v5282 = vunpack.c.l.b16 %v5195
        %v5283 = vunpack.c.l.b16 %v5196
        %v5284 = vunpack.c.l.b16 %v5197
        %v5285 = vunpack.c.l.b16 %v5198
        %v5286 = vunpack.c.l.b16 %v5199
        %v5287 = vunpack.c.l.b16 %v5200
        %v5288 = vunpack.c.l.b16 %v5201
        %v5289 = vunpack.c.l.b16 %v5202
        %v5290 = vunpack.c.l.b16 %v5203
        %v5291 = vunpack.c.l.b16 %v5204
        %v5292 = vunpack.c.l.b16 %v5205
        %v5293 = vunpack.c.l.b16 %v5206
        %v5294 = vunpack.c.l.b16 %v5207
        %v5295 = vpack.c.b16 %v5280, %v5279
        %v5296 = vpack.c.b16 %v5282, %v5281
        %v5297 = vpack.c.b16 %v5284, %v5283
        %v5298 = vpack.c.b16 %v5286, %v5285
        %v5299 = vpack.c.b16 %v5288, %v5287
        %v5300 = vpack.c.b16 %v5290, %v5289
        %v5301 = vpack.c.b16 %v5292, %v5291
        %v5302 = vpack.c.b16 %v5294, %v5293
        %5311 = vmatprep.subr.bf16.mxu0 0
        %5312 = vmatpush1.bf16.msra.mxu0 %v5302
        %5313 = vmatprep.subr.bf16.mxu0 0
        %5314 = vmatpush1.bf16.msra.mxu0 %v5301
        %5315 = vmatprep.subr.bf16.mxu0 0
        %5316 = vmatpush1.bf16.msra.mxu0 %v5300
        %5317 = vmatprep.subr.bf16.mxu0 0
        %5318 = vmatpush1.bf16.msra.mxu0 %v5299
        %5319 = vmatprep.subr.bf16.mxu0 0
        %5320 = vmatpush1.bf16.msra.mxu0 %v5298
        %5321 = vmatprep.subr.bf16.mxu0 0
        %5322 = vmatpush1.bf16.msra.mxu0 %v5297
        %5323 = vmatprep.subr.bf16.mxu0 0
        %5324 = vmatpush1.bf16.msra.mxu0 %v5296
        %5325 = vmatprep.subr.bf16.mxu0 0
        %5326 = vmatpush1.bf16.msra.mxu0 %v5295
        %5327 = vmatprep.subr.bf16.mxu0 0
        %5328 = vmatpush2.bf16.msra.mxu0 0
        %5329 = vmatprep.subr.bf16.mxu0 0
        %5330 = vmatpush2.bf16.msra.mxu0 0
        %5331 = vmatprep.subr.bf16.mxu0 0
        %5332 = vmatpush2.bf16.msra.mxu0 0
        %5333 = vmatprep.subr.bf16.mxu0 0
        %5334 = vmatpush2.bf16.msra.mxu0 0
        %5335 = vmatprep.subr.bf16.mxu0 0
        %5336 = vmatpush2.bf16.msra.mxu0 0
        %5337 = vmatprep.subr.bf16.mxu0 0
        %5338 = vmatpush2.bf16.msra.mxu0 0
        %5339 = vmatprep.subr.bf16.mxu0 0
        %5340 = vmatpush2.bf16.msra.mxu0 0
        %5341 = vmatprep.subr.bf16.mxu0 0
        %5342 = vmatpush2.bf16.msra.mxu0 0
        %5343 = vmatprep.mubr.bf16.mxu0 0
        %5344 = vmatmul.mubr.bf16.gmra.mxu0 %v5261
        %v5345 = vpop.f32.mrf.mxu0
        %v5346 = vadd.f32 0.0, %v5345
        %v5347 = vpop.f32.mrf.mxu0
        %v5348 = vpop.f32.mrf.mxu0
        %v5349 = vadd.f32 0.0, %v5348
        %v5350 = vpop.f32.mrf.mxu0
        %5351 = vdwg.mxu0
        %v5368 = vunpack.c.l.b16 %v5142
        %v5369 = vunpack.c.l.b16 %v5143
        %v5370 = vunpack.c.l.b16 %v5144
        %v5371 = vunpack.c.l.b16 %v5145
        %v5372 = vunpack.c.l.b16 %v5146
        %v5373 = vunpack.c.l.b16 %v5147
        %v5374 = vunpack.c.l.b16 %v5148
        %v5375 = vunpack.c.l.b16 %v5149
        %v5376 = vunpack.c.l.b16 %v5150
        %v5377 = vunpack.c.l.b16 %v5151
        %v5378 = vunpack.c.l.b16 %v5152
        %v5379 = vunpack.c.l.b16 %v5153
        %v5380 = vunpack.c.l.b16 %v5154
        %v5381 = vunpack.c.l.b16 %v5155
        %v5382 = vunpack.c.l.b16 %v5156
        %v5383 = vunpack.c.l.b16 %v5157
        %v5384 = vsel %vm5240, %v5369, %v5368
        %v5385 = vsel %vm5242, %v5370, %v5384
        %v5386 = vsel %vm5244, %v5371, %v5385
        %v5387 = vsel %vm5246, %v5372, %v5386
        %v5388 = vsel %vm5248, %v5373, %v5387
        %v5389 = vsel %vm5250, %v5374, %v5388
        %v5390 = vsel %vm5252, %v5375, %v5389
        %v5391 = vsel %vm5240, %v5377, %v5376
        %v5392 = vsel %vm5242, %v5378, %v5391
        %v5393 = vsel %vm5244, %v5379, %v5392
        %v5394 = vsel %vm5246, %v5380, %v5393
        %v5395 = vsel %vm5248, %v5381, %v5394
        %v5396 = vsel %vm5250, %v5382, %v5395
        %v5397 = vsel %vm5252, %v5383, %v5396
        %v5398 = vpack.c.b16 %v5397, %v5390
        %v5416 = vunpack.c.l.b16 %v5159
        %v5417 = vunpack.c.l.b16 %v5160
        %v5418 = vunpack.c.l.b16 %v5161
        %v5419 = vunpack.c.l.b16 %v5162
        %v5420 = vunpack.c.l.b16 %v5163
        %v5421 = vunpack.c.l.b16 %v5164
        %v5422 = vunpack.c.l.b16 %v5165
        %v5423 = vunpack.c.l.b16 %v5166
        %v5424 = vunpack.c.l.b16 %v5167
        %v5425 = vunpack.c.l.b16 %v5168
        %v5426 = vunpack.c.l.b16 %v5169
        %v5427 = vunpack.c.l.b16 %v5170
        %v5428 = vunpack.c.l.b16 %v5171
        %v5429 = vunpack.c.l.b16 %v5172
        %v5430 = vunpack.c.l.b16 %v5173
        %v5431 = vunpack.c.l.b16 %v5174
        %v5432 = vpack.c.b16 %v5417, %v5416
        %v5433 = vpack.c.b16 %v5419, %v5418
        %v5434 = vpack.c.b16 %v5421, %v5420
        %v5435 = vpack.c.b16 %v5423, %v5422
        %v5436 = vpack.c.b16 %v5425, %v5424
        %v5437 = vpack.c.b16 %v5427, %v5426
        %v5438 = vpack.c.b16 %v5429, %v5428
        %v5439 = vpack.c.b16 %v5431, %v5430
        %5448 = vmatprep.subr.bf16.mxu0 0
        %5449 = vmatpush1.bf16.msra.mxu0 %v5439
        %5450 = vmatprep.subr.bf16.mxu0 0
        %5451 = vmatpush1.bf16.msra.mxu0 %v5438
        %5452 = vmatprep.subr.bf16.mxu0 0
        %5453 = vmatpush1.bf16.msra.mxu0 %v5437
        %5454 = vmatprep.subr.bf16.mxu0 0
        %5455 = vmatpush1.bf16.msra.mxu0 %v5436
        %5456 = vmatprep.subr.bf16.mxu0 0
        %5457 = vmatpush1.bf16.msra.mxu0 %v5435
        %5458 = vmatprep.subr.bf16.mxu0 0
        %5459 = vmatpush1.bf16.msra.mxu0 %v5434
        %5460 = vmatprep.subr.bf16.mxu0 0
        %5461 = vmatpush1.bf16.msra.mxu0 %v5433
        %5462 = vmatprep.subr.bf16.mxu0 0
        %5463 = vmatpush1.bf16.msra.mxu0 %v5432
        %5464 = vmatprep.subr.bf16.mxu0 0
        %5465 = vmatpush2.bf16.msra.mxu0 0
        %5466 = vmatprep.subr.bf16.mxu0 0
        %5467 = vmatpush2.bf16.msra.mxu0 0
        %5468 = vmatprep.subr.bf16.mxu0 0
        %5469 = vmatpush2.bf16.msra.mxu0 0
        %5470 = vmatprep.subr.bf16.mxu0 0
        %5471 = vmatpush2.bf16.msra.mxu0 0
        %5472 = vmatprep.subr.bf16.mxu0 0
        %5473 = vmatpush2.bf16.msra.mxu0 0
        %5474 = vmatprep.subr.bf16.mxu0 0
        %5475 = vmatpush2.bf16.msra.mxu0 0
        %5476 = vmatprep.subr.bf16.mxu0 0
        %5477 = vmatpush2.bf16.msra.mxu0 0
        %5478 = vmatprep.subr.bf16.mxu0 0
        %5479 = vmatpush2.bf16.msra.mxu0 0
        %5480 = vmatprep.mubr.bf16.mxu0 0
        %5481 = vmatmul.mubr.bf16.gmra.mxu0 %v5398
        %v5482 = vpop.f32.mrf.mxu0
        %v5483 = vadd.f32 %v5346, %v5482
        %v5484 = vpop.f32.mrf.mxu0
        %v5485 = vpop.f32.mrf.mxu0
        %v5486 = vadd.f32 %v5349, %v5485
        %v5487 = vpop.f32.mrf.mxu0
        %5488 = vdwg.mxu0
        %v5489 = vld [vmem:[%s3 + $0x2] sm:$0x1]
        %v5490 = vlaneseq
        %v5491 = vshrl.u32 %v5490, 7
        %v5492 = vsub.s32 0, %v5491
        %v5493 = vrot.slane %v5489, %v5492
        %v5494 = vadd.f32 %v5483, %v5493
        %v5495 = vadd.f32 %v5486, %v5493
        %v5496 = vmax.f32 %v5494, 0.0
        %v5497 = vmax.f32 %v5495, 0.0
        %v5498 = vpack.c.bf16 %v5497, %v5496
        %s5499 = scalar_lea.vmem [#allocation2], 256
        %v5500 = vld [vmem:[%s5499] sm:$0xf]
        %v5501 = vld [vmem:[%s5499 + $0x4] sm:$0xf]
        %v5502 = vld [vmem:[%s5499 + $0x8] sm:$0xf]
        %v5503 = vld [vmem:[%s5499 + $0xc] sm:$0xf]
        %v5504 = vld [vmem:[%s5499 + $0x10] sm:$0xf]
        %v5505 = vld [vmem:[%s5499 + $0x14] sm:$0xf]
        %v5506 = vld [vmem:[%s5499 + $0x18] sm:$0xf]
        %v5507 = vld [vmem:[%s5499 + $0x1c] sm:$0xf]
        %v5508 = vld [vmem:[%s5499 + $0x20] sm:$0xf]
        %v5509 = vld [vmem:[%s5499 + $0x24] sm:$0xf]
        %v5510 = vld [vmem:[%s5499 + $0x28] sm:$0xf]
        %v5511 = vld [vmem:[%s5499 + $0x2c] sm:$0xf]
        %v5512 = vld [vmem:[%s5499 + $0x30] sm:$0xf]
        %v5513 = vld [vmem:[%s5499 + $0x34] sm:$0xf]
        %v5514 = vld [vmem:[%s5499 + $0x38] sm:$0xf]
        %v5515 = vld [vmem:[%s5499 + $0x3c] sm:$0xf]
        %v5516 = vld [vmem:[%s3 + $0x3] sm:$0x1]
        %v5517 = vlaneseq
        %v5518 = vshrl.u32 %v5517, 7
        %v5519 = vsub.s32 0, %v5518
        %v5520 = vrot.slane %v5516, %v5519
        %v5537 = vunpack.c.l.b16 %v5500
        %v5538 = vunpack.c.l.b16 %v5501
        %v5539 = vunpack.c.l.b16 %v5502
        %v5540 = vunpack.c.l.b16 %v5503
        %v5541 = vunpack.c.l.b16 %v5504
        %v5542 = vunpack.c.l.b16 %v5505
        %v5543 = vunpack.c.l.b16 %v5506
        %v5544 = vunpack.c.l.b16 %v5507
        %v5545 = vunpack.c.l.b16 %v5508
        %v5546 = vunpack.c.l.b16 %v5509
        %v5547 = vunpack.c.l.b16 %v5510
        %v5548 = vunpack.c.l.b16 %v5511
        %v5549 = vunpack.c.l.b16 %v5512
        %v5550 = vunpack.c.l.b16 %v5513
        %v5551 = vunpack.c.l.b16 %v5514
        %v5552 = vunpack.c.l.b16 %v5515
        %v5553 = vpack.c.b16 %v5538, %v5537
        %v5554 = vpack.c.b16 %v5540, %v5539
        %v5555 = vpack.c.b16 %v5542, %v5541
        %v5556 = vpack.c.b16 %v5544, %v5543
        %v5557 = vpack.c.b16 %v5546, %v5545
        %v5558 = vpack.c.b16 %v5548, %v5547
        %v5559 = vpack.c.b16 %v5550, %v5549
        %v5560 = vpack.c.b16 %v5552, %v5551
        %5569 = vmatprep.subr.bf16.mxu0 0
        %5570 = vmatpush1.bf16.msra.mxu0 %v5560
        %5571 = vmatprep.subr.bf16.mxu0 0
        %5572 = vmatpush1.bf16.msra.mxu0 %v5559
        %5573 = vmatprep.subr.bf16.mxu0 0
        %5574 = vmatpush1.bf16.msra.mxu0 %v5558
        %5575 = vmatprep.subr.bf16.mxu0 0
        %5576 = vmatpush1.bf16.msra.mxu0 %v5557
        %5577 = vmatprep.subr.bf16.mxu0 0
        %5578 = vmatpush1.bf16.msra.mxu0 %v5556
        %5579 = vmatprep.subr.bf16.mxu0 0
        %5580 = vmatpush1.bf16.msra.mxu0 %v5555
        %5581 = vmatprep.subr.bf16.mxu0 0
        %5582 = vmatpush1.bf16.msra.mxu0 %v5554
        %5583 = vmatprep.subr.bf16.mxu0 0
        %5584 = vmatpush1.bf16.msra.mxu0 %v5553
        %5585 = vmatprep.subr.bf16.mxu0 0
        %5586 = vmatpush2.bf16.msra.mxu0 0
        %5587 = vmatprep.subr.bf16.mxu0 0
        %5588 = vmatpush2.bf16.msra.mxu0 0
        %5589 = vmatprep.subr.bf16.mxu0 0
        %5590 = vmatpush2.bf16.msra.mxu0 0
        %5591 = vmatprep.subr.bf16.mxu0 0
        %5592 = vmatpush2.bf16.msra.mxu0 0
        %5593 = vmatprep.subr.bf16.mxu0 0
        %5594 = vmatpush2.bf16.msra.mxu0 0
        %5595 = vmatprep.subr.bf16.mxu0 0
        %5596 = vmatpush2.bf16.msra.mxu0 0
        %5597 = vmatprep.subr.bf16.mxu0 0
        %5598 = vmatpush2.bf16.msra.mxu0 0
        %5599 = vmatprep.subr.bf16.mxu0 0
        %5600 = vmatpush2.bf16.msra.mxu0 0
        %5601 = vmatprep.mubr.bf16.mxu0 0
        %5602 = vmatmul.mubr.bf16.gmra.mxu0 %v5498
        %v5603 = vpop.f32.mrf.mxu0
        %v5604 = vadd.f32 %v5520, %v5603
        %v5605 = vpop.f32.mrf.mxu0
        %v5606 = vpop.f32.mrf.mxu0
        %v5607 = vadd.f32 %v5520, %v5606
        %v5608 = vpop.f32.mrf.mxu0
        %5609 = vdwg.mxu0
        %v5610 = vmax.f32 %v5604, 0.0
        %v5611 = vmax.f32 %v5607, 0.0
        %v5612 = vpack.c.bf16 %v5611, %v5610
        %s5613 = scalar_lea.vmem [#allocation2], 320
        %v5614 = vld [vmem:[%s5613] sm:$0xf]
        %v5615 = vld [vmem:[%s5613 + $0x4] sm:$0xf]
        %v5616 = vld [vmem:[%s5613 + $0x8] sm:$0xf]
        %v5617 = vld [vmem:[%s5613 + $0xc] sm:$0xf]
        %v5618 = vld [vmem:[%s5613 + $0x10] sm:$0xf]
        %v5619 = vld [vmem:[%s5613 + $0x14] sm:$0xf]
        %v5620 = vld [vmem:[%s5613 + $0x18] sm:$0xf]
        %v5621 = vld [vmem:[%s5613 + $0x1c] sm:$0xf]
        %v5622 = vld [vmem:[%s5613 + $0x20] sm:$0xf]
        %v5623 = vld [vmem:[%s5613 + $0x24] sm:$0xf]
        %v5624 = vld [vmem:[%s5613 + $0x28] sm:$0xf]
        %v5625 = vld [vmem:[%s5613 + $0x2c] sm:$0xf]
        %v5626 = vld [vmem:[%s5613 + $0x30] sm:$0xf]
        %v5627 = vld [vmem:[%s5613 + $0x34] sm:$0xf]
        %v5628 = vld [vmem:[%s5613 + $0x38] sm:$0xf]
        %v5629 = vld [vmem:[%s5613 + $0x3c] sm:$0xf]
        %v5630 = vld [vmem:[%s3 + $0x4] sm:$0x1]
        %v5631 = vlaneseq
        %v5632 = vshrl.u32 %v5631, 7
        %v5633 = vsub.s32 0, %v5632
        %v5634 = vrot.slane %v5630, %v5633
        %v5651 = vunpack.c.l.b16 %v5614
        %v5652 = vunpack.c.l.b16 %v5615
        %v5653 = vunpack.c.l.b16 %v5616
        %v5654 = vunpack.c.l.b16 %v5617
        %v5655 = vunpack.c.l.b16 %v5618
        %v5656 = vunpack.c.l.b16 %v5619
        %v5657 = vunpack.c.l.b16 %v5620
        %v5658 = vunpack.c.l.b16 %v5621
        %v5659 = vunpack.c.l.b16 %v5622
        %v5660 = vunpack.c.l.b16 %v5623
        %v5661 = vunpack.c.l.b16 %v5624
        %v5662 = vunpack.c.l.b16 %v5625
        %v5663 = vunpack.c.l.b16 %v5626
        %v5664 = vunpack.c.l.b16 %v5627
        %v5665 = vunpack.c.l.b16 %v5628
        %v5666 = vunpack.c.l.b16 %v5629
        %v5667 = vpack.c.b16 %v5652, %v5651
        %v5668 = vpack.c.b16 %v5654, %v5653
        %v5669 = vpack.c.b16 %v5656, %v5655
        %v5670 = vpack.c.b16 %v5658, %v5657
        %v5671 = vpack.c.b16 %v5660, %v5659
        %v5672 = vpack.c.b16 %v5662, %v5661
        %v5673 = vpack.c.b16 %v5664, %v5663
        %v5674 = vpack.c.b16 %v5666, %v5665
        %5683 = vmatprep.subr.bf16.mxu0 0
        %5684 = vmatpush1.bf16.msra.mxu0 %v5674
        %5685 = vmatprep.subr.bf16.mxu0 0
        %5686 = vmatpush1.bf16.msra.mxu0 %v5673
        %5687 = vmatprep.subr.bf16.mxu0 0
        %5688 = vmatpush1.bf16.msra.mxu0 %v5672
        %5689 = vmatprep.subr.bf16.mxu0 0
        %5690 = vmatpush1.bf16.msra.mxu0 %v5671
        %5691 = vmatprep.subr.bf16.mxu0 0
        %5692 = vmatpush1.bf16.msra.mxu0 %v5670
        %5693 = vmatprep.subr.bf16.mxu0 0
        %5694 = vmatpush1.bf16.msra.mxu0 %v5669
        %5695 = vmatprep.subr.bf16.mxu0 0
        %5696 = vmatpush1.bf16.msra.mxu0 %v5668
        %5697 = vmatprep.subr.bf16.mxu0 0
        %5698 = vmatpush1.bf16.msra.mxu0 %v5667
        %5699 = vmatprep.subr.bf16.mxu0 0
        %5700 = vmatpush2.bf16.msra.mxu0 0
        %5701 = vmatprep.subr.bf16.mxu0 0
        %5702 = vmatpush2.bf16.msra.mxu0 0
        %5703 = vmatprep.subr.bf16.mxu0 0
        %5704 = vmatpush2.bf16.msra.mxu0 0
        %5705 = vmatprep.subr.bf16.mxu0 0
        %5706 = vmatpush2.bf16.msra.mxu0 0
        %5707 = vmatprep.subr.bf16.mxu0 0
        %5708 = vmatpush2.bf16.msra.mxu0 0
        %5709 = vmatprep.subr.bf16.mxu0 0
        %5710 = vmatpush2.bf16.msra.mxu0 0
        %5711 = vmatprep.subr.bf16.mxu0 0
        %5712 = vmatpush2.bf16.msra.mxu0 0
        %5713 = vmatprep.subr.bf16.mxu0 0
        %5714 = vmatpush2.bf16.msra.mxu0 0
        %5715 = vmatprep.mubr.bf16.mxu0 0
        %5716 = vmatmul.mubr.bf16.gmra.mxu0 %v5612
        %v5717 = vpop.f32.mrf.mxu0
        %v5718 = vadd.f32 %v5634, %v5717
        %v5719 = vpop.f32.mrf.mxu0
        %v5720 = vpop.f32.mrf.mxu0
        %v5721 = vadd.f32 %v5634, %v5720
        %v5722 = vpop.f32.mrf.mxu0
        %5723 = vdwg.mxu0
        %v5724 = vmax.f32 %v5718, 0.0
        %v5725 = vmax.f32 %v5721, 0.0
        %v5726 = vpack.c.bf16 %v5725, %v5724
        %s5727 = scalar_lea.vmem [#allocation2], 384
        %v5728 = vld [vmem:[%s5727] sm:$0xf]
        %v5729 = vld [vmem:[%s5727 + $0x4] sm:$0xf]
        %v5730 = vld [vmem:[%s5727 + $0x8] sm:$0xf]
        %v5731 = vld [vmem:[%s5727 + $0xc] sm:$0xf]
        %v5732 = vld [vmem:[%s5727 + $0x10] sm:$0xf]
        %v5733 = vld [vmem:[%s5727 + $0x14] sm:$0xf]
        %v5734 = vld [vmem:[%s5727 + $0x18] sm:$0xf]
        %v5735 = vld [vmem:[%s5727 + $0x1c] sm:$0xf]
        %v5736 = vld [vmem:[%s5727 + $0x20] sm:$0xf]
        %v5737 = vld [vmem:[%s5727 + $0x24] sm:$0xf]
        %v5738 = vld [vmem:[%s5727 + $0x28] sm:$0xf]
        %v5739 = vld [vmem:[%s5727 + $0x2c] sm:$0xf]
        %v5740 = vld [vmem:[%s5727 + $0x30] sm:$0xf]
        %v5741 = vld [vmem:[%s5727 + $0x34] sm:$0xf]
        %v5742 = vld [vmem:[%s5727 + $0x38] sm:$0xf]
        %v5743 = vld [vmem:[%s5727 + $0x3c] sm:$0xf]
        %v5744 = vld [vmem:[%s3 + $0x5] sm:$0x1]
        %v5745 = vlaneseq
        %v5746 = vshrl.u32 %v5745, 7
        %v5747 = vsub.s32 0, %v5746
        %v5748 = vrot.slane %v5744, %v5747
        %v5765 = vunpack.c.l.b16 %v5728
        %v5766 = vunpack.c.l.b16 %v5729
        %v5767 = vunpack.c.l.b16 %v5730
        %v5768 = vunpack.c.l.b16 %v5731
        %v5769 = vunpack.c.l.b16 %v5732
        %v5770 = vunpack.c.l.b16 %v5733
        %v5771 = vunpack.c.l.b16 %v5734
        %v5772 = vunpack.c.l.b16 %v5735
        %v5773 = vunpack.c.l.b16 %v5736
        %v5774 = vunpack.c.l.b16 %v5737
        %v5775 = vunpack.c.l.b16 %v5738
        %v5776 = vunpack.c.l.b16 %v5739
        %v5777 = vunpack.c.l.b16 %v5740
        %v5778 = vunpack.c.l.b16 %v5741
        %v5779 = vunpack.c.l.b16 %v5742
        %v5780 = vunpack.c.l.b16 %v5743
        %v5781 = vpack.c.b16 %v5766, %v5765
        %v5782 = vpack.c.b16 %v5768, %v5767
        %v5783 = vpack.c.b16 %v5770, %v5769
        %v5784 = vpack.c.b16 %v5772, %v5771
        %v5785 = vpack.c.b16 %v5774, %v5773
        %v5786 = vpack.c.b16 %v5776, %v5775
        %v5787 = vpack.c.b16 %v5778, %v5777
        %v5788 = vpack.c.b16 %v5780, %v5779
        %5797 = vmatprep.subr.bf16.mxu0 0
        %5798 = vmatpush1.bf16.msra.mxu0 %v5788
        %5799 = vmatprep.subr.bf16.mxu0 0
        %5800 = vmatpush1.bf16.msra.mxu0 %v5787
        %5801 = vmatprep.subr.bf16.mxu0 0
        %5802 = vmatpush1.bf16.msra.mxu0 %v5786
        %5803 = vmatprep.subr.bf16.mxu0 0
        %5804 = vmatpush1.bf16.msra.mxu0 %v5785
        %5805 = vmatprep.subr.bf16.mxu0 0
        %5806 = vmatpush1.bf16.msra.mxu0 %v5784
        %5807 = vmatprep.subr.bf16.mxu0 0
        %5808 = vmatpush1.bf16.msra.mxu0 %v5783
        %5809 = vmatprep.subr.bf16.mxu0 0
        %5810 = vmatpush1.bf16.msra.mxu0 %v5782
        %5811 = vmatprep.subr.bf16.mxu0 0
        %5812 = vmatpush1.bf16.msra.mxu0 %v5781
        %5813 = vmatprep.subr.bf16.mxu0 0
        %5814 = vmatpush2.bf16.msra.mxu0 0
        %5815 = vmatprep.subr.bf16.mxu0 0
        %5816 = vmatpush2.bf16.msra.mxu0 0
        %5817 = vmatprep.subr.bf16.mxu0 0
        %5818 = vmatpush2.bf16.msra.mxu0 0
        %5819 = vmatprep.subr.bf16.mxu0 0
        %5820 = vmatpush2.bf16.msra.mxu0 0
        %5821 = vmatprep.subr.bf16.mxu0 0
        %5822 = vmatpush2.bf16.msra.mxu0 0
        %5823 = vmatprep.subr.bf16.mxu0 0
        %5824 = vmatpush2.bf16.msra.mxu0 0
        %5825 = vmatprep.subr.bf16.mxu0 0
        %5826 = vmatpush2.bf16.msra.mxu0 0
        %5827 = vmatprep.subr.bf16.mxu0 0
        %5828 = vmatpush2.bf16.msra.mxu0 0
        %5829 = vmatprep.mubr.bf16.mxu0 0
        %5830 = vmatmul.mubr.bf16.gmra.mxu0 %v5726
        %v5831 = vpop.f32.mrf.mxu0
        %v5832 = vadd.f32 %v5748, %v5831
        %v5833 = vpop.f32.mrf.mxu0
        %v5834 = vpop.f32.mrf.mxu0
        %v5835 = vadd.f32 %v5748, %v5834
        %v5836 = vpop.f32.mrf.mxu0
        %5837 = vdwg.mxu0
        %5838 = vst [vmem:[%s220] sm:$0xff] %v5832
        %5839 = vst [vmem:[%s220 + $0x8] sm:$0xff] %v5835
        %s5840 = sand.u32 %s121, 1
        %s5841 = scalar_lea.sflag [#allocation4], %s5840
        %s5842 = sand.u32 %s121, 1
        %s5843 = smul.addr %s5842, 16
        %s5844 = scalar_lea.vmem [#allocation5], %s5843
        // Predicated region
        $region41: #{tpu_custom_call.1} parent=35 // pred_check
          %p5845 = pneg %p131
        $region42: #{tpu_custom_call.1} parent=35 // pred_check_branch
          %5847 = sbr.rel (%p5845) target = $region44
        $region43: #{tpu_custom_call.1} parent=35 // pred_region
          %s5848 = smul.u32 2, %s19
          %s5850 = ssub.s32 256, 256
          %5851 = vsyncadd %s5841, %s5850
          %s5852 = smul.addr %s5848, 128
          %s5853 = scalar_lea.hbm %s4, %s5852
          %s5854 = sshll.u32 %s5844, 4
          %s5855 = int_to_ptr.vmem [resolvable:$true] %s5854
          %5860 = dma.vmem_to_hbm [thread:$0]  %s5855, 256, %s5853, %s5841, 128, 128, 8
        $region44: #{tpu_custom_call.1} parent=35 // pred_fallthru
          _
      $region36: #{tpu_custom_call.1} parent=5 // pred_fallthru
        _
      %p5861 = scmp.le.s32.totalorder 2, %s14
      // Predicated region
      $region45: #{tpu_custom_call.1} parent=5 // pred_check
        %p5862 = pneg %p5861
      $region46: #{tpu_custom_call.1} parent=5 // pred_check_branch
        %5864 = sbr.rel (%p5862) target = $region48
      $region47: #{tpu_custom_call.1} parent=5 // pred_region
        %s5865 = ssub.s32 %s14, 2
        // Predicated region
        $region49: #{tpu_custom_call.1} parent=47 // pred_check
          %p5866 = pneg %p137
        $region50: #{tpu_custom_call.1} parent=47 // pred_check_branch
          %5868 = sbr.rel (%p5866) target = $region52
        $region51: #{tpu_custom_call.1} parent=47 // pred_region
          %s5869 = sand.u32 %s122, 1
          %s5870 = scalar_lea.sflag [#allocation4], %s5869
          %s5871 = sand.u32 %s122, 1
          %s5872 = smul.addr %s5871, 16
          %s5873 = scalar_lea.vmem [#allocation5], %s5872
          %5874 = dma.done %s5870, 256
        $region52: #{tpu_custom_call.1} parent=47 // pred_fallthru
          _
      $region48: #{tpu_custom_call.1} parent=5 // pred_fallthru
        _
    $region6: #{tpu_custom_call.1} parent=1 // loop_footer
      %s18 = sadd.s32 1, %s14
    $region7: #{tpu_custom_call.1} parent=1 // loop_footer_branch
      %13 = sbr.rel target = $region3
    $region8: #{tpu_custom_call.1} parent=1 // loop_exit
      _
    %5875 = vsyncpa [#allocation3], 1
    %s5876 = scalar_lea.sflag [#allocation3], 1
    %5877 = vsyncpa %s5876, 1
    %5878 = vsyncpa [#allocation4], 1
    %s5879 = scalar_lea.sflag [#allocation4], 1
    %5880 = vsyncpa %s5879, 1

</llo_original>
